<compile_context>
chip_gen: v7x
topology: tpu7x:2x2x1
jax: 0.10.0
libtpu: 0.0.40
codegen_flags: <defaults>
</compile_context>

<pallas_src>
import math
import jax
import jax.numpy as jnp
from jax.experimental import pallas as pl
from jax.experimental.pallas import tpu as pltpu

# ---- model / problem sizes (small, consistent with the module's forward) ----
D_MODEL = 32
D_FFN = 64
N_HEADS = 4
HEAD_DIM = D_MODEL // N_HEADS
B = 2
NQ = 8      # number of queries (tgt length)
NK = 16     # memory length
LN_EPS = 1e-5

SLAB_LANES = 128


def _ceil8(x):
    return -(-x // 8) * 8


# --------------------- packed parameter slab layout --------------------------
# Each entry: (name, rows, cols).  Every block starts at an 8-row-aligned
# offset (avoids sublane-shifted loads) and occupies lanes [0, cols) of the
# 128-lane slab (zero padded).
_PACK_SPEC = (
    ("ca_wq",  D_MODEL, D_MODEL),      # cross-attn q proj, 1/sqrt(hd) folded in
    ("ca_wkv", D_MODEL, 2 * D_MODEL),  # cross-attn fused [wk | wv]
    ("ca_wo",  D_MODEL, D_MODEL),
    ("sa_wqk", D_MODEL, 2 * D_MODEL),  # self-attn fused [wq*scale | wk]
    ("sa_wv",  D_MODEL, D_MODEL),
    ("sa_wo",  D_MODEL, D_MODEL),
    ("l1_w",   D_MODEL, D_FFN),
    ("l2_w",   D_FFN,   D_MODEL),
    ("ca_bq",  1, D_MODEL),
    ("ca_bkv", 1, 2 * D_MODEL),
    ("ca_bo",  1, D_MODEL),
    ("sa_bqk", 1, 2 * D_MODEL),
    ("sa_bv",  1, D_MODEL),
    ("sa_bo",  1, D_MODEL),
    ("l1_b",   1, D_FFN),
    ("l2_b",   1, D_MODEL),
    ("n1_g",   1, D_MODEL),
    ("n1_b",   1, D_MODEL),
    ("n2_g",   1, D_MODEL),
    ("n2_b",   1, D_MODEL),
    ("n3_g",   1, D_MODEL),
    ("n3_b",   1, D_MODEL),
)

LAYOUT = {}
_off = 0
for _name, _r, _c in _PACK_SPEC:
    LAYOUT[_name] = (_off, _r, _c)
    _off += _ceil8(_r)
SLAB_ROWS = _off            # 400 rows -> 400*128*4 B = 200 KiB, trivially in VMEM


def pack_params(params):
    """Fuse / pre-scale the raw (pre-transposed) params and pack into one slab."""
    scale = 1.0 / math.sqrt(HEAD_DIM)
    fused = {
        "ca_wq":  params["ca_wq"] * scale,
        "ca_bq":  params["ca_bq"] * scale,
        "ca_wkv": jnp.concatenate([params["ca_wk"], params["ca_wv"]], axis=1),
        "ca_bkv": jnp.concatenate([params["ca_bk"], params["ca_bv"]], axis=1),
        "ca_wo":  params["ca_wo"], "ca_bo": params["ca_bo"],
        "sa_wqk": jnp.concatenate([params["sa_wq"] * scale, params["sa_wk"]], axis=1),
        "sa_bqk": jnp.concatenate([params["sa_bq"] * scale, params["sa_bk"]], axis=1),
        "sa_wv":  params["sa_wv"], "sa_bv": params["sa_bv"],
        "sa_wo":  params["sa_wo"], "sa_bo": params["sa_bo"],
        "l1_w":   params["l1_w"], "l1_b": params["l1_b"],
        "l2_w":   params["l2_w"], "l2_b": params["l2_b"],
        "n1_g":   params["n1_g"], "n1_b": params["n1_b"],
        "n2_g":   params["n2_g"], "n2_b": params["n2_b"],
        "n3_g":   params["n3_g"], "n3_b": params["n3_b"],
    }
    slab = jnp.zeros((SLAB_ROWS, SLAB_LANES), jnp.float32)
    for name, (off, rows, cols) in LAYOUT.items():
        slab = slab.at[off:off + rows, :cols].set(fused[name])
    return slab


# ------------------------------ kernel helpers ------------------------------
def _layer_norm(x, g, b):
    mu = jnp.mean(x, axis=-1, keepdims=True)
    var = jnp.mean((x - mu) ** 2, axis=-1, keepdims=True)
    return (x - mu) * jax.lax.rsqrt(var + LN_EPS) * g + b


def _mha_core(q, k, v):
    """Multi-head attention core. q is pre-scaled (scale folded into wq/bq).

    q: (Lq, D), k/v: (Lk, D) -> (Lq, D).  Head axis handled as a dot_general
    batch dim (no per-head Python loop, no concatenate).
    """
    lq = q.shape[0]
    lk = k.shape[0]
    qh = q.reshape(lq, N_HEADS, HEAD_DIM)
    kh = k.reshape(lk, N_HEADS, HEAD_DIM)
    vh = v.reshape(lk, N_HEADS, HEAD_DIM)

    # scores: (H, Lq, Lk)
    s = jnp.einsum("qhd,khd->hqk", qh, kh, preferred_element_type=jnp.float32)
    s = s - jnp.max(s, axis=-1, keepdims=True)
    p = jnp.exp(s)
    denom = jnp.sum(p, axis=-1, keepdims=True)             # (H, Lq, 1)

    # unnormalized output: (Lq, H, HEAD_DIM)
    o = jnp.einsum("hqk,khd->qhd", p, vh, preferred_element_type=jnp.float32)
    # deferred softmax normalization on the smaller tensor; reciprocal -> EUP.
    inv = pl.reciprocal(denom, approx=True)                 # (H, Lq, 1)
    o = o * jnp.transpose(inv, (1, 0, 2))                   # (Lq, H, 1) broadcast
    return o.reshape(lq, D_MODEL)


# --------------------------------- kernel -----------------------------------
def decoder_layer_kernel(tgt_ref, qpos_ref, mem_ref, mpos_ref, slab_ref, out_ref):
    def rd(name):
        off, rows, cols = LAYOUT[name]
        return slab_ref[off:off + rows, 0:cols]

    tgt = tgt_ref[...]      # (NQ, D)
    qpos = qpos_ref[...]    # (NQ, D)
    mem = mem_ref[...]      # (NK, D)
    mpos = mpos_ref[...]    # (NK, D)
    # with_pos_embed(memory, memory_pos) is used as both K and V, matching the
    # PyTorch module's forward exactly.
    kv_in = mem + mpos

    # ---- cross attention + residual + norm1 (dropout1 = identity) ----
    q = jnp.dot(tgt + qpos, rd("ca_wq"),
                preferred_element_type=jnp.float32) + rd("ca_bq")
    kvp = jnp.dot(kv_in, rd("ca_wkv"),
                  preferred_element_type=jnp.float32) + rd("ca_bkv")
    k = kvp[:, :D_MODEL]
    v = kvp[:, D_MODEL:]
    attn = _mha_core(q, k, v)
    tgt2 = jnp.dot(attn, rd("ca_wo"),
                   preferred_element_type=jnp.float32) + rd("ca_bo")
    tgt = _layer_norm(tgt + tgt2, rd("n1_g"), rd("n1_b"))

    # ---- self attention (q = k = tgt + pos, v = tgt) + residual + norm2 ----
    qk_in = tgt + qpos
    qkp = jnp.dot(qk_in, rd("sa_wqk"),
                  preferred_element_type=jnp.float32) + rd("sa_bqk")
    q = qkp[:, :D_MODEL]
    k = qkp[:, D_MODEL:]
    v = jnp.dot(tgt, rd("sa_wv"),
                preferred_element_type=jnp.float32) + rd("sa_bv")
    attn = _mha_core(q, k, v)
    tgt2 = jnp.dot(attn, rd("sa_wo"),
                   preferred_element_type=jnp.float32) + rd("sa_bo")
    tgt = _layer_norm(tgt + tgt2, rd("n2_g"), rd("n2_b"))

    # ---- FFN: linear2(relu(linear1(tgt))) + residual + norm3 ----
    h = jnp.dot(tgt, rd("l1_w"), preferred_element_type=jnp.float32) + rd("l1_b")
    h = jnp.maximum(h, 0.0)
    tgt2 = jnp.dot(h, rd("l2_w"), preferred_element_type=jnp.float32) + rd("l2_b")
    tgt = _layer_norm(tgt + tgt2, rd("n3_g"), rd("n3_b"))

    out_ref[...] = tgt


# -------------------------------- wrapper ------------------------------------
def run_decoder_layer(params, tgt, tgt_query_pos, memory, memory_pos):
    bsz, nq, d = tgt.shape
    nk = memory.shape[1]
    slab = pack_params(params)

    grid_spec = pltpu.PrefetchScalarGridSpec(
        num_scalar_prefetch=0,
        grid=(bsz,),
        in_specs=[
            pl.BlockSpec((None, nq, d), lambda b: (b, 0, 0)),
            pl.BlockSpec((None, nq, d), lambda b: (b, 0, 0)),
            pl.BlockSpec((None, nk, d), lambda b: (b, 0, 0)),
            pl.BlockSpec((None, nk, d), lambda b: (b, 0, 0)),
            # single packed param slab; constant block index -> fetched once.
            pl.BlockSpec((SLAB_ROWS, SLAB_LANES), lambda b: (0, 0)),
        ],
        out_specs=pl.BlockSpec((None, nq, d), lambda b: (b, 0, 0)),
    )

    fn = pl.pallas_call(
        decoder_layer_kernel,
        out_shape=jax.ShapeDtypeStruct((bsz, nq, d), jnp.float32),
        grid_spec=grid_spec,
        compiler_params=pltpu.CompilerParams(
            dimension_semantics=("parallel",)),   # megacore sharding on v7x
    )
    return fn(tgt, tgt_query_pos, memory, memory_pos, slab)


# --------------------------- deterministic params ----------------------------
def init_params(key):
    keys = iter(jax.random.split(key, 64))

    def w(shape, scale=0.1):
        return jax.random.normal(next(keys), shape, jnp.float32) * scale

    def mha_params(prefix):
        # pre-transposed projections: y = x @ w + b (PyTorch stores W, uses x @ W^T)
        return {
            f"{prefix}_wq": w((D_MODEL, D_MODEL)),
            f"{prefix}_wk": w((D_MODEL, D_MODEL)),
            f"{prefix}_wv": w((D_MODEL, D_MODEL)),
            f"{prefix}_bq": w((1, D_MODEL), 0.02),
            f"{prefix}_bk": w((1, D_MODEL), 0.02),
            f"{prefix}_bv": w((1, D_MODEL), 0.02),
            f"{prefix}_wo": w((D_MODEL, D_MODEL)),
            f"{prefix}_bo": w((1, D_MODEL), 0.02),
        }

    def ln_params(prefix):
        return {
            f"{prefix}_g": 1.0 + w((1, D_MODEL), 0.05),
            f"{prefix}_b": w((1, D_MODEL), 0.05),
        }

    params = {}
    params.update(mha_params("ca"))
    params.update(ln_params("n1"))
    params.update(mha_params("sa"))
    params.update(ln_params("n2"))
    params.update({
        "l1_w": w((D_MODEL, D_FFN)),   # linear1 weight, pre-transposed
        "l1_b": w((1, D_FFN), 0.02),
        "l2_w": w((D_FFN, D_MODEL)),   # linear2 weight, pre-transposed
        "l2_b": w((1, D_MODEL), 0.02),
    })
    params.update(ln_params("n3"))
    return params


# ----------------------------- pure-JAX reference ----------------------------
def ref_forward(params, tgt, qpos, mem, mpos):
    def ln(x, g, b):
        mu = x.mean(-1, keepdims=True)
        var = ((x - mu) ** 2).mean(-1, keepdims=True)
        return (x - mu) / jnp.sqrt(var + LN_EPS) * g + b

    def mha(qi, ki, vi, p, pre):
        Q = qi @ p[f"{pre}_wq"] + p[f"{pre}_bq"]
        K = ki @ p[f"{pre}_wk"] + p[f"{pre}_bk"]
        V = vi @ p[f"{pre}_wv"] + p[f"{pre}_bv"]
        bsz, lq, _ = Q.shape
        lk = K.shape[1]
        Qh = Q.reshape(bsz, lq, N_HEADS, HEAD_DIM).transpose(0, 2, 1, 3)
        Kh = K.reshape(bsz, lk, N_HEADS, HEAD_DIM).transpose(0, 2, 1, 3)
        Vh = V.reshape(bsz, lk, N_HEADS, HEAD_DIM).transpose(0, 2, 1, 3)
        s = jnp.einsum("bhqd,bhkd->bhqk", Qh, Kh) / math.sqrt(HEAD_DIM)
        a = jax.nn.softmax(s, axis=-1)
        o = jnp.einsum("bhqk,bhkd->bhqd", a, Vh)
        o = o.transpose(0, 2, 1, 3).reshape(bsz, lq, D_MODEL)
        return o @ p[f"{pre}_wo"] + p[f"{pre}_bo"]

    kv = mem + mpos
    tgt2 = mha(tgt + qpos, kv, kv, params, "ca")
    tgt = ln(tgt + tgt2, params["n1_g"], params["n1_b"])
    qk = tgt + qpos
    tgt2 = mha(qk, qk, tgt, params, "sa")
    tgt = ln(tgt + tgt2, params["n2_g"], params["n2_b"])
    h = jnp.maximum(tgt @ params["l1_w"] + params["l1_b"], 0.0)
    tgt2 = h @ params["l2_w"] + params["l2_b"]
    return ln(tgt + tgt2, params["n3_g"], params["n3_b"])


# ----------------------------------- main ------------------------------------
if __name__ == "__main__":
    key = jax.random.PRNGKey(0)
    k_p, k_t, k_qp, k_m, k_mp = jax.random.split(key, 5)

    params = init_params(k_p)
    tgt = jax.random.normal(k_t, (B, NQ, D_MODEL), jnp.float32)
    tgt_query_pos = jax.random.normal(k_qp, (B, NQ, D_MODEL), jnp.float32)
    memory = jax.random.normal(k_m, (B, NK, D_MODEL), jnp.float32)
    memory_pos = jax.random.normal(k_mp, (B, NK, D_MODEL), jnp.float32)

    out = run_decoder_layer(params, tgt, tgt_query_pos, memory, memory_pos)
    out = jax.block_until_ready(out)

    ref = jax.block_until_ready(
        ref_forward(params, tgt, tgt_query_pos, memory, memory_pos))
    assert out.shape == (B, NQ, D_MODEL)
    assert jnp.allclose(out, ref, atol=1e-2, rtol=1e-2), (
        float(jnp.max(jnp.abs(out - ref))))

    print("KERNEL_OK")
</pallas_src>

<mosaic_0001>
module attributes {stable_mosaic.version = 11 : i64} {
  func.func @decoder_layer_kernel(%arg0: i32, %arg1: memref<1x8x32xf32, #tpu.memory_space<vmem>>, %arg2: memref<1x8x32xf32, #tpu.memory_space<vmem>>, %arg3: memref<1x16x32xf32, #tpu.memory_space<vmem>>, %arg4: memref<1x16x32xf32, #tpu.memory_space<vmem>>, %arg5: memref<400x128xf32, #tpu.memory_space<vmem>>, %arg6: memref<1x8x32xf32, #tpu.memory_space<vmem>>) attributes {dimension_semantics = [#tpu.dimension_semantics<parallel>], iteration_bounds = array<i64: 2>, scalar_prefetch = 0 : i64, scratch_operands = 0 : i64, tpu.core_type = #tpu.core_type<tc>, window_params = [{transform_indices = @transform_0, window_bounds = array<i64: 1, 8, 32>}, {transform_indices = @transform_1, window_bounds = array<i64: 1, 8, 32>}, {transform_indices = @transform_2, window_bounds = array<i64: 1, 16, 32>}, {transform_indices = @transform_3, window_bounds = array<i64: 1, 16, 32>}, {pipeline_mode = #tpu.pipeline_mode<synchronous>, transform_indices = @transform_4, window_bounds = array<i64: 400, 128>}, {transform_indices = @transform_5, window_bounds = array<i64: 1, 8, 32>}]} {
    %c0 = arith.constant 0 : index
    %c0_0 = arith.constant 0 : index
    %c0_1 = arith.constant 0 : index
    %0 = vector.load %arg1[%c0, %c0_0, %c0_1] : memref<1x8x32xf32, #tpu.memory_space<vmem>>, vector<1x8x32xf32>
    %1 = vector.shape_cast %0 : vector<1x8x32xf32> to vector<8x32xf32>
    %c0_2 = arith.constant 0 : index
    %c0_3 = arith.constant 0 : index
    %c0_4 = arith.constant 0 : index
    %2 = vector.load %arg2[%c0_2, %c0_3, %c0_4] : memref<1x8x32xf32, #tpu.memory_space<vmem>>, vector<1x8x32xf32>
    %3 = vector.shape_cast %2 : vector<1x8x32xf32> to vector<8x32xf32>
    %c0_5 = arith.constant 0 : index
    %c0_6 = arith.constant 0 : index
    %c0_7 = arith.constant 0 : index
    %4 = vector.load %arg3[%c0_5, %c0_6, %c0_7] : memref<1x16x32xf32, #tpu.memory_space<vmem>>, vector<1x16x32xf32>
    %5 = vector.shape_cast %4 : vector<1x16x32xf32> to vector<16x32xf32>
    %c0_8 = arith.constant 0 : index
    %c0_9 = arith.constant 0 : index
    %c0_10 = arith.constant 0 : index
    %6 = vector.load %arg4[%c0_8, %c0_9, %c0_10] : memref<1x16x32xf32, #tpu.memory_space<vmem>>, vector<1x16x32xf32>
    %7 = vector.shape_cast %6 : vector<1x16x32xf32> to vector<16x32xf32>
    %8 = arith.addf %5, %7 : vector<16x32xf32>
    %9 = arith.addf %1, %3 : vector<8x32xf32>
    %c0_11 = arith.constant 0 : index
    %c0_12 = arith.constant 0 : index
    %10 = vector.load %arg5[%c0_11, %c0_12] : memref<400x128xf32, #tpu.memory_space<vmem>>, vector<32x32xf32>
    %cst = arith.constant dense<0.000000e+00> : vector<8x32xf32>
    %11 = tpu.matmul %9, %10, %cst {dimension_numbers = #tpu.dot_dimension_numbers<[1], [0], [0], [1], [0, 0, 1, 1], [], []>} : vector<8x32xf32>, vector<32x32xf32>, vector<8x32xf32> -> vector<8x32xf32>
    %c288 = arith.constant 288 : index
    %c0_13 = arith.constant 0 : index
    %12 = vector.load %arg5[%c288, %c0_13] : memref<400x128xf32, #tpu.memory_space<vmem>>, vector<1x32xf32>
    %13 = vector.broadcast %12 : vector<1x32xf32> to vector<8x32xf32>
    %14 = arith.addf %11, %13 : vector<8x32xf32>
    %c32 = arith.constant 32 : index
    %c0_14 = arith.constant 0 : index
    %15 = vector.load %arg5[%c32, %c0_14] : memref<400x128xf32, #tpu.memory_space<vmem>>, vector<32x64xf32>
    %cst_15 = arith.constant dense<0.000000e+00> : vector<16x64xf32>
    %16 = tpu.matmul %8, %15, %cst_15 {dimension_numbers = #tpu.dot_dimension_numbers<[1], [0], [0], [1], [0, 0, 1, 1], [], []>} : vector<16x32xf32>, vector<32x64xf32>, vector<16x64xf32> -> vector<16x64xf32>
    %c296 = arith.constant 296 : index
    %c0_16 = arith.constant 0 : index
    %17 = vector.load %arg5[%c296, %c0_16] : memref<400x128xf32, #tpu.memory_space<vmem>>, vector<1x64xf32>
    %18 = vector.broadcast %17 : vector<1x64xf32> to vector<16x64xf32>
    %19 = arith.addf %16, %18 : vector<16x64xf32>
    %20 = vector.extract_strided_slice %19 {offsets = [0, 0], sizes = [16, 32], strides = [1, 1]} : vector<16x64xf32> to vector<16x32xf32>
    %21 = vector.extract_strided_slice %19 {offsets = [0, 32], sizes = [16, 32], strides = [1, 1]} : vector<16x64xf32> to vector<16x32xf32>
    %22 = vector.shape_cast %14 : vector<8x32xf32> to vector<8x4x8xf32>
    %23 = vector.shape_cast %20 : vector<16x32xf32> to vector<16x4x8xf32>
    %24 = vector.shape_cast %21 : vector<16x32xf32> to vector<16x4x8xf32>
    "tpu.trace_start"() <{level = 10 : i32, message = "qhd,khd->hqk"}> : () -> ()
    %cst_17 = arith.constant dense<0.000000e+00> : vector<4x8x16xf32>
    %25 = tpu.matmul %22, %23, %cst_17 {dimension_numbers = #tpu.dot_dimension_numbers<[2], [2], [0], [0], [0, 1, 0, 0, 1, 0], [1], [1]>} : vector<8x4x8xf32>, vector<16x4x8xf32>, vector<4x8x16xf32> -> vector<4x8x16xf32>
    "tpu.trace_stop"() : () -> ()
    %cst_18 = arith.constant dense<0xFF800000> : vector<4x8xf32>
    %26 = vector.multi_reduction <maximumf>, %25, %cst_18 [2] : vector<4x8x16xf32> to vector<4x8xf32>
    %27 = vector.shape_cast %26 : vector<4x8xf32> to vector<4x8x1xf32>
    %28 = vector.broadcast %27 : vector<4x8x1xf32> to vector<4x8x16xf32>
    %29 = arith.subf %25, %28 : vector<4x8x16xf32>
    %30 = math.exp %29 : vector<4x8x16xf32>
    %cst_19 = arith.constant dense<0.000000e+00> : vector<4x8xf32>
    %31 = vector.multi_reduction <add>, %30, %cst_19 [2] : vector<4x8x16xf32> to vector<4x8xf32>
    %32 = vector.shape_cast %31 : vector<4x8xf32> to vector<4x8x1xf32>
    "tpu.trace_start"() <{level = 10 : i32, message = "hqk,khd->qhd"}> : () -> ()
    %cst_20 = arith.constant dense<0.000000e+00> : vector<4x8x8xf32>
    %33 = tpu.matmul %24, %30, %cst_20 {dimension_numbers = #tpu.dot_dimension_numbers<[0], [2], [2], [1], [0, 1, 0, 2, 1, 1], [1], [0]>} : vector<16x4x8xf32>, vector<4x8x16xf32>, vector<4x8x8xf32> -> vector<4x8x8xf32>
    %34 = tpu.transpose %33, [2, 0, 1] : vector<4x8x8xf32> -> vector<8x4x8xf32>
    "tpu.trace_stop"() : () -> ()
    %35 = tpu.reciprocal %32 {approx = true} : vector<4x8x1xf32> -> vector<4x8x1xf32>
    %36 = tpu.transpose %35, [1, 0, 2] : vector<4x8x1xf32> -> vector<8x4x1xf32>
    %37 = vector.broadcast %36 : vector<8x4x1xf32> to vector<8x4x8xf32>
    %38 = arith.mulf %34, %37 : vector<8x4x8xf32>
    %39 = vector.shape_cast %38 : vector<8x4x8xf32> to vector<8x32xf32>
    %c64 = arith.constant 64 : index
    %c0_21 = arith.constant 0 : index
    %40 = vector.load %arg5[%c64, %c0_21] : memref<400x128xf32, #tpu.memory_space<vmem>>, vector<32x32xf32>
    %cst_22 = arith.constant dense<0.000000e+00> : vector<8x32xf32>
    %41 = tpu.matmul %39, %40, %cst_22 {dimension_numbers = #tpu.dot_dimension_numbers<[1], [0], [0], [1], [0, 0, 1, 1], [], []>} : vector<8x32xf32>, vector<32x32xf32>, vector<8x32xf32> -> vector<8x32xf32>
    %c304 = arith.constant 304 : index
    %c0_23 = arith.constant 0 : index
    %42 = vector.load %arg5[%c304, %c0_23] : memref<400x128xf32, #tpu.memory_space<vmem>>, vector<1x32xf32>
    %43 = vector.broadcast %42 : vector<1x32xf32> to vector<8x32xf32>
    %44 = arith.addf %41, %43 : vector<8x32xf32>
    %45 = arith.addf %1, %44 : vector<8x32xf32>
    %c352 = arith.constant 352 : index
    %c0_24 = arith.constant 0 : index
    %46 = vector.load %arg5[%c352, %c0_24] : memref<400x128xf32, #tpu.memory_space<vmem>>, vector<1x32xf32>
    %c360 = arith.constant 360 : index
    %c0_25 = arith.constant 0 : index
    %47 = vector.load %arg5[%c360, %c0_25] : memref<400x128xf32, #tpu.memory_space<vmem>>, vector<1x32xf32>
    %cst_26 = arith.constant dense<0.000000e+00> : vector<8xf32>
    %48 = vector.multi_reduction <add>, %45, %cst_26 [1] : vector<8x32xf32> to vector<8xf32>
    %49 = vector.shape_cast %48 : vector<8xf32> to vector<8x1xf32>
    %cst_27 = arith.constant 3.200000e+01 : f32
    %50 = vector.broadcast %cst_27 : f32 to vector<8x1xf32>
    %51 = arith.divf %49, %50 : vector<8x1xf32>
    %52 = vector.broadcast %51 : vector<8x1xf32> to vector<8x32xf32>
    %53 = arith.subf %45, %52 : vector<8x32xf32>
    %54 = arith.mulf %53, %53 : vector<8x32xf32>
    %cst_28 = arith.constant dense<0.000000e+00> : vector<8xf32>
    %55 = vector.multi_reduction <add>, %54, %cst_28 [1] : vector<8x32xf32> to vector<8xf32>
    %56 = vector.shape_cast %55 : vector<8xf32> to vector<8x1xf32>
    %cst_29 = arith.constant 3.200000e+01 : f32
    %57 = vector.broadcast %cst_29 : f32 to vector<8x1xf32>
    %58 = arith.divf %56, %57 : vector<8x1xf32>
    %59 = vector.broadcast %51 : vector<8x1xf32> to vector<8x32xf32>
    %60 = arith.subf %45, %59 : vector<8x32xf32>
    %cst_30 = arith.constant 9.99999974E-6 : f32
    %61 = vector.broadcast %cst_30 : f32 to vector<8x1xf32>
    %62 = arith.addf %58, %61 : vector<8x1xf32>
    %63 = math.rsqrt %62 : vector<8x1xf32>
    %64 = vector.broadcast %63 : vector<8x1xf32> to vector<8x32xf32>
    %65 = arith.mulf %60, %64 : vector<8x32xf32>
    %66 = vector.broadcast %46 : vector<1x32xf32> to vector<8x32xf32>
    %67 = arith.mulf %65, %66 : vector<8x32xf32>
    %68 = vector.broadcast %47 : vector<1x32xf32> to vector<8x32xf32>
    %69 = arith.addf %67, %68 : vector<8x32xf32>
    %70 = arith.addf %69, %3 : vector<8x32xf32>
    %c96 = arith.constant 96 : index
    %c0_31 = arith.constant 0 : index
    %71 = vector.load %arg5[%c96, %c0_31] : memref<400x128xf32, #tpu.memory_space<vmem>>, vector<32x64xf32>
    %cst_32 = arith.constant dense<0.000000e+00> : vector<8x64xf32>
    %72 = tpu.matmul %70, %71, %cst_32 {dimension_numbers = #tpu.dot_dimension_numbers<[1], [0], [0], [1], [0, 0, 1, 1], [], []>} : vector<8x32xf32>, vector<32x64xf32>, vector<8x64xf32> -> vector<8x64xf32>
    %c312 = arith.constant 312 : index
    %c0_33 = arith.constant 0 : index
    %73 = vector.load %arg5[%c312, %c0_33] : memref<400x128xf32, #tpu.memory_space<vmem>>, vector<1x64xf32>
    %74 = vector.broadcast %73 : vector<1x64xf32> to vector<8x64xf32>
    %75 = arith.addf %72, %74 : vector<8x64xf32>
    %76 = vector.extract_strided_slice %75 {offsets = [0, 0], sizes = [8, 32], strides = [1, 1]} : vector<8x64xf32> to vector<8x32xf32>
    %77 = vector.extract_strided_slice %75 {offsets = [0, 32], sizes = [8, 32], strides = [1, 1]} : vector<8x64xf32> to vector<8x32xf32>
    %c128 = arith.constant 128 : index
    %c0_34 = arith.constant 0 : index
    %78 = vector.load %arg5[%c128, %c0_34] : memref<400x128xf32, #tpu.memory_space<vmem>>, vector<32x32xf32>
    %cst_35 = arith.constant dense<0.000000e+00> : vector<8x32xf32>
    %79 = tpu.matmul %69, %78, %cst_35 {dimension_numbers = #tpu.dot_dimension_numbers<[1], [0], [0], [1], [0, 0, 1, 1], [], []>} : vector<8x32xf32>, vector<32x32xf32>, vector<8x32xf32> -> vector<8x32xf32>
    %c320 = arith.constant 320 : index
    %c0_36 = arith.constant 0 : index
    %80 = vector.load %arg5[%c320, %c0_36] : memref<400x128xf32, #tpu.memory_space<vmem>>, vector<1x32xf32>
    %81 = vector.broadcast %80 : vector<1x32xf32> to vector<8x32xf32>
    %82 = arith.addf %79, %81 : vector<8x32xf32>
    %83 = vector.shape_cast %76 : vector<8x32xf32> to vector<8x4x8xf32>
    %84 = vector.shape_cast %77 : vector<8x32xf32> to vector<8x4x8xf32>
    %85 = vector.shape_cast %82 : vector<8x32xf32> to vector<8x4x8xf32>
    "tpu.trace_start"() <{level = 10 : i32, message = "qhd,khd->hqk"}> : () -> ()
    %cst_37 = arith.constant dense<0.000000e+00> : vector<4x8x8xf32>
    %86 = tpu.matmul %83, %84, %cst_37 {dimension_numbers = #tpu.dot_dimension_numbers<[2], [2], [0], [0], [0, 1, 0, 0, 1, 0], [1], [1]>} : vector<8x4x8xf32>, vector<8x4x8xf32>, vector<4x8x8xf32> -> vector<4x8x8xf32>
    "tpu.trace_stop"() : () -> ()
    %cst_38 = arith.constant dense<0xFF800000> : vector<4x8xf32>
    %87 = vector.multi_reduction <maximumf>, %86, %cst_38 [2] : vector<4x8x8xf32> to vector<4x8xf32>
    %88 = vector.shape_cast %87 : vector<4x8xf32> to vector<4x8x1xf32>
    %89 = vector.broadcast %88 : vector<4x8x1xf32> to vector<4x8x8xf32>
    %90 = arith.subf %86, %89 : vector<4x8x8xf32>
    %91 = math.exp %90 : vector<4x8x8xf32>
    %cst_39 = arith.constant dense<0.000000e+00> : vector<4x8xf32>
    %92 = vector.multi_reduction <add>, %91, %cst_39 [2] : vector<4x8x8xf32> to vector<4x8xf32>
    %93 = vector.shape_cast %92 : vector<4x8xf32> to vector<4x8x1xf32>
    "tpu.trace_start"() <{level = 10 : i32, message = "hqk,khd->qhd"}> : () -> ()
    %cst_40 = arith.constant dense<0.000000e+00> : vector<4x8x8xf32>
    %94 = tpu.matmul %85, %91, %cst_40 {dimension_numbers = #tpu.dot_dimension_numbers<[0], [2], [2], [1], [0, 1, 0, 2, 1, 1], [1], [0]>} : vector<8x4x8xf32>, vector<4x8x8xf32>, vector<4x8x8xf32> -> vector<4x8x8xf32>
    %95 = tpu.transpose %94, [2, 0, 1] : vector<4x8x8xf32> -> vector<8x4x8xf32>
    "tpu.trace_stop"() : () -> ()
    %96 = tpu.reciprocal %93 {approx = true} : vector<4x8x1xf32> -> vector<4x8x1xf32>
    %97 = tpu.transpose %96, [1, 0, 2] : vector<4x8x1xf32> -> vector<8x4x1xf32>
    %98 = vector.broadcast %97 : vector<8x4x1xf32> to vector<8x4x8xf32>
    %99 = arith.mulf %95, %98 : vector<8x4x8xf32>
    %100 = vector.shape_cast %99 : vector<8x4x8xf32> to vector<8x32xf32>
    %c160 = arith.constant 160 : index
    %c0_41 = arith.constant 0 : index
    %101 = vector.load %arg5[%c160, %c0_41] : memref<400x128xf32, #tpu.memory_space<vmem>>, vector<32x32xf32>
    %cst_42 = arith.constant dense<0.000000e+00> : vector<8x32xf32>
    %102 = tpu.matmul %100, %101, %cst_42 {dimension_numbers = #tpu.dot_dimension_numbers<[1], [0], [0], [1], [0, 0, 1, 1], [], []>} : vector<8x32xf32>, vector<32x32xf32>, vector<8x32xf32> -> vector<8x32xf32>
    %c328 = arith.constant 328 : index
    %c0_43 = arith.constant 0 : index
    %103 = vector.load %arg5[%c328, %c0_43] : memref<400x128xf32, #tpu.memory_space<vmem>>, vector<1x32xf32>
    %104 = vector.broadcast %103 : vector<1x32xf32> to vector<8x32xf32>
    %105 = arith.addf %102, %104 : vector<8x32xf32>
    %106 = arith.addf %69, %105 : vector<8x32xf32>
    %c368 = arith.constant 368 : index
    %c0_44 = arith.constant 0 : index
    %107 = vector.load %arg5[%c368, %c0_44] : memref<400x128xf32, #tpu.memory_space<vmem>>, vector<1x32xf32>
    %c376 = arith.constant 376 : index
    %c0_45 = arith.constant 0 : index
    %108 = vector.load %arg5[%c376, %c0_45] : memref<400x128xf32, #tpu.memory_space<vmem>>, vector<1x32xf32>
    %cst_46 = arith.constant dense<0.000000e+00> : vector<8xf32>
    %109 = vector.multi_reduction <add>, %106, %cst_46 [1] : vector<8x32xf32> to vector<8xf32>
    %110 = vector.shape_cast %109 : vector<8xf32> to vector<8x1xf32>
    %cst_47 = arith.constant 3.200000e+01 : f32
    %111 = vector.broadcast %cst_47 : f32 to vector<8x1xf32>
    %112 = arith.divf %110, %111 : vector<8x1xf32>
    %113 = vector.broadcast %112 : vector<8x1xf32> to vector<8x32xf32>
    %114 = arith.subf %106, %113 : vector<8x32xf32>
    %115 = arith.mulf %114, %114 : vector<8x32xf32>
    %cst_48 = arith.constant dense<0.000000e+00> : vector<8xf32>
    %116 = vector.multi_reduction <add>, %115, %cst_48 [1] : vector<8x32xf32> to vector<8xf32>
    %117 = vector.shape_cast %116 : vector<8xf32> to vector<8x1xf32>
    %cst_49 = arith.constant 3.200000e+01 : f32
    %118 = vector.broadcast %cst_49 : f32 to vector<8x1xf32>
    %119 = arith.divf %117, %118 : vector<8x1xf32>
    %120 = vector.broadcast %112 : vector<8x1xf32> to vector<8x32xf32>
    %121 = arith.subf %106, %120 : vector<8x32xf32>
    %cst_50 = arith.constant 9.99999974E-6 : f32
    %122 = vector.broadcast %cst_50 : f32 to vector<8x1xf32>
    %123 = arith.addf %119, %122 : vector<8x1xf32>
    %124 = math.rsqrt %123 : vector<8x1xf32>
    %125 = vector.broadcast %124 : vector<8x1xf32> to vector<8x32xf32>
    %126 = arith.mulf %121, %125 : vector<8x32xf32>
    %127 = vector.broadcast %107 : vector<1x32xf32> to vector<8x32xf32>
    %128 = arith.mulf %126, %127 : vector<8x32xf32>
    %129 = vector.broadcast %108 : vector<1x32xf32> to vector<8x32xf32>
    %130 = arith.addf %128, %129 : vector<8x32xf32>
    %c192 = arith.constant 192 : index
    %c0_51 = arith.constant 0 : index
    %131 = vector.load %arg5[%c192, %c0_51] : memref<400x128xf32, #tpu.memory_space<vmem>>, vector<32x64xf32>
    %cst_52 = arith.constant dense<0.000000e+00> : vector<8x64xf32>
    %132 = tpu.matmul %130, %131, %cst_52 {dimension_numbers = #tpu.dot_dimension_numbers<[1], [0], [0], [1], [0, 0, 1, 1], [], []>} : vector<8x32xf32>, vector<32x64xf32>, vector<8x64xf32> -> vector<8x64xf32>
    %c336 = arith.constant 336 : index
    %c0_53 = arith.constant 0 : index
    %133 = vector.load %arg5[%c336, %c0_53] : memref<400x128xf32, #tpu.memory_space<vmem>>, vector<1x64xf32>
    %134 = vector.broadcast %133 : vector<1x64xf32> to vector<8x64xf32>
    %135 = arith.addf %132, %134 : vector<8x64xf32>
    %cst_54 = arith.constant 0.000000e+00 : f32
    %136 = vector.broadcast %cst_54 : f32 to vector<8x64xf32>
    %137 = arith.maximumf %135, %136 : vector<8x64xf32>
    %c224 = arith.constant 224 : index
    %c0_55 = arith.constant 0 : index
    %138 = vector.load %arg5[%c224, %c0_55] : memref<400x128xf32, #tpu.memory_space<vmem>>, vector<64x32xf32>
    %cst_56 = arith.constant dense<0.000000e+00> : vector<8x32xf32>
    %139 = tpu.matmul %137, %138, %cst_56 {dimension_numbers = #tpu.dot_dimension_numbers<[1], [0], [0], [1], [0, 0, 1, 1], [], []>} : vector<8x64xf32>, vector<64x32xf32>, vector<8x32xf32> -> vector<8x32xf32>
    %c344 = arith.constant 344 : index
    %c0_57 = arith.constant 0 : index
    %140 = vector.load %arg5[%c344, %c0_57] : memref<400x128xf32, #tpu.memory_space<vmem>>, vector<1x32xf32>
    %141 = vector.broadcast %140 : vector<1x32xf32> to vector<8x32xf32>
    %142 = arith.addf %139, %141 : vector<8x32xf32>
    %143 = arith.addf %130, %142 : vector<8x32xf32>
    %c384 = arith.constant 384 : index
    %c0_58 = arith.constant 0 : index
    %144 = vector.load %arg5[%c384, %c0_58] : memref<400x128xf32, #tpu.memory_space<vmem>>, vector<1x32xf32>
    %c392 = arith.constant 392 : index
    %c0_59 = arith.constant 0 : index
    %145 = vector.load %arg5[%c392, %c0_59] : memref<400x128xf32, #tpu.memory_space<vmem>>, vector<1x32xf32>
    %cst_60 = arith.constant dense<0.000000e+00> : vector<8xf32>
    %146 = vector.multi_reduction <add>, %143, %cst_60 [1] : vector<8x32xf32> to vector<8xf32>
    %147 = vector.shape_cast %146 : vector<8xf32> to vector<8x1xf32>
    %cst_61 = arith.constant 3.200000e+01 : f32
    %148 = vector.broadcast %cst_61 : f32 to vector<8x1xf32>
    %149 = arith.divf %147, %148 : vector<8x1xf32>
    %150 = vector.broadcast %149 : vector<8x1xf32> to vector<8x32xf32>
    %151 = arith.subf %143, %150 : vector<8x32xf32>
    %152 = arith.mulf %151, %151 : vector<8x32xf32>
    %cst_62 = arith.constant dense<0.000000e+00> : vector<8xf32>
    %153 = vector.multi_reduction <add>, %152, %cst_62 [1] : vector<8x32xf32> to vector<8xf32>
    %154 = vector.shape_cast %153 : vector<8xf32> to vector<8x1xf32>
    %cst_63 = arith.constant 3.200000e+01 : f32
    %155 = vector.broadcast %cst_63 : f32 to vector<8x1xf32>
    %156 = arith.divf %154, %155 : vector<8x1xf32>
    %157 = vector.broadcast %149 : vector<8x1xf32> to vector<8x32xf32>
    %158 = arith.subf %143, %157 : vector<8x32xf32>
    %cst_64 = arith.constant 9.99999974E-6 : f32
    %159 = vector.broadcast %cst_64 : f32 to vector<8x1xf32>
    %160 = arith.addf %156, %159 : vector<8x1xf32>
    %161 = math.rsqrt %160 : vector<8x1xf32>
    %162 = vector.broadcast %161 : vector<8x1xf32> to vector<8x32xf32>
    %163 = arith.mulf %158, %162 : vector<8x32xf32>
    %164 = vector.broadcast %144 : vector<1x32xf32> to vector<8x32xf32>
    %165 = arith.mulf %163, %164 : vector<8x32xf32>
    %166 = vector.broadcast %145 : vector<1x32xf32> to vector<8x32xf32>
    %167 = arith.addf %165, %166 : vector<8x32xf32>
    %c0_65 = arith.constant 0 : index
    %c0_66 = arith.constant 0 : index
    %c0_67 = arith.constant 0 : index
    %168 = vector.load %arg6[%c0_65, %c0_66, %c0_67] : memref<1x8x32xf32, #tpu.memory_space<vmem>>, vector<1x8x32xf32>
    %169 = vector.shape_cast %168 : vector<1x8x32xf32> to vector<8x32xf32>
    %170 = vector.shape_cast %167 : vector<8x32xf32> to vector<1x8x32xf32>
    tpu.vector_store %arg6[%c0_65, %c0_66, %c0_67], %170 {strides = array<i32>} : memref<1x8x32xf32, #tpu.memory_space<vmem>>, vector<1x8x32xf32>,
    return
  }
  func.func @transform_0(%arg0: i32) -> (i32, i32, i32) {
    %c0_i32 = arith.constant 0 : i32
    %c0_i32_0 = arith.constant 0 : i32
    %c0_i32_1 = arith.constant 0 : i32
    return %arg0, %c0_i32, %c0_i32_0 : i32, i32, i32
  }
  func.func @transform_1(%arg0: i32) -> (i32, i32, i32) {
    %c0_i32 = arith.constant 0 : i32
    %c0_i32_0 = arith.constant 0 : i32
    %c0_i32_1 = arith.constant 0 : i32
    return %arg0, %c0_i32, %c0_i32_0 : i32, i32, i32
  }
  func.func @transform_2(%arg0: i32) -> (i32, i32, i32) {
    %c0_i32 = arith.constant 0 : i32
    %c0_i32_0 = arith.constant 0 : i32
    %c0_i32_1 = arith.constant 0 : i32
    return %arg0, %c0_i32, %c0_i32_0 : i32, i32, i32
  }
  func.func @transform_3(%arg0: i32) -> (i32, i32, i32) {
    %c0_i32 = arith.constant 0 : i32
    %c0_i32_0 = arith.constant 0 : i32
    %c0_i32_1 = arith.constant 0 : i32
    return %arg0, %c0_i32, %c0_i32_0 : i32, i32, i32
  }
  func.func @transform_4(%arg0: i32) -> (i32, i32) {
    %c0_i32 = arith.constant 0 : i32
    %c0_i32_0 = arith.constant 0 : i32
    %c0_i32_1 = arith.constant 0 : i32
    return %c0_i32, %c0_i32_0 : i32, i32
  }
  func.func @transform_5(%arg0: i32) -> (i32, i32, i32) {
    %c0_i32 = arith.constant 0 : i32
    %c0_i32_0 = arith.constant 0 : i32
    %c0_i32_1 = arith.constant 0 : i32
    return %arg0, %c0_i32, %c0_i32_0 : i32, i32, i32
  }
}

</mosaic_0001>

<llo_original>
// kernel: tpu_custom_call.1
$region0: #{tpu_custom_call.1}
  #allocation0 [shape = 'u32[]', space=smem, size = 0x4, offset = 0x4, fixed_abs, tag = 'smem constant byte address 0x4 - core index']
  #allocation1 [shape = 'u32[144,128]{1,0:T(1,128)}', space=vmem, size = 0x12000, scoped, tag = 'internal scratch']
  %s0 = inlined_call_operand.hbm [shape: f32[2,8,32], index: 0, kind: input, shape index: {}]
  %s1 = inlined_call_operand.hbm [shape: f32[2,8,32], index: 1, kind: input, shape index: {}]
  %s2 = inlined_call_operand.hbm [shape: f32[2,16,32], index: 2, kind: input, shape index: {}]
  %s3 = inlined_call_operand.hbm [shape: f32[2,16,32], index: 3, kind: input, shape index: {}]
  %s4 = inlined_call_operand.hbm [shape: f32[400,128], index: 4, kind: input, shape index: {}]
  %s5 = inlined_call_operand.hbm [shape: f32[2,8,32], index: 5, kind: output, shape index: {}]
  %s6 = sld [smem:[#allocation0]]
  $region73: #{tpu_custom_call.1} parent=0
    _
  %s8 = ssub.s32 1, %s6
  %s9 = scalar_select 0, %s8, %s6
  $region1: #{tpu_custom_call.1} parent=0
    #allocation2 [shape = 'u8[8192]{0}', space=vmem, size = 0x2000, scoped, tag = 'input window, operand 0']
    #allocation3 [shape = 's32[2]{0}', space=sflag, size = 0x8, scoped, tag = 'scoped memory for tpu_custom_call.1']
    #allocation4 [shape = 's32[2]{0}', space=sflag, size = 0x8, scoped, tag = 'scoped memory for tpu_custom_call.1']
    #allocation5 [shape = 'u8[8192]{0}', space=vmem, size = 0x2000, scoped, tag = 'input window, operand 1']
    #allocation6 [shape = 's32[2]{0}', space=sflag, size = 0x8, scoped, tag = 'scoped memory for tpu_custom_call.1']
    #allocation7 [shape = 'u8[16384]{0}', space=vmem, size = 0x4000, scoped, tag = 'input window, operand 2']
    #allocation8 [shape = 'u8[16384]{0}', space=vmem, size = 0x4000, scoped, tag = 'input window, operand 3']
    #allocation9 [shape = 's32[2]{0}', space=sflag, size = 0x8, scoped, tag = 'scoped memory for tpu_custom_call.1']
    #allocation10 [shape = 'u8[204800]{0}', space=vmem, size = 0x32000, scoped, tag = 'input window, operand 4, single buffered']
    #allocation11 [shape = 'u8[8192]{0}', space=vmem, size = 0x2000, scoped, tag = 'output window, operand 0']
    %10 = vsyncpa [#allocation3], 0
    %s11 = scalar_lea.sflag [#allocation3], 1
    %12 = vsyncpa %s11, 0
    %13 = vsyncpa [#allocation6], 0
    %s14 = scalar_lea.sflag [#allocation6], 1
    %15 = vsyncpa %s14, 0
    %16 = vsyncpa [#allocation9], 0
    %s17 = scalar_lea.sflag [#allocation9], 1
    %18 = vsyncpa %s17, 0
    %19 = vsyncpa [#allocation4], 0
    %s20 = scalar_lea.sflag [#allocation4], 1
    %21 = vsyncpa %s20, 0
    loop: start=0, step=1, limit=4
    $region2: #{tpu_custom_call.1} parent=1 // loop_pre_header
      _
    $region3: #{tpu_custom_call.1} parent=1 // loop_header
      %s23 = sphi 0, %s27
      %p24 = scmp.ge.s32.totalorder %s23, 4
      %s33 = sphi 0, %s35
      %s36 = sphi 0, %s33
      %s37 = sphi 0, %s36
      %s53 = sphi 0, %s37
      %s59 = sphi 0, %s61
      %s62 = sphi 0, %s59
      %s63 = sphi 0, %s62
      %s79 = sphi 0, %s63
      %s85 = sphi 0, %s87
      %s88 = sphi 0, %s85
      %s89 = sphi 0, %s88
      %s105 = sphi 0, %s89
      %s111 = sphi 0, %s113
      %s114 = sphi 0, %s111
      %s115 = sphi 0, %s114
      %s131 = sphi 0, %s115
      %s135 = sphi 0, %s135
      %s137 = sphi 0, %s135
      %s138 = sphi 0, %s137
      %s152 = sphi 0, %s138
      %s158 = sphi 0, %s160
      %s161 = sphi 0, %s158
      %s162 = sphi 0, %s161
      %s178 = sphi 0, %s162
    $region4: #{tpu_custom_call.1} parent=1 // loop_header_branch
      %26 = sbr.rel (%p24) target = $region8
    $region5: #{tpu_custom_call.1} parent=1 // loop_body
      %s28 = ssub.s32 %s23, 1
      %s29 = ssub.s32 %s23, 2
      %s30 = sadd.s32 %s23, 1
      %s31 = ssub.s32 %s23, %s30
      %p32 = scmp.eq.s32.totalorder %s31, 0
      %s34 = sadd.s32 %s33, 1
      %s35 = scalar_select %p32, %s33, %s34
      %p38 = pneg %p32
      %p39 = scmp.eq.s32.totalorder %s23, 1
      %p40 = por %p38, %p39
      %p41 = scmp.ne.s32.totalorder %s33, %s36
      %p42 = scmp.eq.s32.totalorder %s23, 0
      %p43 = por %p41, %p42
      %p44 = scmp.ne.s32.totalorder %s33, %s36
      %p45 = scmp.eq.s32.totalorder %s28, 1
      %p46 = por %p44, %p45
      %p47 = scmp.ne.s32.totalorder %s36, %s37
      %p48 = scmp.eq.s32.totalorder %s28, 0
      %p49 = por %p47, %p48
      %p50 = scmp.ne.s32.totalorder %s36, %s37
      %p51 = scmp.eq.s32.totalorder %s29, 1
      %p52 = por %p50, %p51
      %p54 = scmp.ne.s32.totalorder %s37, %s53
      %p55 = scmp.eq.s32.totalorder %s29, 0
      %p56 = por %p54, %p55
      %s57 = ssub.s32 %s23, %s30
      %p58 = scmp.eq.s32.totalorder %s57, 0
      %s60 = sadd.s32 %s59, 1
      %s61 = scalar_select %p58, %s59, %s60
      %p64 = pneg %p58
      %p65 = scmp.eq.s32.totalorder %s23, 1
      %p66 = por %p64, %p65
      %p67 = scmp.ne.s32.totalorder %s59, %s62
      %p68 = scmp.eq.s32.totalorder %s23, 0
      %p69 = por %p67, %p68
      %p70 = scmp.ne.s32.totalorder %s59, %s62
      %p71 = scmp.eq.s32.totalorder %s28, 1
      %p72 = por %p70, %p71
      %p73 = scmp.ne.s32.totalorder %s62, %s63
      %p74 = scmp.eq.s32.totalorder %s28, 0
      %p75 = por %p73, %p74
      %p76 = scmp.ne.s32.totalorder %s62, %s63
      %p77 = scmp.eq.s32.totalorder %s29, 1
      %p78 = por %p76, %p77
      %p80 = scmp.ne.s32.totalorder %s63, %s79
      %p81 = scmp.eq.s32.totalorder %s29, 0
      %p82 = por %p80, %p81
      %s83 = ssub.s32 %s23, %s30
      %p84 = scmp.eq.s32.totalorder %s83, 0
      %s86 = sadd.s32 %s85, 1
      %s87 = scalar_select %p84, %s85, %s86
      %p90 = pneg %p84
      %p91 = scmp.eq.s32.totalorder %s23, 1
      %p92 = por %p90, %p91
      %p93 = scmp.ne.s32.totalorder %s85, %s88
      %p94 = scmp.eq.s32.totalorder %s23, 0
      %p95 = por %p93, %p94
      %p96 = scmp.ne.s32.totalorder %s85, %s88
      %p97 = scmp.eq.s32.totalorder %s28, 1
      %p98 = por %p96, %p97
      %p99 = scmp.ne.s32.totalorder %s88, %s89
      %p100 = scmp.eq.s32.totalorder %s28, 0
      %p101 = por %p99, %p100
      %p102 = scmp.ne.s32.totalorder %s88, %s89
      %p103 = scmp.eq.s32.totalorder %s29, 1
      %p104 = por %p102, %p103
      %p106 = scmp.ne.s32.totalorder %s89, %s105
      %p107 = scmp.eq.s32.totalorder %s29, 0
      %p108 = por %p106, %p107
      %s109 = ssub.s32 %s23, %s30
      %p110 = scmp.eq.s32.totalorder %s109, 0
      %s112 = sadd.s32 %s111, 1
      %s113 = scalar_select %p110, %s111, %s112
      %p116 = pneg %p110
      %p117 = scmp.eq.s32.totalorder %s23, 1
      %p118 = por %p116, %p117
      %p119 = scmp.ne.s32.totalorder %s111, %s114
      %p120 = scmp.eq.s32.totalorder %s23, 0
      %p121 = por %p119, %p120
      %p122 = scmp.ne.s32.totalorder %s111, %s114
      %p123 = scmp.eq.s32.totalorder %s28, 1
      %p124 = por %p122, %p123
      %p125 = scmp.ne.s32.totalorder %s114, %s115
      %p126 = scmp.eq.s32.totalorder %s28, 0
      %p127 = por %p125, %p126
      %p128 = scmp.ne.s32.totalorder %s114, %s115
      %p129 = scmp.eq.s32.totalorder %s29, 1
      %p130 = por %p128, %p129
      %p132 = scmp.ne.s32.totalorder %s115, %s131
      %p133 = scmp.eq.s32.totalorder %s29, 0
      %p134 = por %p132, %p133
      %s136 = sadd.s32 %s135, 1
      %p139 = scmp.eq.s32.totalorder %s23, 1
      %p140 = scmp.ne.s32.totalorder %s135, %s137
      %p141 = scmp.eq.s32.totalorder %s23, 0
      %p142 = por %p140, %p141
      %p143 = scmp.ne.s32.totalorder %s135, %s137
      %p144 = scmp.eq.s32.totalorder %s28, 1
      %p145 = por %p143, %p144
      %p146 = scmp.ne.s32.totalorder %s137, %s138
      %p147 = scmp.eq.s32.totalorder %s28, 0
      %p148 = por %p146, %p147
      %p149 = scmp.ne.s32.totalorder %s137, %s138
      %p150 = scmp.eq.s32.totalorder %s29, 1
      %p151 = por %p149, %p150
      %p153 = scmp.ne.s32.totalorder %s138, %s152
      %p154 = scmp.eq.s32.totalorder %s29, 0
      %p155 = por %p153, %p154
      %s156 = ssub.s32 %s23, %s30
      %p157 = scmp.eq.s32.totalorder %s156, 0
      %s159 = sadd.s32 %s158, 1
      %s160 = scalar_select %p157, %s158, %s159
      %p163 = pneg %p157
      %p164 = scmp.eq.s32.totalorder %s23, 1
      %p165 = por %p163, %p164
      %p166 = scmp.ne.s32.totalorder %s158, %s161
      %p167 = scmp.eq.s32.totalorder %s23, 0
      %p168 = por %p166, %p167
      %p169 = scmp.ne.s32.totalorder %s158, %s161
      %p170 = scmp.eq.s32.totalorder %s28, 1
      %p171 = por %p169, %p170
      %p172 = scmp.ne.s32.totalorder %s161, %s162
      %p173 = scmp.eq.s32.totalorder %s28, 0
      %p174 = por %p172, %p173
      %p175 = scmp.ne.s32.totalorder %s161, %s162
      %p176 = scmp.eq.s32.totalorder %s29, 1
      %p177 = por %p175, %p176
      %p179 = scmp.ne.s32.totalorder %s162, %s178
      %p180 = scmp.eq.s32.totalorder %s29, 0
      %p181 = por %p179, %p180
      %p182 = scmp.le.s32.totalorder 1, %s23
      %p183 = scmp.lt.s32.totalorder %s23, 3
      %p184 = pnand %p182, %p183
      %p185 = pneg %p184
      // Predicated region
      $region9: #{tpu_custom_call.1} parent=5 // pred_check
        _
      $region10: #{tpu_custom_call.1} parent=5 // pred_check_branch
        %187 = sbr.rel (%p184) target = $region12
      $region11: #{tpu_custom_call.1} parent=5 // pred_region
        %s188 = ssub.s32 %s23, 1
        // Predicated region
        $region13: #{tpu_custom_call.1} parent=11 // pred_check
          %p189 = pneg %p148
        $region14: #{tpu_custom_call.1} parent=11 // pred_check_branch
          %191 = sbr.rel (%p189) target = $region16
        $region15: #{tpu_custom_call.1} parent=11 // pred_region
          %s193 = ssub.s32 6400, 6400
          %194 = vsyncadd [#allocation9], %s193
          %s195 = sshll.u32 [#allocation10], 4
          %s196 = int_to_ptr.vmem [resolvable:$true] %s195
          %201 = dma.hbm_to_vmem [thread:$0]  %s4, 6400, %s196, [#allocation9], 128, 128, 8
        $region16: #{tpu_custom_call.1} parent=11 // pred_fallthru
          _
      $region12: #{tpu_custom_call.1} parent=5 // pred_fallthru
        _
      %p202 = scmp.lt.s32.totalorder %s23, 2
      // Predicated region
      $region17: #{tpu_custom_call.1} parent=5 // pred_check
        %p203 = pneg %p202
      $region18: #{tpu_custom_call.1} parent=5 // pred_check_branch
        %205 = sbr.rel (%p203) target = $region20
      $region19: #{tpu_custom_call.1} parent=5 // pred_region
        // Predicated region
        $region21: #{tpu_custom_call.1} parent=19 // pred_check
          %p206 = pneg %p43
        $region22: #{tpu_custom_call.1} parent=19 // pred_check_branch
          %208 = sbr.rel (%p206) target = $region24
        $region23: #{tpu_custom_call.1} parent=19 // pred_region
          %s209 = sand.u32 %s33, 1
          %s210 = scalar_lea.sflag [#allocation3], %s209
          %s211 = sand.u32 %s33, 1
          %s212 = smul.addr %s211, 8
          %s213 = scalar_lea.vmem [#allocation2], %s212
          %s215 = ssub.s32 128, 128
          %216 = vsyncadd %s210, %s215
          %s217 = smul.addr %s23, 128
          %s218 = scalar_lea.hbm %s0, %s217
          %s220 = sshll.u32 %s213, 4
          %s221 = int_to_ptr.vmem [resolvable:$true] %s220
          %223 = dma.hbm_to_vmem [thread:$0]  %s218, 128, %s221, %s210
        $region24: #{tpu_custom_call.1} parent=19 // pred_fallthru
          _
        // Predicated region
        $region25: #{tpu_custom_call.1} parent=19 // pred_check
          %p224 = pneg %p69
        $region26: #{tpu_custom_call.1} parent=19 // pred_check_branch
          %226 = sbr.rel (%p224) target = $region28
        $region27: #{tpu_custom_call.1} parent=19 // pred_region
          %s227 = sand.u32 %s23, 1
          %s228 = scalar_lea.sflag [#allocation6], %s227
          %s229 = sand.u32 %s59, 1
          %s230 = smul.addr %s229, 8
          %s231 = scalar_lea.vmem [#allocation5], %s230
          %s233 = ssub.s32 128, 128
          %234 = vsyncadd %s228, %s233
          %s235 = smul.addr %s23, 128
          %s236 = scalar_lea.hbm %s1, %s235
          %s238 = sshll.u32 %s231, 4
          %s239 = int_to_ptr.vmem [resolvable:$true] %s238
          %241 = dma.hbm_to_vmem [thread:$0]  %s236, 128, %s239, %s228
        $region28: #{tpu_custom_call.1} parent=19 // pred_fallthru
          _
        // Predicated region
        $region29: #{tpu_custom_call.1} parent=19 // pred_check
          %p242 = pneg %p95
        $region30: #{tpu_custom_call.1} parent=19 // pred_check_branch
          %244 = sbr.rel (%p242) target = $region32
        $region31: #{tpu_custom_call.1} parent=19 // pred_region
          %s245 = sand.u32 %s23, 1
          %s246 = scalar_lea.sflag [#allocation6], %s245
          %s247 = sand.u32 %s85, 1
          %s248 = smul.addr %s247, 16
          %s249 = scalar_lea.vmem [#allocation7], %s248
          %s251 = ssub.s32 256, 256
          %252 = vsyncadd %s246, %s251
          %s253 = smul.addr %s23, 2
          %s254 = smul.addr %s253, 128
          %s255 = scalar_lea.hbm %s2, %s254
          %s256 = sshll.u32 %s249, 4
          %s257 = int_to_ptr.vmem [resolvable:$true] %s256
          %262 = dma.hbm_to_vmem [thread:$0]  %s255, 256, %s257, %s246, 128, 128, 8
        $region32: #{tpu_custom_call.1} parent=19 // pred_fallthru
          _
        // Predicated region
        $region33: #{tpu_custom_call.1} parent=19 // pred_check
          %p263 = pneg %p121
        $region34: #{tpu_custom_call.1} parent=19 // pred_check_branch
          %265 = sbr.rel (%p263) target = $region36
        $region35: #{tpu_custom_call.1} parent=19 // pred_region
          %s266 = sand.u32 %s23, 1
          %s267 = scalar_lea.sflag [#allocation9], %s266
          %s268 = sand.u32 %s111, 1
          %s269 = smul.addr %s268, 16
          %s270 = scalar_lea.vmem [#allocation8], %s269
          %s272 = ssub.s32 256, 256
          %273 = vsyncadd %s267, %s272
          %s274 = smul.addr %s23, 2
          %s275 = smul.addr %s274, 128
          %s276 = scalar_lea.hbm %s3, %s275
          %s277 = sshll.u32 %s270, 4
          %s278 = int_to_ptr.vmem [resolvable:$true] %s277
          %283 = dma.hbm_to_vmem [thread:$0]  %s276, 256, %s278, %s267, 128, 128, 8
        $region36: #{tpu_custom_call.1} parent=19 // pred_fallthru
          _
      $region20: #{tpu_custom_call.1} parent=5 // pred_fallthru
        _
      %p284 = scmp.le.s32.totalorder 1, %s23
      %p285 = scmp.lt.s32.totalorder %s23, 3
      %p286 = pnand %p284, %p285
      %p287 = pneg %p286
      // Predicated region
      $region37: #{tpu_custom_call.1} parent=5 // pred_check
        _
      $region38: #{tpu_custom_call.1} parent=5 // pred_check_branch
        %289 = sbr.rel (%p286) target = $region40
      $region39: #{tpu_custom_call.1} parent=5 // pred_region
        %s290 = ssub.s32 %s23, 1
        %s291 = sand.u32 %s36, 1
        %s292 = scalar_lea.sflag [#allocation3], %s291
        %s293 = sand.u32 %s36, 1
        %s294 = smul.addr %s293, 8
        %s295 = scalar_lea.vmem [#allocation2], %s294
        // Predicated region
        $region41: #{tpu_custom_call.1} parent=39 // pred_check
          %p296 = pneg %p49
        $region42: #{tpu_custom_call.1} parent=39 // pred_check_branch
          %298 = sbr.rel (%p296) target = $region44
        $region43: #{tpu_custom_call.1} parent=39 // pred_region
          %299 = dma.done %s292, 128
        $region44: #{tpu_custom_call.1} parent=39 // pred_fallthru
          _
        %s300 = sand.u32 %s28, 1
        %s301 = scalar_lea.sflag [#allocation6], %s300
        %s302 = sand.u32 %s62, 1
        %s303 = smul.addr %s302, 8
        %s304 = scalar_lea.vmem [#allocation5], %s303
        // Predicated region
        $region45: #{tpu_custom_call.1} parent=39 // pred_check
          %p305 = pneg %p75
        $region46: #{tpu_custom_call.1} parent=39 // pred_check_branch
          %307 = sbr.rel (%p305) target = $region48
        $region47: #{tpu_custom_call.1} parent=39 // pred_region
          %308 = dma.done %s301, 128
        $region48: #{tpu_custom_call.1} parent=39 // pred_fallthru
          _
        %s309 = sand.u32 %s28, 1
        %s310 = scalar_lea.sflag [#allocation6], %s309
        %s311 = sand.u32 %s88, 1
        %s312 = smul.addr %s311, 16
        %s313 = scalar_lea.vmem [#allocation7], %s312
        // Predicated region
        $region49: #{tpu_custom_call.1} parent=39 // pred_check
          %p314 = pneg %p101
        $region50: #{tpu_custom_call.1} parent=39 // pred_check_branch
          %316 = sbr.rel (%p314) target = $region52
        $region51: #{tpu_custom_call.1} parent=39 // pred_region
          %317 = dma.done %s310, 256
        $region52: #{tpu_custom_call.1} parent=39 // pred_fallthru
          _
        %s318 = sand.u32 %s28, 1
        %s319 = scalar_lea.sflag [#allocation9], %s318
        %s320 = sand.u32 %s114, 1
        %s321 = smul.addr %s320, 16
        %s322 = scalar_lea.vmem [#allocation8], %s321
        // Predicated region
        $region53: #{tpu_custom_call.1} parent=39 // pred_check
          %p323 = pneg %p127
        $region54: #{tpu_custom_call.1} parent=39 // pred_check_branch
          %325 = sbr.rel (%p323) target = $region56
        $region55: #{tpu_custom_call.1} parent=39 // pred_region
          %326 = dma.done %s319, 256
        $region56: #{tpu_custom_call.1} parent=39 // pred_fallthru
          _
        // Predicated region
        $region57: #{tpu_custom_call.1} parent=39 // pred_check
          %p327 = pneg %p148
        $region58: #{tpu_custom_call.1} parent=39 // pred_check_branch
          %329 = sbr.rel (%p327) target = $region60
        $region59: #{tpu_custom_call.1} parent=39 // pred_region
          %330 = dma.done [#allocation9], 6400
        $region60: #{tpu_custom_call.1} parent=39 // pred_fallthru
          _
        %s331 = sand.u32 %s36, 1
        %s332 = scalar_lea.sflag [#allocation3], %s331
        %s333 = sand.u32 %s36, 1
        %s334 = smul.addr %s333, 8
        %s335 = scalar_lea.vmem [#allocation2], %s334
        %p336 = pneg %p49
        %p337 = pneg %p46
        %s338 = sand.u32 %s28, 1
        %s339 = scalar_lea.sflag [#allocation6], %s338
        %s340 = sand.u32 %s62, 1
        %s341 = smul.addr %s340, 8
        %s342 = scalar_lea.vmem [#allocation5], %s341
        %p343 = pneg %p75
        %p344 = pneg %p72
        %s345 = sand.u32 %s28, 1
        %s346 = scalar_lea.sflag [#allocation6], %s345
        %s347 = sand.u32 %s88, 1
        %s348 = smul.addr %s347, 16
        %s349 = scalar_lea.vmem [#allocation7], %s348
        %p350 = pneg %p101
        %p351 = pneg %p98
        %s352 = sand.u32 %s28, 1
        %s353 = scalar_lea.sflag [#allocation9], %s352
        %s354 = sand.u32 %s114, 1
        %s355 = smul.addr %s354, 16
        %s356 = scalar_lea.vmem [#allocation8], %s355
        %p357 = pneg %p127
        %p358 = pneg %p124
        %p359 = pneg %p148
        %p360 = pneg %p145
        %p361 = pneg %p174
        %p362 = pneg %p171
        %s363 = sand.u32 %s161, 1
        %s364 = scalar_lea.sflag [#allocation4], %s363
        %s365 = sand.u32 %s161, 1
        %s366 = smul.addr %s365, 8
        %s367 = scalar_lea.vmem [#allocation11], %s366
        %v368 = vld [vmem:[%s295] sm:$0xff]
        %v369 = vld [vmem:[%s304] sm:$0xff]
        %v370 = vld [vmem:[%s313] sm:$0xff]
        %v371 = vld [vmem:[%s313 + $0x8] sm:$0xff]
        %v372 = vld [vmem:[%s322] sm:$0xff]
        %v373 = vld [vmem:[%s322 + $0x8] sm:$0xff]
        %v374 = vadd.f32 %v370, %v372
        %v375 = vadd.f32 %v371, %v373
        %v376 = vadd.f32 %v368, %v369
        %v377 = vld [vmem:[#allocation10] sm:$0xff]
        %v378 = vld [vmem:[#allocation10 + $0x8] sm:$0xff]
        %v379 = vld [vmem:[#allocation10 + $0x10] sm:$0xff]
        %v380 = vld [vmem:[#allocation10 + $0x18] sm:$0xff]
        %v381 = vld [vmem:[#allocation10 + $0x120] sm:$0x1]
        %v382 = vlaneseq
        %v383 = vshrl.u32 %v382, 7
        %v384 = vsub.s32 0, %v383
        %v385 = vrot.slane %v381, %v384
        %vm386 = vcmask 261120
        %v388 = vsel %vm386, %v376, 0
        %390 = vmatprep.subr.mxu0 0.0
        %391 = vmatpush1.msra.mxu0 %v377
        %392 = vmatprep.subr.mxu0 0.0
        %393 = vmatpush1.msra.mxu0 %v378
        %394 = vmatprep.subr.mxu0 0.0
        %395 = vmatpush1.msra.mxu0 %v379
        %396 = vmatprep.subr.mxu0 0.0
        %397 = vmatpush1.msra.mxu0 %v380
        %398 = vmatprep.subr.mxu0 0.0
        %399 = vmatpush1.msra.mxu0 0.0
        %400 = vmatprep.subr.mxu0 0.0
        %401 = vmatpush1.msra.mxu0 0.0
        %402 = vmatprep.subr.mxu0 0.0
        %403 = vmatpush1.msra.mxu0 0.0
        %404 = vmatprep.subr.mxu0 0.0
        %405 = vmatpush1.msra.mxu0 0.0
        %406 = vmatprep.subr.mxu0 0.0
        %407 = vmatpush1.msra.mxu0 0.0
        %408 = vmatprep.subr.mxu0 0.0
        %409 = vmatpush1.msra.mxu0 0.0
        %410 = vmatprep.subr.mxu0 0.0
        %411 = vmatpush1.msra.mxu0 0.0
        %412 = vmatprep.subr.mxu0 0.0
        %413 = vmatpush1.msra.mxu0 0.0
        %414 = vmatprep.subr.mxu0 0.0
        %415 = vmatpush1.msra.mxu0 0.0
        %416 = vmatprep.subr.mxu0 0.0
        %417 = vmatpush1.msra.mxu0 0.0
        %418 = vmatprep.subr.mxu0 0.0
        %419 = vmatpush1.msra.mxu0 0.0
        %420 = vmatprep.subr.mxu0 0.0
        %421 = vmatpush1.msra.mxu0 0.0
        %422 = vmatprep.subr.mxu0 0.0
        %423 = vmatpush1.msra.mxu0 0.0
        %424 = vmatprep.subr.mxu0 0.0
        %425 = vmatpush1.msra.mxu0 0.0
        %426 = vmatprep.subr.mxu0 0.0
        %427 = vmatpush1.msra.mxu0 0.0
        %428 = vmatprep.subr.mxu0 0.0
        %429 = vmatpush1.msra.mxu0 0.0
        %430 = vmatprep.subr.mxu0 0.0
        %431 = vmatpush1.msra.mxu0 0.0
        %432 = vmatprep.subr.mxu0 0.0
        %433 = vmatpush1.msra.mxu0 0.0
        %434 = vmatprep.subr.mxu0 0.0
        %435 = vmatpush1.msra.mxu0 0.0
        %436 = vmatprep.subr.mxu0 0.0
        %437 = vmatpush1.msra.mxu0 0.0
        %438 = vmatprep.subr.mxu0 0.0
        %439 = vmatpush1.msra.mxu0 0.0
        %440 = vmatprep.subr.mxu0 0.0
        %441 = vmatpush1.msra.mxu0 0.0
        %442 = vmatprep.subr.mxu0 0.0
        %443 = vmatpush1.msra.mxu0 0.0
        %444 = vmatprep.subr.mxu0 0.0
        %445 = vmatpush1.msra.mxu0 0.0
        %446 = vmatprep.subr.mxu0 0.0
        %447 = vmatpush1.msra.mxu0 0.0
        %448 = vmatprep.subr.mxu0 0.0
        %449 = vmatpush1.msra.mxu0 0.0
        %450 = vmatprep.subr.mxu0 0.0
        %451 = vmatpush1.msra.mxu0 0.0
        %452 = vmatprep.subr.mxu0 0.0
        %453 = vmatpush1.msra.mxu0 0.0
        %454 = vmatprep.mubr.f32.mxu0 0.0
        %455 = vmatmul.mubr.f32.gmra.mrb[0].mxu0 %v388
        %v456 = vpop.f32.mrb[0].mxu0
        %v457 = vadd.f32 %v385, %v456
        %v458 = vpop.f32.mrb[0].mxu0
        %459 = vdwg.mxu0
        %v460 = vld [vmem:[#allocation10 + $0x20] sm:$0xff]
        %v461 = vld [vmem:[#allocation10 + $0x28] sm:$0xff]
        %v462 = vld [vmem:[#allocation10 + $0x30] sm:$0xff]
        %v463 = vld [vmem:[#allocation10 + $0x38] sm:$0xff]
        %v464 = vld [vmem:[#allocation10 + $0x128] sm:$0x1]
        %v465 = vlaneseq
        %v466 = vshrl.u32 %v465, 7
        %v467 = vsub.s32 0, %v466
        %v468 = vrot.slane %v464, %v467
        %v470 = vsel %vm386, %v374, 0
        %v473 = vsel %vm386, %v375, 0
        %475 = vmatprep.subr.mxu0 0.0
        %476 = vmatpush1.msra.mxu0 %v460
        %477 = vmatprep.subr.mxu0 0.0
        %478 = vmatpush1.msra.mxu0 %v461
        %479 = vmatprep.subr.mxu0 0.0
        %480 = vmatpush1.msra.mxu0 %v462
        %481 = vmatprep.subr.mxu0 0.0
        %482 = vmatpush1.msra.mxu0 %v463
        %483 = vmatprep.subr.mxu0 0.0
        %484 = vmatpush1.msra.mxu0 0.0
        %485 = vmatprep.subr.mxu0 0.0
        %486 = vmatpush1.msra.mxu0 0.0
        %487 = vmatprep.subr.mxu0 0.0
        %488 = vmatpush1.msra.mxu0 0.0
        %489 = vmatprep.subr.mxu0 0.0
        %490 = vmatpush1.msra.mxu0 0.0
        %491 = vmatprep.subr.mxu0 0.0
        %492 = vmatpush1.msra.mxu0 0.0
        %493 = vmatprep.subr.mxu0 0.0
        %494 = vmatpush1.msra.mxu0 0.0
        %495 = vmatprep.subr.mxu0 0.0
        %496 = vmatpush1.msra.mxu0 0.0
        %497 = vmatprep.subr.mxu0 0.0
        %498 = vmatpush1.msra.mxu0 0.0
        %499 = vmatprep.subr.mxu0 0.0
        %500 = vmatpush1.msra.mxu0 0.0
        %501 = vmatprep.subr.mxu0 0.0
        %502 = vmatpush1.msra.mxu0 0.0
        %503 = vmatprep.subr.mxu0 0.0
        %504 = vmatpush1.msra.mxu0 0.0
        %505 = vmatprep.subr.mxu0 0.0
        %506 = vmatpush1.msra.mxu0 0.0
        %507 = vmatprep.subr.mxu0 0.0
        %508 = vmatpush1.msra.mxu0 0.0
        %509 = vmatprep.subr.mxu0 0.0
        %510 = vmatpush1.msra.mxu0 0.0
        %511 = vmatprep.subr.mxu0 0.0
        %512 = vmatpush1.msra.mxu0 0.0
        %513 = vmatprep.subr.mxu0 0.0
        %514 = vmatpush1.msra.mxu0 0.0
        %515 = vmatprep.subr.mxu0 0.0
        %516 = vmatpush1.msra.mxu0 0.0
        %517 = vmatprep.subr.mxu0 0.0
        %518 = vmatpush1.msra.mxu0 0.0
        %519 = vmatprep.subr.mxu0 0.0
        %520 = vmatpush1.msra.mxu0 0.0
        %521 = vmatprep.subr.mxu0 0.0
        %522 = vmatpush1.msra.mxu0 0.0
        %523 = vmatprep.subr.mxu0 0.0
        %524 = vmatpush1.msra.mxu0 0.0
        %525 = vmatprep.subr.mxu0 0.0
        %526 = vmatpush1.msra.mxu0 0.0
        %527 = vmatprep.subr.mxu0 0.0
        %528 = vmatpush1.msra.mxu0 0.0
        %529 = vmatprep.subr.mxu0 0.0
        %530 = vmatpush1.msra.mxu0 0.0
        %531 = vmatprep.subr.mxu0 0.0
        %532 = vmatpush1.msra.mxu0 0.0
        %533 = vmatprep.subr.mxu0 0.0
        %534 = vmatpush1.msra.mxu0 0.0
        %535 = vmatprep.subr.mxu0 0.0
        %536 = vmatpush1.msra.mxu0 0.0
        %537 = vmatprep.subr.mxu0 0.0
        %538 = vmatpush1.msra.mxu0 0.0
        %539 = vmatprep.mubr.f32.mxu0 0.0
        %540 = vmatmul.mubr.f32.gmra.mrb[0].mxu0 %v470
        %v541 = vpop.f32.mrb[0].mxu0
        %v542 = vadd.f32 %v468, %v541
        %v543 = vpop.f32.mrb[0].mxu0
        %544 = vmatprep.mubr.f32.mxu0 0.0
        %545 = vmatmul.mubr.f32.gmra.mrb[0].mxu0 %v473
        %v546 = vpop.f32.mrb[0].mxu0
        %v547 = vadd.f32 %v468, %v546
        %v548 = vpop.f32.mrb[0].mxu0
        %549 = vdwg.mxu0
        %551 = vrot.lane.b32.xlu0 %v457, 120
        %v552 = vpop.permute.xlu0 %551
        %553 = vrot.lane.b32.xlu0 %v457, 112
        %v554 = vpop.permute.xlu0 %553
        %555 = vrot.lane.b32.xlu0 %v457, 104
        %v556 = vpop.permute.xlu0 %555
        %559 = vrot.lane.b32.xlu0 %v542, 120
        %v560 = vpop.permute.xlu0 %559
        %561 = vrot.lane.b32.xlu0 %v547, 120
        %v562 = vpop.permute.xlu0 %561
        %565 = vrot.lane.b32.xlu0 %v542, 112
        %v566 = vpop.permute.xlu0 %565
        %567 = vrot.lane.b32.xlu0 %v547, 112
        %v568 = vpop.permute.xlu0 %567
        %571 = vrot.lane.b32.xlu0 %v542, 104
        %v572 = vpop.permute.xlu0 %571
        %573 = vrot.lane.b32.xlu0 %v547, 104
        %v574 = vpop.permute.xlu0 %573
        %577 = vxpose.xlu0.b32.start [1/16] %v542, 128
        %578 = vxpose.xlu0.b32.cont [2/16] %v547, 128
        %579 = vxpose.xlu0.b32.cont [3/16] 0.0, 128
        %580 = vxpose.xlu0.b32.cont [4/16] 0.0, 128
        %581 = vxpose.xlu0.b32.cont [5/16] 0.0, 128
        %582 = vxpose.xlu0.b32.cont [6/16] 0.0, 128
        %583 = vxpose.xlu0.b32.cont [7/16] 0.0, 128
        %584 = vxpose.xlu0.b32.cont [8/16] 0.0, 128
        %585 = vxpose.xlu0.b32.cont [9/16] 0.0, 128
        %586 = vxpose.xlu0.b32.cont [10/16] 0.0, 128
        %587 = vxpose.xlu0.b32.cont [11/16] 0.0, 128
        %588 = vxpose.xlu0.b32.cont [12/16] 0.0, 128
        %589 = vxpose.xlu0.b32.cont [13/16] 0.0, 128
        %590 = vxpose.xlu0.b32.cont [14/16] 0.0, 128
        %591 = vxpose.xlu0.b32.cont [15/16] 0.0, 128
        %592 = vxpose.xlu0.b32.end [16/16] 0.0, 128
        %v593 = vpop.trf.xlu0
        %v594 = vpop.trf.xlu0
        %v595 = vpop.trf.xlu0
        %v596 = vpop.trf.xlu0
        %v597 = vpop.trf.xlu0
        %v598 = vpop.trf.xlu0
        %v599 = vpop.trf.xlu0
        %v600 = vpop.trf.xlu0
        %v601 = vpop.trf.xlu0
        %v602 = vpop.trf.xlu0
        %v603 = vpop.trf.xlu0
        %v604 = vpop.trf.xlu0
        %v605 = vpop.trf.xlu0
        %v606 = vpop.trf.xlu0
        %v607 = vpop.trf.xlu0
        %v608 = vpop.trf.xlu0
        %609 = vxpose.xlu0.b32.start [1/16] %v560, 128
        %610 = vxpose.xlu0.b32.cont [2/16] %v562, 128
        %611 = vxpose.xlu0.b32.cont [3/16] 0.0, 128
        %612 = vxpose.xlu0.b32.cont [4/16] 0.0, 128
        %613 = vxpose.xlu0.b32.cont [5/16] 0.0, 128
        %614 = vxpose.xlu0.b32.cont [6/16] 0.0, 128
        %615 = vxpose.xlu0.b32.cont [7/16] 0.0, 128
        %616 = vxpose.xlu0.b32.cont [8/16] 0.0, 128
        %617 = vxpose.xlu0.b32.cont [9/16] 0.0, 128
        %618 = vxpose.xlu0.b32.cont [10/16] 0.0, 128
        %619 = vxpose.xlu0.b32.cont [11/16] 0.0, 128
        %620 = vxpose.xlu0.b32.cont [12/16] 0.0, 128
        %621 = vxpose.xlu0.b32.cont [13/16] 0.0, 128
        %622 = vxpose.xlu0.b32.cont [14/16] 0.0, 128
        %623 = vxpose.xlu0.b32.cont [15/16] 0.0, 128
        %624 = vxpose.xlu0.b32.end [16/16] 0.0, 128
        %v625 = vpop.trf.xlu0
        %v626 = vpop.trf.xlu0
        %v627 = vpop.trf.xlu0
        %v628 = vpop.trf.xlu0
        %v629 = vpop.trf.xlu0
        %v630 = vpop.trf.xlu0
        %v631 = vpop.trf.xlu0
        %v632 = vpop.trf.xlu0
        %v633 = vpop.trf.xlu0
        %v634 = vpop.trf.xlu0
        %v635 = vpop.trf.xlu0
        %v636 = vpop.trf.xlu0
        %v637 = vpop.trf.xlu0
        %v638 = vpop.trf.xlu0
        %v639 = vpop.trf.xlu0
        %v640 = vpop.trf.xlu0
        %641 = vxpose.xlu0.b32.start [1/16] %v566, 128
        %642 = vxpose.xlu0.b32.cont [2/16] %v568, 128
        %643 = vxpose.xlu0.b32.cont [3/16] 0.0, 128
        %644 = vxpose.xlu0.b32.cont [4/16] 0.0, 128
        %645 = vxpose.xlu0.b32.cont [5/16] 0.0, 128
        %646 = vxpose.xlu0.b32.cont [6/16] 0.0, 128
        %647 = vxpose.xlu0.b32.cont [7/16] 0.0, 128
        %648 = vxpose.xlu0.b32.cont [8/16] 0.0, 128
        %649 = vxpose.xlu0.b32.cont [9/16] 0.0, 128
        %650 = vxpose.xlu0.b32.cont [10/16] 0.0, 128
        %651 = vxpose.xlu0.b32.cont [11/16] 0.0, 128
        %652 = vxpose.xlu0.b32.cont [12/16] 0.0, 128
        %653 = vxpose.xlu0.b32.cont [13/16] 0.0, 128
        %654 = vxpose.xlu0.b32.cont [14/16] 0.0, 128
        %655 = vxpose.xlu0.b32.cont [15/16] 0.0, 128
        %656 = vxpose.xlu0.b32.end [16/16] 0.0, 128
        %v657 = vpop.trf.xlu0
        %v658 = vpop.trf.xlu0
        %v659 = vpop.trf.xlu0
        %v660 = vpop.trf.xlu0
        %v661 = vpop.trf.xlu0
        %v662 = vpop.trf.xlu0
        %v663 = vpop.trf.xlu0
        %v664 = vpop.trf.xlu0
        %v665 = vpop.trf.xlu0
        %v666 = vpop.trf.xlu0
        %v667 = vpop.trf.xlu0
        %v668 = vpop.trf.xlu0
        %v669 = vpop.trf.xlu0
        %v670 = vpop.trf.xlu0
        %v671 = vpop.trf.xlu0
        %v672 = vpop.trf.xlu0
        %673 = vxpose.xlu0.b32.start [1/16] %v572, 128
        %674 = vxpose.xlu0.b32.cont [2/16] %v574, 128
        %675 = vxpose.xlu0.b32.cont [3/16] 0.0, 128
        %676 = vxpose.xlu0.b32.cont [4/16] 0.0, 128
        %677 = vxpose.xlu0.b32.cont [5/16] 0.0, 128
        %678 = vxpose.xlu0.b32.cont [6/16] 0.0, 128
        %679 = vxpose.xlu0.b32.cont [7/16] 0.0, 128
        %680 = vxpose.xlu0.b32.cont [8/16] 0.0, 128
        %681 = vxpose.xlu0.b32.cont [9/16] 0.0, 128
        %682 = vxpose.xlu0.b32.cont [10/16] 0.0, 128
        %683 = vxpose.xlu0.b32.cont [11/16] 0.0, 128
        %684 = vxpose.xlu0.b32.cont [12/16] 0.0, 128
        %685 = vxpose.xlu0.b32.cont [13/16] 0.0, 128
        %686 = vxpose.xlu0.b32.cont [14/16] 0.0, 128
        %687 = vxpose.xlu0.b32.cont [15/16] 0.0, 128
        %688 = vxpose.xlu0.b32.end [16/16] 0.0, 128
        %v689 = vpop.trf.xlu0
        %v690 = vpop.trf.xlu0
        %v691 = vpop.trf.xlu0
        %v692 = vpop.trf.xlu0
        %v693 = vpop.trf.xlu0
        %v694 = vpop.trf.xlu0
        %v695 = vpop.trf.xlu0
        %v696 = vpop.trf.xlu0
        %v697 = vpop.trf.xlu0
        %v698 = vpop.trf.xlu0
        %v699 = vpop.trf.xlu0
        %v700 = vpop.trf.xlu0
        %v701 = vpop.trf.xlu0
        %v702 = vpop.trf.xlu0
        %v703 = vpop.trf.xlu0
        %v704 = vpop.trf.xlu0
        %vm705 = vcmask 64512
        %v706 = vsel %vm705, %v457, 0
        %708 = vmatprep.subr.mxu0 0.0
        %709 = vmatpush1.msra.mxu0 %v593
        %710 = vmatprep.subr.mxu0 0.0
        %711 = vmatpush1.msra.mxu0 0.0
        %712 = vmatprep.subr.mxu0 0.0
        %713 = vmatpush1.msra.mxu0 0.0
        %714 = vmatprep.subr.mxu0 0.0
        %715 = vmatpush1.msra.mxu0 0.0
        %716 = vmatprep.subr.mxu0 0.0
        %717 = vmatpush1.msra.mxu0 0.0
        %718 = vmatprep.subr.mxu0 0.0
        %719 = vmatpush1.msra.mxu0 0.0
        %720 = vmatprep.subr.mxu0 0.0
        %721 = vmatpush1.msra.mxu0 0.0
        %722 = vmatprep.subr.mxu0 0.0
        %723 = vmatpush1.msra.mxu0 0.0
        %724 = vmatprep.subr.mxu0 0.0
        %725 = vmatpush1.msra.mxu0 0.0
        %726 = vmatprep.subr.mxu0 0.0
        %727 = vmatpush1.msra.mxu0 0.0
        %728 = vmatprep.subr.mxu0 0.0
        %729 = vmatpush1.msra.mxu0 0.0
        %730 = vmatprep.subr.mxu0 0.0
        %731 = vmatpush1.msra.mxu0 0.0
        %732 = vmatprep.subr.mxu0 0.0
        %733 = vmatpush1.msra.mxu0 0.0
        %734 = vmatprep.subr.mxu0 0.0
        %735 = vmatpush1.msra.mxu0 0.0
        %736 = vmatprep.subr.mxu0 0.0
        %737 = vmatpush1.msra.mxu0 0.0
        %738 = vmatprep.subr.mxu0 0.0
        %739 = vmatpush1.msra.mxu0 0.0
        %740 = vmatprep.subr.mxu0 0.0
        %741 = vmatpush1.msra.mxu0 0.0
        %742 = vmatprep.subr.mxu0 0.0
        %743 = vmatpush1.msra.mxu0 0.0
        %744 = vmatprep.subr.mxu0 0.0
        %745 = vmatpush1.msra.mxu0 0.0
        %746 = vmatprep.subr.mxu0 0.0
        %747 = vmatpush1.msra.mxu0 0.0
        %748 = vmatprep.subr.mxu0 0.0
        %749 = vmatpush1.msra.mxu0 0.0
        %750 = vmatprep.subr.mxu0 0.0
        %751 = vmatpush1.msra.mxu0 0.0
        %752 = vmatprep.subr.mxu0 0.0
        %753 = vmatpush1.msra.mxu0 0.0
        %754 = vmatprep.subr.mxu0 0.0
        %755 = vmatpush1.msra.mxu0 0.0
        %756 = vmatprep.subr.mxu0 0.0
        %757 = vmatpush1.msra.mxu0 0.0
        %758 = vmatprep.subr.mxu0 0.0
        %759 = vmatpush1.msra.mxu0 0.0
        %760 = vmatprep.subr.mxu0 0.0
        %761 = vmatpush1.msra.mxu0 0.0
        %762 = vmatprep.subr.mxu0 0.0
        %763 = vmatpush1.msra.mxu0 0.0
        %764 = vmatprep.subr.mxu0 0.0
        %765 = vmatpush1.msra.mxu0 0.0
        %766 = vmatprep.subr.mxu0 0.0
        %767 = vmatpush1.msra.mxu0 0.0
        %768 = vmatprep.subr.mxu0 0.0
        %769 = vmatpush1.msra.mxu0 0.0
        %770 = vmatprep.subr.mxu0 0.0
        %771 = vmatpush1.msra.mxu0 0.0
        %772 = vmatprep.mubr.f32.mxu0 0.0
        %773 = vmatmul.mubr.f32.gmra.mrb[0].mxu0 %v706
        %v774 = vpop.f32.mrb[0].mxu0
        %v775 = vadd.f32 0.0, %v774
        %v776 = vpop.f32.mrb[0].mxu0
        %777 = vdwg.mxu0
        %v778 = vsel %vm705, %v552, 0
        %780 = vmatprep.subr.mxu0 0.0
        %781 = vmatpush1.msra.mxu0 %v625
        %782 = vmatprep.subr.mxu0 0.0
        %783 = vmatpush1.msra.mxu0 0.0
        %784 = vmatprep.subr.mxu0 0.0
        %785 = vmatpush1.msra.mxu0 0.0
        %786 = vmatprep.subr.mxu0 0.0
        %787 = vmatpush1.msra.mxu0 0.0
        %788 = vmatprep.subr.mxu0 0.0
        %789 = vmatpush1.msra.mxu0 0.0
        %790 = vmatprep.subr.mxu0 0.0
        %791 = vmatpush1.msra.mxu0 0.0
        %792 = vmatprep.subr.mxu0 0.0
        %793 = vmatpush1.msra.mxu0 0.0
        %794 = vmatprep.subr.mxu0 0.0
        %795 = vmatpush1.msra.mxu0 0.0
        %796 = vmatprep.subr.mxu0 0.0
        %797 = vmatpush1.msra.mxu0 0.0
        %798 = vmatprep.subr.mxu0 0.0
        %799 = vmatpush1.msra.mxu0 0.0
        %800 = vmatprep.subr.mxu0 0.0
        %801 = vmatpush1.msra.mxu0 0.0
        %802 = vmatprep.subr.mxu0 0.0
        %803 = vmatpush1.msra.mxu0 0.0
        %804 = vmatprep.subr.mxu0 0.0
        %805 = vmatpush1.msra.mxu0 0.0
        %806 = vmatprep.subr.mxu0 0.0
        %807 = vmatpush1.msra.mxu0 0.0
        %808 = vmatprep.subr.mxu0 0.0
        %809 = vmatpush1.msra.mxu0 0.0
        %810 = vmatprep.subr.mxu0 0.0
        %811 = vmatpush1.msra.mxu0 0.0
        %812 = vmatprep.subr.mxu0 0.0
        %813 = vmatpush1.msra.mxu0 0.0
        %814 = vmatprep.subr.mxu0 0.0
        %815 = vmatpush1.msra.mxu0 0.0
        %816 = vmatprep.subr.mxu0 0.0
        %817 = vmatpush1.msra.mxu0 0.0
        %818 = vmatprep.subr.mxu0 0.0
        %819 = vmatpush1.msra.mxu0 0.0
        %820 = vmatprep.subr.mxu0 0.0
        %821 = vmatpush1.msra.mxu0 0.0
        %822 = vmatprep.subr.mxu0 0.0
        %823 = vmatpush1.msra.mxu0 0.0
        %824 = vmatprep.subr.mxu0 0.0
        %825 = vmatpush1.msra.mxu0 0.0
        %826 = vmatprep.subr.mxu0 0.0
        %827 = vmatpush1.msra.mxu0 0.0
        %828 = vmatprep.subr.mxu0 0.0
        %829 = vmatpush1.msra.mxu0 0.0
        %830 = vmatprep.subr.mxu0 0.0
        %831 = vmatpush1.msra.mxu0 0.0
        %832 = vmatprep.subr.mxu0 0.0
        %833 = vmatpush1.msra.mxu0 0.0
        %834 = vmatprep.subr.mxu0 0.0
        %835 = vmatpush1.msra.mxu0 0.0
        %836 = vmatprep.subr.mxu0 0.0
        %837 = vmatpush1.msra.mxu0 0.0
        %838 = vmatprep.subr.mxu0 0.0
        %839 = vmatpush1.msra.mxu0 0.0
        %840 = vmatprep.subr.mxu0 0.0
        %841 = vmatpush1.msra.mxu0 0.0
        %842 = vmatprep.subr.mxu0 0.0
        %843 = vmatpush1.msra.mxu0 0.0
        %844 = vmatprep.mubr.f32.mxu0 0.0
        %845 = vmatmul.mubr.f32.gmra.mrb[0].mxu0 %v778
        %v846 = vpop.f32.mrb[0].mxu0
        %v847 = vadd.f32 0.0, %v846
        %v848 = vpop.f32.mrb[0].mxu0
        %849 = vdwg.mxu0
        %v850 = vsel %vm705, %v554, 0
        %852 = vmatprep.subr.mxu0 0.0
        %853 = vmatpush1.msra.mxu0 %v657
        %854 = vmatprep.subr.mxu0 0.0
        %855 = vmatpush1.msra.mxu0 0.0
        %856 = vmatprep.subr.mxu0 0.0
        %857 = vmatpush1.msra.mxu0 0.0
        %858 = vmatprep.subr.mxu0 0.0
        %859 = vmatpush1.msra.mxu0 0.0
        %860 = vmatprep.subr.mxu0 0.0
        %861 = vmatpush1.msra.mxu0 0.0
        %862 = vmatprep.subr.mxu0 0.0
        %863 = vmatpush1.msra.mxu0 0.0
        %864 = vmatprep.subr.mxu0 0.0
        %865 = vmatpush1.msra.mxu0 0.0
        %866 = vmatprep.subr.mxu0 0.0
        %867 = vmatpush1.msra.mxu0 0.0
        %868 = vmatprep.subr.mxu0 0.0
        %869 = vmatpush1.msra.mxu0 0.0
        %870 = vmatprep.subr.mxu0 0.0
        %871 = vmatpush1.msra.mxu0 0.0
        %872 = vmatprep.subr.mxu0 0.0
        %873 = vmatpush1.msra.mxu0 0.0
        %874 = vmatprep.subr.mxu0 0.0
        %875 = vmatpush1.msra.mxu0 0.0
        %876 = vmatprep.subr.mxu0 0.0
        %877 = vmatpush1.msra.mxu0 0.0
        %878 = vmatprep.subr.mxu0 0.0
        %879 = vmatpush1.msra.mxu0 0.0
        %880 = vmatprep.subr.mxu0 0.0
        %881 = vmatpush1.msra.mxu0 0.0
        %882 = vmatprep.subr.mxu0 0.0
        %883 = vmatpush1.msra.mxu0 0.0
        %884 = vmatprep.subr.mxu0 0.0
        %885 = vmatpush1.msra.mxu0 0.0
        %886 = vmatprep.subr.mxu0 0.0
        %887 = vmatpush1.msra.mxu0 0.0
        %888 = vmatprep.subr.mxu0 0.0
        %889 = vmatpush1.msra.mxu0 0.0
        %890 = vmatprep.subr.mxu0 0.0
        %891 = vmatpush1.msra.mxu0 0.0
        %892 = vmatprep.subr.mxu0 0.0
        %893 = vmatpush1.msra.mxu0 0.0
        %894 = vmatprep.subr.mxu0 0.0
        %895 = vmatpush1.msra.mxu0 0.0
        %896 = vmatprep.subr.mxu0 0.0
        %897 = vmatpush1.msra.mxu0 0.0
        %898 = vmatprep.subr.mxu0 0.0
        %899 = vmatpush1.msra.mxu0 0.0
        %900 = vmatprep.subr.mxu0 0.0
        %901 = vmatpush1.msra.mxu0 0.0
        %902 = vmatprep.subr.mxu0 0.0
        %903 = vmatpush1.msra.mxu0 0.0
        %904 = vmatprep.subr.mxu0 0.0
        %905 = vmatpush1.msra.mxu0 0.0
        %906 = vmatprep.subr.mxu0 0.0
        %907 = vmatpush1.msra.mxu0 0.0
        %908 = vmatprep.subr.mxu0 0.0
        %909 = vmatpush1.msra.mxu0 0.0
        %910 = vmatprep.subr.mxu0 0.0
        %911 = vmatpush1.msra.mxu0 0.0
        %912 = vmatprep.subr.mxu0 0.0
        %913 = vmatpush1.msra.mxu0 0.0
        %914 = vmatprep.subr.mxu0 0.0
        %915 = vmatpush1.msra.mxu0 0.0
        %916 = vmatprep.mubr.f32.mxu0 0.0
        %917 = vmatmul.mubr.f32.gmra.mrb[0].mxu0 %v850
        %v918 = vpop.f32.mrb[0].mxu0
        %v919 = vadd.f32 0.0, %v918
        %v920 = vpop.f32.mrb[0].mxu0
        %921 = vdwg.mxu0
        %v922 = vsel %vm705, %v556, 0
        %924 = vmatprep.subr.mxu0 0.0
        %925 = vmatpush1.msra.mxu0 %v689
        %926 = vmatprep.subr.mxu0 0.0
        %927 = vmatpush1.msra.mxu0 0.0
        %928 = vmatprep.subr.mxu0 0.0
        %929 = vmatpush1.msra.mxu0 0.0
        %930 = vmatprep.subr.mxu0 0.0
        %931 = vmatpush1.msra.mxu0 0.0
        %932 = vmatprep.subr.mxu0 0.0
        %933 = vmatpush1.msra.mxu0 0.0
        %934 = vmatprep.subr.mxu0 0.0
        %935 = vmatpush1.msra.mxu0 0.0
        %936 = vmatprep.subr.mxu0 0.0
        %937 = vmatpush1.msra.mxu0 0.0
        %938 = vmatprep.subr.mxu0 0.0
        %939 = vmatpush1.msra.mxu0 0.0
        %940 = vmatprep.subr.mxu0 0.0
        %941 = vmatpush1.msra.mxu0 0.0
        %942 = vmatprep.subr.mxu0 0.0
        %943 = vmatpush1.msra.mxu0 0.0
        %944 = vmatprep.subr.mxu0 0.0
        %945 = vmatpush1.msra.mxu0 0.0
        %946 = vmatprep.subr.mxu0 0.0
        %947 = vmatpush1.msra.mxu0 0.0
        %948 = vmatprep.subr.mxu0 0.0
        %949 = vmatpush1.msra.mxu0 0.0
        %950 = vmatprep.subr.mxu0 0.0
        %951 = vmatpush1.msra.mxu0 0.0
        %952 = vmatprep.subr.mxu0 0.0
        %953 = vmatpush1.msra.mxu0 0.0
        %954 = vmatprep.subr.mxu0 0.0
        %955 = vmatpush1.msra.mxu0 0.0
        %956 = vmatprep.subr.mxu0 0.0
        %957 = vmatpush1.msra.mxu0 0.0
        %958 = vmatprep.subr.mxu0 0.0
        %959 = vmatpush1.msra.mxu0 0.0
        %960 = vmatprep.subr.mxu0 0.0
        %961 = vmatpush1.msra.mxu0 0.0
        %962 = vmatprep.subr.mxu0 0.0
        %963 = vmatpush1.msra.mxu0 0.0
        %964 = vmatprep.subr.mxu0 0.0
        %965 = vmatpush1.msra.mxu0 0.0
        %966 = vmatprep.subr.mxu0 0.0
        %967 = vmatpush1.msra.mxu0 0.0
        %968 = vmatprep.subr.mxu0 0.0
        %969 = vmatpush1.msra.mxu0 0.0
        %970 = vmatprep.subr.mxu0 0.0
        %971 = vmatpush1.msra.mxu0 0.0
        %972 = vmatprep.subr.mxu0 0.0
        %973 = vmatpush1.msra.mxu0 0.0
        %974 = vmatprep.subr.mxu0 0.0
        %975 = vmatpush1.msra.mxu0 0.0
        %976 = vmatprep.subr.mxu0 0.0
        %977 = vmatpush1.msra.mxu0 0.0
        %978 = vmatprep.subr.mxu0 0.0
        %979 = vmatpush1.msra.mxu0 0.0
        %980 = vmatprep.subr.mxu0 0.0
        %981 = vmatpush1.msra.mxu0 0.0
        %982 = vmatprep.subr.mxu0 0.0
        %983 = vmatpush1.msra.mxu0 0.0
        %984 = vmatprep.subr.mxu0 0.0
        %985 = vmatpush1.msra.mxu0 0.0
        %986 = vmatprep.subr.mxu0 0.0
        %987 = vmatpush1.msra.mxu0 0.0
        %988 = vmatprep.mubr.f32.mxu0 0.0
        %989 = vmatmul.mubr.f32.gmra.mrb[0].mxu0 %v922
        %v990 = vpop.f32.mrb[0].mxu0
        %v991 = vadd.f32 0.0, %v990
        %v992 = vpop.f32.mrb[0].mxu0
        %993 = vdwg.mxu0
        %vm994 = vcmask 130048
        %v995 = vsel %vm994, %v775, -inf
        %996 = vmax.xlane.f32.xlu0 %v995
        %v997 = vpop.xlane.xlu0 %996
        %v998 = vsel %vm994, %v847, -inf
        %999 = vmax.xlane.f32.xlu0 %v998
        %v1000 = vpop.xlane.xlu0 %999
        %v1001 = vsel %vm994, %v919, -inf
        %1002 = vmax.xlane.f32.xlu0 %v1001
        %v1003 = vpop.xlane.xlu0 %1002
        %v1004 = vsel %vm994, %v991, -inf
        %1005 = vmax.xlane.f32.xlu0 %v1004
        %v1006 = vpop.xlane.xlu0 %1005
        %v1007 = vsub.f32 %v775, %v997
        %v1008 = vsub.f32 %v847, %v1000
        %v1009 = vsub.f32 %v919, %v1003
        %v1010 = vsub.f32 %v991, %v1006
        %v1011 = vmul.f32 %v1007, 1.442695
        %v1012 = vpow.pop %v1011
        %v1013 = vmul.f32 %v1008, 1.442695
        %v1014 = vpow.pop %v1013
        %v1015 = vmul.f32 %v1009, 1.442695
        %v1016 = vpow.pop %v1015
        %v1017 = vmul.f32 %v1010, 1.442695
        %v1018 = vpow.pop %v1017
        %v1019 = vsel %vm994, %v1012, 0.0
        %1020 = vadd.xlane.f32.xlu0 %v1019
        %v1021 = vpop.xlane.xlu0 %1020
        %v1022 = vsel %vm994, %v1014, 0.0
        %1023 = vadd.xlane.f32.xlu0 %v1022
        %v1024 = vpop.xlane.xlu0 %1023
        %v1025 = vsel %vm994, %v1016, 0.0
        %1026 = vadd.xlane.f32.xlu0 %v1025
        %v1027 = vpop.xlane.xlu0 %1026
        %v1028 = vsel %vm994, %v1018, 0.0
        %1029 = vadd.xlane.f32.xlu0 %v1028
        %v1030 = vpop.xlane.xlu0 %1029
        %1031 = vrot.lane.b32.xlu0 %v542, 96
        %v1032 = vpop.permute.xlu0 %1031
        %1033 = vrot.lane.b32.xlu0 %v547, 96
        %v1034 = vpop.permute.xlu0 %1033
        %1035 = vrot.lane.b32.xlu0 %v560, 96
        %v1036 = vpop.permute.xlu0 %1035
        %1037 = vrot.lane.b32.xlu0 %v562, 96
        %v1038 = vpop.permute.xlu0 %1037
        %1039 = vrot.lane.b32.xlu0 %v566, 96
        %v1040 = vpop.permute.xlu0 %1039
        %1041 = vrot.lane.b32.xlu0 %v568, 96
        %v1042 = vpop.permute.xlu0 %1041
        %1043 = vrot.lane.b32.xlu0 %v572, 96
        %v1044 = vpop.permute.xlu0 %1043
        %1045 = vrot.lane.b32.xlu0 %v574, 96
        %v1046 = vpop.permute.xlu0 %1045
        %1055 = vxpose.xlu0.b32.start [1/16] %v1032, 128
        %1056 = vxpose.xlu0.b32.cont [2/16] %v1034, 128
        %1057 = vxpose.xlu0.b32.cont [3/16] 0.0, 128
        %1058 = vxpose.xlu0.b32.cont [4/16] 0.0, 128
        %1059 = vxpose.xlu0.b32.cont [5/16] 0.0, 128
        %1060 = vxpose.xlu0.b32.cont [6/16] 0.0, 128
        %1061 = vxpose.xlu0.b32.cont [7/16] 0.0, 128
        %1062 = vxpose.xlu0.b32.cont [8/16] 0.0, 128
        %1063 = vxpose.xlu0.b32.cont [9/16] 0.0, 128
        %1064 = vxpose.xlu0.b32.cont [10/16] 0.0, 128
        %1065 = vxpose.xlu0.b32.cont [11/16] 0.0, 128
        %1066 = vxpose.xlu0.b32.cont [12/16] 0.0, 128
        %1067 = vxpose.xlu0.b32.cont [13/16] 0.0, 128
        %1068 = vxpose.xlu0.b32.cont [14/16] 0.0, 128
        %1069 = vxpose.xlu0.b32.cont [15/16] 0.0, 128
        %1070 = vxpose.xlu0.b32.end [16/16] 0.0, 128
        %v1071 = vpop.trf.xlu0
        %v1072 = vpop.trf.xlu0
        %v1073 = vpop.trf.xlu0
        %v1074 = vpop.trf.xlu0
        %v1075 = vpop.trf.xlu0
        %v1076 = vpop.trf.xlu0
        %v1077 = vpop.trf.xlu0
        %v1078 = vpop.trf.xlu0
        %v1079 = vpop.trf.xlu0
        %v1080 = vpop.trf.xlu0
        %v1081 = vpop.trf.xlu0
        %v1082 = vpop.trf.xlu0
        %v1083 = vpop.trf.xlu0
        %v1084 = vpop.trf.xlu0
        %v1085 = vpop.trf.xlu0
        %v1086 = vpop.trf.xlu0
        %1087 = vxpose.xlu0.b32.start [1/16] %v1036, 128
        %1088 = vxpose.xlu0.b32.cont [2/16] %v1038, 128
        %1089 = vxpose.xlu0.b32.cont [3/16] 0.0, 128
        %1090 = vxpose.xlu0.b32.cont [4/16] 0.0, 128
        %1091 = vxpose.xlu0.b32.cont [5/16] 0.0, 128
        %1092 = vxpose.xlu0.b32.cont [6/16] 0.0, 128
        %1093 = vxpose.xlu0.b32.cont [7/16] 0.0, 128
        %1094 = vxpose.xlu0.b32.cont [8/16] 0.0, 128
        %1095 = vxpose.xlu0.b32.cont [9/16] 0.0, 128
        %1096 = vxpose.xlu0.b32.cont [10/16] 0.0, 128
        %1097 = vxpose.xlu0.b32.cont [11/16] 0.0, 128
        %1098 = vxpose.xlu0.b32.cont [12/16] 0.0, 128
        %1099 = vxpose.xlu0.b32.cont [13/16] 0.0, 128
        %1100 = vxpose.xlu0.b32.cont [14/16] 0.0, 128
        %1101 = vxpose.xlu0.b32.cont [15/16] 0.0, 128
        %1102 = vxpose.xlu0.b32.end [16/16] 0.0, 128
        %v1103 = vpop.trf.xlu0
        %v1104 = vpop.trf.xlu0
        %v1105 = vpop.trf.xlu0
        %v1106 = vpop.trf.xlu0
        %v1107 = vpop.trf.xlu0
        %v1108 = vpop.trf.xlu0
        %v1109 = vpop.trf.xlu0
        %v1110 = vpop.trf.xlu0
        %v1111 = vpop.trf.xlu0
        %v1112 = vpop.trf.xlu0
        %v1113 = vpop.trf.xlu0
        %v1114 = vpop.trf.xlu0
        %v1115 = vpop.trf.xlu0
        %v1116 = vpop.trf.xlu0
        %v1117 = vpop.trf.xlu0
        %v1118 = vpop.trf.xlu0
        %1119 = vxpose.xlu0.b32.start [1/16] %v1040, 128
        %1120 = vxpose.xlu0.b32.cont [2/16] %v1042, 128
        %1121 = vxpose.xlu0.b32.cont [3/16] 0.0, 128
        %1122 = vxpose.xlu0.b32.cont [4/16] 0.0, 128
        %1123 = vxpose.xlu0.b32.cont [5/16] 0.0, 128
        %1124 = vxpose.xlu0.b32.cont [6/16] 0.0, 128
        %1125 = vxpose.xlu0.b32.cont [7/16] 0.0, 128
        %1126 = vxpose.xlu0.b32.cont [8/16] 0.0, 128
        %1127 = vxpose.xlu0.b32.cont [9/16] 0.0, 128
        %1128 = vxpose.xlu0.b32.cont [10/16] 0.0, 128
        %1129 = vxpose.xlu0.b32.cont [11/16] 0.0, 128
        %1130 = vxpose.xlu0.b32.cont [12/16] 0.0, 128
        %1131 = vxpose.xlu0.b32.cont [13/16] 0.0, 128
        %1132 = vxpose.xlu0.b32.cont [14/16] 0.0, 128
        %1133 = vxpose.xlu0.b32.cont [15/16] 0.0, 128
        %1134 = vxpose.xlu0.b32.end [16/16] 0.0, 128
        %v1135 = vpop.trf.xlu0
        %v1136 = vpop.trf.xlu0
        %v1137 = vpop.trf.xlu0
        %v1138 = vpop.trf.xlu0
        %v1139 = vpop.trf.xlu0
        %v1140 = vpop.trf.xlu0
        %v1141 = vpop.trf.xlu0
        %v1142 = vpop.trf.xlu0
        %v1143 = vpop.trf.xlu0
        %v1144 = vpop.trf.xlu0
        %v1145 = vpop.trf.xlu0
        %v1146 = vpop.trf.xlu0
        %v1147 = vpop.trf.xlu0
        %v1148 = vpop.trf.xlu0
        %v1149 = vpop.trf.xlu0
        %v1150 = vpop.trf.xlu0
        %1151 = vxpose.xlu0.b32.start [1/16] %v1044, 128
        %1152 = vxpose.xlu0.b32.cont [2/16] %v1046, 128
        %1153 = vxpose.xlu0.b32.cont [3/16] 0.0, 128
        %1154 = vxpose.xlu0.b32.cont [4/16] 0.0, 128
        %1155 = vxpose.xlu0.b32.cont [5/16] 0.0, 128
        %1156 = vxpose.xlu0.b32.cont [6/16] 0.0, 128
        %1157 = vxpose.xlu0.b32.cont [7/16] 0.0, 128
        %1158 = vxpose.xlu0.b32.cont [8/16] 0.0, 128
        %1159 = vxpose.xlu0.b32.cont [9/16] 0.0, 128
        %1160 = vxpose.xlu0.b32.cont [10/16] 0.0, 128
        %1161 = vxpose.xlu0.b32.cont [11/16] 0.0, 128
        %1162 = vxpose.xlu0.b32.cont [12/16] 0.0, 128
        %1163 = vxpose.xlu0.b32.cont [13/16] 0.0, 128
        %1164 = vxpose.xlu0.b32.cont [14/16] 0.0, 128
        %1165 = vxpose.xlu0.b32.cont [15/16] 0.0, 128
        %1166 = vxpose.xlu0.b32.end [16/16] 0.0, 128
        %v1167 = vpop.trf.xlu0
        %v1168 = vpop.trf.xlu0
        %v1169 = vpop.trf.xlu0
        %v1170 = vpop.trf.xlu0
        %v1171 = vpop.trf.xlu0
        %v1172 = vpop.trf.xlu0
        %v1173 = vpop.trf.xlu0
        %v1174 = vpop.trf.xlu0
        %v1175 = vpop.trf.xlu0
        %v1176 = vpop.trf.xlu0
        %v1177 = vpop.trf.xlu0
        %v1178 = vpop.trf.xlu0
        %v1179 = vpop.trf.xlu0
        %v1180 = vpop.trf.xlu0
        %v1181 = vpop.trf.xlu0
        %v1182 = vpop.trf.xlu0
        %v1184 = vsel %vm994, %v1071, 0
        %v1187 = vsel %vm994, %v1012, 0
        %1189 = vmatprep.subr.mxu0 0.0
        %1190 = vmatpush1.xpose.msra.mxu0 %v1187
        %1191 = vmatprep.subr.mxu0 0.0
        %1192 = vmatpush1.xpose.msra.mxu0 0.0
        %1193 = vmatprep.subr.mxu0 0.0
        %1194 = vmatpush1.xpose.msra.mxu0 0.0
        %1195 = vmatprep.subr.mxu0 0.0
        %1196 = vmatpush1.xpose.msra.mxu0 0.0
        %1197 = vmatprep.subr.mxu0 0.0
        %1198 = vmatpush1.xpose.msra.mxu0 0.0
        %1199 = vmatprep.subr.mxu0 0.0
        %1200 = vmatpush1.xpose.msra.mxu0 0.0
        %1201 = vmatprep.subr.mxu0 0.0
        %1202 = vmatpush1.xpose.msra.mxu0 0.0
        %1203 = vmatprep.subr.mxu0 0.0
        %1204 = vmatpush1.xpose.msra.mxu0 0.0
        %1205 = vmatprep.subr.mxu0 0.0
        %1206 = vmatpush1.xpose.msra.mxu0 0.0
        %1207 = vmatprep.subr.mxu0 0.0
        %1208 = vmatpush1.xpose.msra.mxu0 0.0
        %1209 = vmatprep.subr.mxu0 0.0
        %1210 = vmatpush1.xpose.msra.mxu0 0.0
        %1211 = vmatprep.subr.mxu0 0.0
        %1212 = vmatpush1.xpose.msra.mxu0 0.0
        %1213 = vmatprep.subr.mxu0 0.0
        %1214 = vmatpush1.xpose.msra.mxu0 0.0
        %1215 = vmatprep.subr.mxu0 0.0
        %1216 = vmatpush1.xpose.msra.mxu0 0.0
        %1217 = vmatprep.subr.mxu0 0.0
        %1218 = vmatpush1.xpose.msra.mxu0 0.0
        %1219 = vmatprep.subr.mxu0 0.0
        %1220 = vmatpush1.xpose.msra.mxu0 0.0
        %1221 = vmatprep.subr.mxu0 0.0
        %1222 = vmatpush1.xpose.msra.mxu0 0.0
        %1223 = vmatprep.subr.mxu0 0.0
        %1224 = vmatpush1.xpose.msra.mxu0 0.0
        %1225 = vmatprep.subr.mxu0 0.0
        %1226 = vmatpush1.xpose.msra.mxu0 0.0
        %1227 = vmatprep.subr.mxu0 0.0
        %1228 = vmatpush1.xpose.msra.mxu0 0.0
        %1229 = vmatprep.subr.mxu0 0.0
        %1230 = vmatpush1.xpose.msra.mxu0 0.0
        %1231 = vmatprep.subr.mxu0 0.0
        %1232 = vmatpush1.xpose.msra.mxu0 0.0
        %1233 = vmatprep.subr.mxu0 0.0
        %1234 = vmatpush1.xpose.msra.mxu0 0.0
        %1235 = vmatprep.subr.mxu0 0.0
        %1236 = vmatpush1.xpose.msra.mxu0 0.0
        %1237 = vmatprep.subr.mxu0 0.0
        %1238 = vmatpush1.xpose.msra.mxu0 0.0
        %1239 = vmatprep.subr.mxu0 0.0
        %1240 = vmatpush1.xpose.msra.mxu0 0.0
        %1241 = vmatprep.subr.mxu0 0.0
        %1242 = vmatpush1.xpose.msra.mxu0 0.0
        %1243 = vmatprep.subr.mxu0 0.0
        %1244 = vmatpush1.xpose.msra.mxu0 0.0
        %1245 = vmatprep.subr.mxu0 0.0
        %1246 = vmatpush1.xpose.msra.mxu0 0.0
        %1247 = vmatprep.subr.mxu0 0.0
        %1248 = vmatpush1.xpose.msra.mxu0 0.0
        %1249 = vmatprep.subr.mxu0 0.0
        %1250 = vmatpush1.xpose.msra.mxu0 0.0
        %1251 = vmatprep.subr.mxu0 0.0
        %1252 = vmatpush1.xpose.msra.mxu0 0.0
        %1253 = vmatprep.mubr.f32.mxu0 0.0
        %1254 = vmatmul.mubr.f32.gmra.mrb[0].mxu0 %v1184
        %v1255 = vpop.f32.mrb[0].mxu0
        %v1256 = vadd.f32 0.0, %v1255
        %v1257 = vpop.f32.mrb[0].mxu0
        %1258 = vdwg.mxu0
        %v1260 = vsel %vm994, %v1103, 0
        %v1263 = vsel %vm994, %v1014, 0
        %1265 = vmatprep.subr.mxu0 0.0
        %1266 = vmatpush1.xpose.msra.mxu0 %v1263
        %1267 = vmatprep.subr.mxu0 0.0
        %1268 = vmatpush1.xpose.msra.mxu0 0.0
        %1269 = vmatprep.subr.mxu0 0.0
        %1270 = vmatpush1.xpose.msra.mxu0 0.0
        %1271 = vmatprep.subr.mxu0 0.0
        %1272 = vmatpush1.xpose.msra.mxu0 0.0
        %1273 = vmatprep.subr.mxu0 0.0
        %1274 = vmatpush1.xpose.msra.mxu0 0.0
        %1275 = vmatprep.subr.mxu0 0.0
        %1276 = vmatpush1.xpose.msra.mxu0 0.0
        %1277 = vmatprep.subr.mxu0 0.0
        %1278 = vmatpush1.xpose.msra.mxu0 0.0
        %1279 = vmatprep.subr.mxu0 0.0
        %1280 = vmatpush1.xpose.msra.mxu0 0.0
        %1281 = vmatprep.subr.mxu0 0.0
        %1282 = vmatpush1.xpose.msra.mxu0 0.0
        %1283 = vmatprep.subr.mxu0 0.0
        %1284 = vmatpush1.xpose.msra.mxu0 0.0
        %1285 = vmatprep.subr.mxu0 0.0
        %1286 = vmatpush1.xpose.msra.mxu0 0.0
        %1287 = vmatprep.subr.mxu0 0.0
        %1288 = vmatpush1.xpose.msra.mxu0 0.0
        %1289 = vmatprep.subr.mxu0 0.0
        %1290 = vmatpush1.xpose.msra.mxu0 0.0
        %1291 = vmatprep.subr.mxu0 0.0
        %1292 = vmatpush1.xpose.msra.mxu0 0.0
        %1293 = vmatprep.subr.mxu0 0.0
        %1294 = vmatpush1.xpose.msra.mxu0 0.0
        %1295 = vmatprep.subr.mxu0 0.0
        %1296 = vmatpush1.xpose.msra.mxu0 0.0
        %1297 = vmatprep.subr.mxu0 0.0
        %1298 = vmatpush1.xpose.msra.mxu0 0.0
        %1299 = vmatprep.subr.mxu0 0.0
        %1300 = vmatpush1.xpose.msra.mxu0 0.0
        %1301 = vmatprep.subr.mxu0 0.0
        %1302 = vmatpush1.xpose.msra.mxu0 0.0
        %1303 = vmatprep.subr.mxu0 0.0
        %1304 = vmatpush1.xpose.msra.mxu0 0.0
        %1305 = vmatprep.subr.mxu0 0.0
        %1306 = vmatpush1.xpose.msra.mxu0 0.0
        %1307 = vmatprep.subr.mxu0 0.0
        %1308 = vmatpush1.xpose.msra.mxu0 0.0
        %1309 = vmatprep.subr.mxu0 0.0
        %1310 = vmatpush1.xpose.msra.mxu0 0.0
        %1311 = vmatprep.subr.mxu0 0.0
        %1312 = vmatpush1.xpose.msra.mxu0 0.0
        %1313 = vmatprep.subr.mxu0 0.0
        %1314 = vmatpush1.xpose.msra.mxu0 0.0
        %1315 = vmatprep.subr.mxu0 0.0
        %1316 = vmatpush1.xpose.msra.mxu0 0.0
        %1317 = vmatprep.subr.mxu0 0.0
        %1318 = vmatpush1.xpose.msra.mxu0 0.0
        %1319 = vmatprep.subr.mxu0 0.0
        %1320 = vmatpush1.xpose.msra.mxu0 0.0
        %1321 = vmatprep.subr.mxu0 0.0
        %1322 = vmatpush1.xpose.msra.mxu0 0.0
        %1323 = vmatprep.subr.mxu0 0.0
        %1324 = vmatpush1.xpose.msra.mxu0 0.0
        %1325 = vmatprep.subr.mxu0 0.0
        %1326 = vmatpush1.xpose.msra.mxu0 0.0
        %1327 = vmatprep.subr.mxu0 0.0
        %1328 = vmatpush1.xpose.msra.mxu0 0.0
        %1329 = vmatprep.mubr.f32.mxu0 0.0
        %1330 = vmatmul.mubr.f32.gmra.mrb[0].mxu0 %v1260
        %v1331 = vpop.f32.mrb[0].mxu0
        %v1332 = vadd.f32 0.0, %v1331
        %v1333 = vpop.f32.mrb[0].mxu0
        %1334 = vdwg.mxu0
        %v1336 = vsel %vm994, %v1135, 0
        %v1339 = vsel %vm994, %v1016, 0
        %1341 = vmatprep.subr.mxu0 0.0
        %1342 = vmatpush1.xpose.msra.mxu0 %v1339
        %1343 = vmatprep.subr.mxu0 0.0
        %1344 = vmatpush1.xpose.msra.mxu0 0.0
        %1345 = vmatprep.subr.mxu0 0.0
        %1346 = vmatpush1.xpose.msra.mxu0 0.0
        %1347 = vmatprep.subr.mxu0 0.0
        %1348 = vmatpush1.xpose.msra.mxu0 0.0
        %1349 = vmatprep.subr.mxu0 0.0
        %1350 = vmatpush1.xpose.msra.mxu0 0.0
        %1351 = vmatprep.subr.mxu0 0.0
        %1352 = vmatpush1.xpose.msra.mxu0 0.0
        %1353 = vmatprep.subr.mxu0 0.0
        %1354 = vmatpush1.xpose.msra.mxu0 0.0
        %1355 = vmatprep.subr.mxu0 0.0
        %1356 = vmatpush1.xpose.msra.mxu0 0.0
        %1357 = vmatprep.subr.mxu0 0.0
        %1358 = vmatpush1.xpose.msra.mxu0 0.0
        %1359 = vmatprep.subr.mxu0 0.0
        %1360 = vmatpush1.xpose.msra.mxu0 0.0
        %1361 = vmatprep.subr.mxu0 0.0
        %1362 = vmatpush1.xpose.msra.mxu0 0.0
        %1363 = vmatprep.subr.mxu0 0.0
        %1364 = vmatpush1.xpose.msra.mxu0 0.0
        %1365 = vmatprep.subr.mxu0 0.0
        %1366 = vmatpush1.xpose.msra.mxu0 0.0
        %1367 = vmatprep.subr.mxu0 0.0
        %1368 = vmatpush1.xpose.msra.mxu0 0.0
        %1369 = vmatprep.subr.mxu0 0.0
        %1370 = vmatpush1.xpose.msra.mxu0 0.0
        %1371 = vmatprep.subr.mxu0 0.0
        %1372 = vmatpush1.xpose.msra.mxu0 0.0
        %1373 = vmatprep.subr.mxu0 0.0
        %1374 = vmatpush1.xpose.msra.mxu0 0.0
        %1375 = vmatprep.subr.mxu0 0.0
        %1376 = vmatpush1.xpose.msra.mxu0 0.0
        %1377 = vmatprep.subr.mxu0 0.0
        %1378 = vmatpush1.xpose.msra.mxu0 0.0
        %1379 = vmatprep.subr.mxu0 0.0
        %1380 = vmatpush1.xpose.msra.mxu0 0.0
        %1381 = vmatprep.subr.mxu0 0.0
        %1382 = vmatpush1.xpose.msra.mxu0 0.0
        %1383 = vmatprep.subr.mxu0 0.0
        %1384 = vmatpush1.xpose.msra.mxu0 0.0
        %1385 = vmatprep.subr.mxu0 0.0
        %1386 = vmatpush1.xpose.msra.mxu0 0.0
        %1387 = vmatprep.subr.mxu0 0.0
        %1388 = vmatpush1.xpose.msra.mxu0 0.0
        %1389 = vmatprep.subr.mxu0 0.0
        %1390 = vmatpush1.xpose.msra.mxu0 0.0
        %1391 = vmatprep.subr.mxu0 0.0
        %1392 = vmatpush1.xpose.msra.mxu0 0.0
        %1393 = vmatprep.subr.mxu0 0.0
        %1394 = vmatpush1.xpose.msra.mxu0 0.0
        %1395 = vmatprep.subr.mxu0 0.0
        %1396 = vmatpush1.xpose.msra.mxu0 0.0
        %1397 = vmatprep.subr.mxu0 0.0
        %1398 = vmatpush1.xpose.msra.mxu0 0.0
        %1399 = vmatprep.subr.mxu0 0.0
        %1400 = vmatpush1.xpose.msra.mxu0 0.0
        %1401 = vmatprep.subr.mxu0 0.0
        %1402 = vmatpush1.xpose.msra.mxu0 0.0
        %1403 = vmatprep.subr.mxu0 0.0
        %1404 = vmatpush1.xpose.msra.mxu0 0.0
        %1405 = vmatprep.mubr.f32.mxu0 0.0
        %1406 = vmatmul.mubr.f32.gmra.mrb[0].mxu0 %v1336
        %v1407 = vpop.f32.mrb[0].mxu0
        %v1408 = vadd.f32 0.0, %v1407
        %v1409 = vpop.f32.mrb[0].mxu0
        %1410 = vdwg.mxu0
        %v1412 = vsel %vm994, %v1167, 0
        %v1415 = vsel %vm994, %v1018, 0
        %1417 = vmatprep.subr.mxu0 0.0
        %1418 = vmatpush1.xpose.msra.mxu0 %v1415
        %1419 = vmatprep.subr.mxu0 0.0
        %1420 = vmatpush1.xpose.msra.mxu0 0.0
        %1421 = vmatprep.subr.mxu0 0.0
        %1422 = vmatpush1.xpose.msra.mxu0 0.0
        %1423 = vmatprep.subr.mxu0 0.0
        %1424 = vmatpush1.xpose.msra.mxu0 0.0
        %1425 = vmatprep.subr.mxu0 0.0
        %1426 = vmatpush1.xpose.msra.mxu0 0.0
        %1427 = vmatprep.subr.mxu0 0.0
        %1428 = vmatpush1.xpose.msra.mxu0 0.0
        %1429 = vmatprep.subr.mxu0 0.0
        %1430 = vmatpush1.xpose.msra.mxu0 0.0
        %1431 = vmatprep.subr.mxu0 0.0
        %1432 = vmatpush1.xpose.msra.mxu0 0.0
        %1433 = vmatprep.subr.mxu0 0.0
        %1434 = vmatpush1.xpose.msra.mxu0 0.0
        %1435 = vmatprep.subr.mxu0 0.0
        %1436 = vmatpush1.xpose.msra.mxu0 0.0
        %1437 = vmatprep.subr.mxu0 0.0
        %1438 = vmatpush1.xpose.msra.mxu0 0.0
        %1439 = vmatprep.subr.mxu0 0.0
        %1440 = vmatpush1.xpose.msra.mxu0 0.0
        %1441 = vmatprep.subr.mxu0 0.0
        %1442 = vmatpush1.xpose.msra.mxu0 0.0
        %1443 = vmatprep.subr.mxu0 0.0
        %1444 = vmatpush1.xpose.msra.mxu0 0.0
        %1445 = vmatprep.subr.mxu0 0.0
        %1446 = vmatpush1.xpose.msra.mxu0 0.0
        %1447 = vmatprep.subr.mxu0 0.0
        %1448 = vmatpush1.xpose.msra.mxu0 0.0
        %1449 = vmatprep.subr.mxu0 0.0
        %1450 = vmatpush1.xpose.msra.mxu0 0.0
        %1451 = vmatprep.subr.mxu0 0.0
        %1452 = vmatpush1.xpose.msra.mxu0 0.0
        %1453 = vmatprep.subr.mxu0 0.0
        %1454 = vmatpush1.xpose.msra.mxu0 0.0
        %1455 = vmatprep.subr.mxu0 0.0
        %1456 = vmatpush1.xpose.msra.mxu0 0.0
        %1457 = vmatprep.subr.mxu0 0.0
        %1458 = vmatpush1.xpose.msra.mxu0 0.0
        %1459 = vmatprep.subr.mxu0 0.0
        %1460 = vmatpush1.xpose.msra.mxu0 0.0
        %1461 = vmatprep.subr.mxu0 0.0
        %1462 = vmatpush1.xpose.msra.mxu0 0.0
        %1463 = vmatprep.subr.mxu0 0.0
        %1464 = vmatpush1.xpose.msra.mxu0 0.0
        %1465 = vmatprep.subr.mxu0 0.0
        %1466 = vmatpush1.xpose.msra.mxu0 0.0
        %1467 = vmatprep.subr.mxu0 0.0
        %1468 = vmatpush1.xpose.msra.mxu0 0.0
        %1469 = vmatprep.subr.mxu0 0.0
        %1470 = vmatpush1.xpose.msra.mxu0 0.0
        %1471 = vmatprep.subr.mxu0 0.0
        %1472 = vmatpush1.xpose.msra.mxu0 0.0
        %1473 = vmatprep.subr.mxu0 0.0
        %1474 = vmatpush1.xpose.msra.mxu0 0.0
        %1475 = vmatprep.subr.mxu0 0.0
        %1476 = vmatpush1.xpose.msra.mxu0 0.0
        %1477 = vmatprep.subr.mxu0 0.0
        %1478 = vmatpush1.xpose.msra.mxu0 0.0
        %1479 = vmatprep.subr.mxu0 0.0
        %1480 = vmatpush1.xpose.msra.mxu0 0.0
        %1481 = vmatprep.mubr.f32.mxu0 0.0
        %1482 = vmatmul.mubr.f32.gmra.mrb[0].mxu0 %v1412
        %v1483 = vpop.f32.mrb[0].mxu0
        %v1484 = vadd.f32 0.0, %v1483
        %v1485 = vpop.f32.mrb[0].mxu0
        %1486 = vdwg.mxu0
        %1487 = vxpose.xlu0.b32.start [1/16] %v1256, 128
        %1488 = vxpose.xlu0.b32.cont [2/16] 0.0, 128
        %1489 = vxpose.xlu0.b32.cont [3/16] 0.0, 128
        %1490 = vxpose.xlu0.b32.cont [4/16] 0.0, 128
        %1491 = vxpose.xlu0.b32.cont [5/16] 0.0, 128
        %1492 = vxpose.xlu0.b32.cont [6/16] 0.0, 128
        %1493 = vxpose.xlu0.b32.cont [7/16] 0.0, 128
        %1494 = vxpose.xlu0.b32.cont [8/16] 0.0, 128
        %1495 = vxpose.xlu0.b32.cont [9/16] 0.0, 128
        %1496 = vxpose.xlu0.b32.cont [10/16] 0.0, 128
        %1497 = vxpose.xlu0.b32.cont [11/16] 0.0, 128
        %1498 = vxpose.xlu0.b32.cont [12/16] 0.0, 128
        %1499 = vxpose.xlu0.b32.cont [13/16] 0.0, 128
        %1500 = vxpose.xlu0.b32.cont [14/16] 0.0, 128
        %1501 = vxpose.xlu0.b32.cont [15/16] 0.0, 128
        %1502 = vxpose.xlu0.b32.end [16/16] 0.0, 128
        %v1503 = vpop.trf.xlu0
        %v1504 = vpop.trf.xlu0
        %v1505 = vpop.trf.xlu0
        %v1506 = vpop.trf.xlu0
        %v1507 = vpop.trf.xlu0
        %v1508 = vpop.trf.xlu0
        %v1509 = vpop.trf.xlu0
        %v1510 = vpop.trf.xlu0
        %v1511 = vpop.trf.xlu0
        %v1512 = vpop.trf.xlu0
        %v1513 = vpop.trf.xlu0
        %v1514 = vpop.trf.xlu0
        %v1515 = vpop.trf.xlu0
        %v1516 = vpop.trf.xlu0
        %v1517 = vpop.trf.xlu0
        %v1518 = vpop.trf.xlu0
        %1519 = vxpose.xlu0.b32.start [1/16] %v1332, 128
        %1520 = vxpose.xlu0.b32.cont [2/16] 0.0, 128
        %1521 = vxpose.xlu0.b32.cont [3/16] 0.0, 128
        %1522 = vxpose.xlu0.b32.cont [4/16] 0.0, 128
        %1523 = vxpose.xlu0.b32.cont [5/16] 0.0, 128
        %1524 = vxpose.xlu0.b32.cont [6/16] 0.0, 128
        %1525 = vxpose.xlu0.b32.cont [7/16] 0.0, 128
        %1526 = vxpose.xlu0.b32.cont [8/16] 0.0, 128
        %1527 = vxpose.xlu0.b32.cont [9/16] 0.0, 128
        %1528 = vxpose.xlu0.b32.cont [10/16] 0.0, 128
        %1529 = vxpose.xlu0.b32.cont [11/16] 0.0, 128
        %1530 = vxpose.xlu0.b32.cont [12/16] 0.0, 128
        %1531 = vxpose.xlu0.b32.cont [13/16] 0.0, 128
        %1532 = vxpose.xlu0.b32.cont [14/16] 0.0, 128
        %1533 = vxpose.xlu0.b32.cont [15/16] 0.0, 128
        %1534 = vxpose.xlu0.b32.end [16/16] 0.0, 128
        %v1535 = vpop.trf.xlu0
        %v1536 = vpop.trf.xlu0
        %v1537 = vpop.trf.xlu0
        %v1538 = vpop.trf.xlu0
        %v1539 = vpop.trf.xlu0
        %v1540 = vpop.trf.xlu0
        %v1541 = vpop.trf.xlu0
        %v1542 = vpop.trf.xlu0
        %v1543 = vpop.trf.xlu0
        %v1544 = vpop.trf.xlu0
        %v1545 = vpop.trf.xlu0
        %v1546 = vpop.trf.xlu0
        %v1547 = vpop.trf.xlu0
        %v1548 = vpop.trf.xlu0
        %v1549 = vpop.trf.xlu0
        %v1550 = vpop.trf.xlu0
        %1551 = vxpose.xlu0.b32.start [1/16] %v1408, 128
        %1552 = vxpose.xlu0.b32.cont [2/16] 0.0, 128
        %1553 = vxpose.xlu0.b32.cont [3/16] 0.0, 128
        %1554 = vxpose.xlu0.b32.cont [4/16] 0.0, 128
        %1555 = vxpose.xlu0.b32.cont [5/16] 0.0, 128
        %1556 = vxpose.xlu0.b32.cont [6/16] 0.0, 128
        %1557 = vxpose.xlu0.b32.cont [7/16] 0.0, 128
        %1558 = vxpose.xlu0.b32.cont [8/16] 0.0, 128
        %1559 = vxpose.xlu0.b32.cont [9/16] 0.0, 128
        %1560 = vxpose.xlu0.b32.cont [10/16] 0.0, 128
        %1561 = vxpose.xlu0.b32.cont [11/16] 0.0, 128
        %1562 = vxpose.xlu0.b32.cont [12/16] 0.0, 128
        %1563 = vxpose.xlu0.b32.cont [13/16] 0.0, 128
        %1564 = vxpose.xlu0.b32.cont [14/16] 0.0, 128
        %1565 = vxpose.xlu0.b32.cont [15/16] 0.0, 128
        %1566 = vxpose.xlu0.b32.end [16/16] 0.0, 128
        %v1567 = vpop.trf.xlu0
        %v1568 = vpop.trf.xlu0
        %v1569 = vpop.trf.xlu0
        %v1570 = vpop.trf.xlu0
        %v1571 = vpop.trf.xlu0
        %v1572 = vpop.trf.xlu0
        %v1573 = vpop.trf.xlu0
        %v1574 = vpop.trf.xlu0
        %v1575 = vpop.trf.xlu0
        %v1576 = vpop.trf.xlu0
        %v1577 = vpop.trf.xlu0
        %v1578 = vpop.trf.xlu0
        %v1579 = vpop.trf.xlu0
        %v1580 = vpop.trf.xlu0
        %v1581 = vpop.trf.xlu0
        %v1582 = vpop.trf.xlu0
        %1583 = vxpose.xlu0.b32.start [1/16] %v1484, 128
        %1584 = vxpose.xlu0.b32.cont [2/16] 0.0, 128
        %1585 = vxpose.xlu0.b32.cont [3/16] 0.0, 128
        %1586 = vxpose.xlu0.b32.cont [4/16] 0.0, 128
        %1587 = vxpose.xlu0.b32.cont [5/16] 0.0, 128
        %1588 = vxpose.xlu0.b32.cont [6/16] 0.0, 128
        %1589 = vxpose.xlu0.b32.cont [7/16] 0.0, 128
        %1590 = vxpose.xlu0.b32.cont [8/16] 0.0, 128
        %1591 = vxpose.xlu0.b32.cont [9/16] 0.0, 128
        %1592 = vxpose.xlu0.b32.cont [10/16] 0.0, 128
        %1593 = vxpose.xlu0.b32.cont [11/16] 0.0, 128
        %1594 = vxpose.xlu0.b32.cont [12/16] 0.0, 128
        %1595 = vxpose.xlu0.b32.cont [13/16] 0.0, 128
        %1596 = vxpose.xlu0.b32.cont [14/16] 0.0, 128
        %1597 = vxpose.xlu0.b32.cont [15/16] 0.0, 128
        %1598 = vxpose.xlu0.b32.end [16/16] 0.0, 128
        %v1599 = vpop.trf.xlu0
        %v1600 = vpop.trf.xlu0
        %v1601 = vpop.trf.xlu0
        %v1602 = vpop.trf.xlu0
        %v1603 = vpop.trf.xlu0
        %v1604 = vpop.trf.xlu0
        %v1605 = vpop.trf.xlu0
        %v1606 = vpop.trf.xlu0
        %v1607 = vpop.trf.xlu0
        %v1608 = vpop.trf.xlu0
        %v1609 = vpop.trf.xlu0
        %v1610 = vpop.trf.xlu0
        %v1611 = vpop.trf.xlu0
        %v1612 = vpop.trf.xlu0
        %v1613 = vpop.trf.xlu0
        %v1614 = vpop.trf.xlu0
        %v1615 = vcombine.low %v1503, %v1567
        %v1616 = vcombine.high %v1503, %v1567
        %v1618 = vunpack.c.l.s4 1983009808
        %v1619 = vunpack.c.0.s8 %v1618
        %v1620 = vlaneseq
        %v1621 = vshrl.u32 %v1620, 7
        %v1622 = vsub.s32 %v1619, %v1621
        %v1623 = vrot.slane %v1615, %v1622
        %v1625 = vunpack.c.l.s4 1983009808
        %v1626 = vunpack.c.0.s8 %v1625
        %v1627 = vlaneseq
        %v1628 = vshrl.u32 %v1627, 7
        %v1629 = vsub.s32 %v1626, %v1628
        %v1630 = vrot.slane %v1616, %v1629
        %v1631 = vcombine.low %v1535, %v1599
        %v1632 = vcombine.high %v1535, %v1599
        %v1634 = vunpack.c.l.s4 1983009808
        %v1635 = vunpack.c.0.s8 %v1634
        %v1636 = vlaneseq
        %v1637 = vshrl.u32 %v1636, 7
        %v1638 = vsub.s32 %v1635, %v1637
        %v1639 = vrot.slane %v1631, %v1638
        %v1641 = vunpack.c.l.s4 1983009808
        %v1642 = vunpack.c.0.s8 %v1641
        %v1643 = vlaneseq
        %v1644 = vshrl.u32 %v1643, 7
        %v1645 = vsub.s32 %v1642, %v1644
        %v1646 = vrot.slane %v1632, %v1645
        %v1647 = vcombine.low %v1623, %v1639
        %v1648 = vcombine.high %v1623, %v1639
        %v1650 = vunpack.c.l.s4 1934713408
        %v1651 = vunpack.c.0.s8 %v1650
        %v1652 = vlaneseq
        %v1653 = vshrl.u32 %v1652, 7
        %v1654 = vsub.s32 %v1651, %v1653
        %v1655 = vrot.slane %v1647, %v1654
        %v1657 = vunpack.c.l.s4 1934713408
        %v1658 = vunpack.c.0.s8 %v1657
        %v1659 = vlaneseq
        %v1660 = vshrl.u32 %v1659, 7
        %v1661 = vsub.s32 %v1658, %v1660
        %v1662 = vrot.slane %v1648, %v1661
        %v1663 = vcombine.low %v1630, %v1646
        %v1664 = vcombine.high %v1630, %v1646
        %v1666 = vunpack.c.l.s4 1934713408
        %v1667 = vunpack.c.0.s8 %v1666
        %v1668 = vlaneseq
        %v1669 = vshrl.u32 %v1668, 7
        %v1670 = vsub.s32 %v1667, %v1669
        %v1671 = vrot.slane %v1663, %v1670
        %v1673 = vunpack.c.l.s4 1934713408
        %v1674 = vunpack.c.0.s8 %v1673
        %v1675 = vlaneseq
        %v1676 = vshrl.u32 %v1675, 7
        %v1677 = vsub.s32 %v1674, %v1676
        %v1678 = vrot.slane %v1664, %v1677
        %v1679 = vcombine.high %v1655, 0.0
        %v1680 = vcombine.high %v1662, 0.0
        %v1681 = vcombine.high %v1671, 0.0
        %v1682 = vcombine.high %v1678, 0.0
        %v1683 = vrcp.pop %v1021
        %v1684 = vrcp.pop %v1024
        %v1685 = vrcp.pop %v1027
        %v1686 = vrcp.pop %v1030
        %v1687 = vcombine.low %v1683, %v1685
        %v1688 = vcombine.high %v1683, %v1685
        %v1690 = vunpack.c.l.s4 1983009808
        %v1691 = vunpack.c.0.s8 %v1690
        %v1692 = vlaneseq
        %v1693 = vshrl.u32 %v1692, 7
        %v1694 = vsub.s32 %v1691, %v1693
        %v1695 = vrot.slane %v1687, %v1694
        %v1697 = vunpack.c.l.s4 1983009808
        %v1698 = vunpack.c.0.s8 %v1697
        %v1699 = vlaneseq
        %v1700 = vshrl.u32 %v1699, 7
        %v1701 = vsub.s32 %v1698, %v1700
        %v1702 = vrot.slane %v1688, %v1701
        %v1703 = vcombine.low %v1684, %v1686
        %v1704 = vcombine.high %v1684, %v1686
        %v1706 = vunpack.c.l.s4 1983009808
        %v1707 = vunpack.c.0.s8 %v1706
        %v1708 = vlaneseq
        %v1709 = vshrl.u32 %v1708, 7
        %v1710 = vsub.s32 %v1707, %v1709
        %v1711 = vrot.slane %v1703, %v1710
        %v1713 = vunpack.c.l.s4 1983009808
        %v1714 = vunpack.c.0.s8 %v1713
        %v1715 = vlaneseq
        %v1716 = vshrl.u32 %v1715, 7
        %v1717 = vsub.s32 %v1714, %v1716
        %v1718 = vrot.slane %v1704, %v1717
        %v1719 = vcombine.low %v1695, %v1711
        %v1720 = vcombine.high %v1695, %v1711
        %v1722 = vunpack.c.l.s4 1934713408
        %v1723 = vunpack.c.0.s8 %v1722
        %v1724 = vlaneseq
        %v1725 = vshrl.u32 %v1724, 7
        %v1726 = vsub.s32 %v1723, %v1725
        %v1727 = vrot.slane %v1719, %v1726
        %v1729 = vunpack.c.l.s4 1934713408
        %v1730 = vunpack.c.0.s8 %v1729
        %v1731 = vlaneseq
        %v1732 = vshrl.u32 %v1731, 7
        %v1733 = vsub.s32 %v1730, %v1732
        %v1734 = vrot.slane %v1720, %v1733
        %v1735 = vcombine.low %v1702, %v1718
        %v1736 = vcombine.high %v1702, %v1718
        %v1738 = vunpack.c.l.s4 1934713408
        %v1739 = vunpack.c.0.s8 %v1738
        %v1740 = vlaneseq
        %v1741 = vshrl.u32 %v1740, 7
        %v1742 = vsub.s32 %v1739, %v1741
        %v1743 = vrot.slane %v1735, %v1742
        %v1745 = vunpack.c.l.s4 1934713408
        %v1746 = vunpack.c.0.s8 %v1745
        %v1747 = vlaneseq
        %v1748 = vshrl.u32 %v1747, 7
        %v1749 = vsub.s32 %v1746, %v1748
        %v1750 = vrot.slane %v1736, %v1749
        %v1751 = vcombine.high %v1727, 0.0
        %v1752 = vcombine.high %v1734, 0.0
        %v1753 = vcombine.high %v1743, 0.0
        %v1754 = vcombine.high %v1750, 0.0
        %1756 = vset.pattern.permute.xlu0 0
        %1757 = vperm.xlu0 %1756, %v1727
        %v1758 = vpop.permute.xlu0 %1757
        %1761 = vset.pattern.permute.xlu0 0
        %1762 = vperm.xlu0 %1761, %v1751
        %v1763 = vpop.permute.xlu0 %1762
        %1766 = vset.pattern.permute.xlu0 0
        %1767 = vperm.xlu0 %1766, %v1734
        %v1768 = vpop.permute.xlu0 %1767
        %1771 = vset.pattern.permute.xlu0 0
        %1772 = vperm.xlu0 %1771, %v1752
        %v1773 = vpop.permute.xlu0 %1772
        %1776 = vset.pattern.permute.xlu0 0
        %1777 = vperm.xlu0 %1776, %v1743
        %v1778 = vpop.permute.xlu0 %1777
        %1781 = vset.pattern.permute.xlu0 0
        %1782 = vperm.xlu0 %1781, %v1753
        %v1783 = vpop.permute.xlu0 %1782
        %1786 = vset.pattern.permute.xlu0 0
        %1787 = vperm.xlu0 %1786, %v1750
        %v1788 = vpop.permute.xlu0 %1787
        %1791 = vset.pattern.permute.xlu0 0
        %1792 = vperm.xlu0 %1791, %v1754
        %v1793 = vpop.permute.xlu0 %1792
        %v1795 = vmul.f32 %v1655, %v1758
        %v1796 = vmul.f32 %v1679, %v1763
        %v1797 = vmul.f32 %v1662, %v1768
        %v1798 = vmul.f32 %v1680, %v1773
        %v1799 = vmul.f32 %v1671, %v1778
        %v1800 = vmul.f32 %v1681, %v1783
        %v1801 = vmul.f32 %v1678, %v1788
        %v1802 = vmul.f32 %v1682, %v1793
        %v1803 = vcombine.low %v1795, %v1797
        %v1805 = vunpack.c.l.s4 1983009808
        %v1806 = vunpack.c.0.s8 %v1805
        %v1807 = vlaneseq
        %v1808 = vshrl.u32 %v1807, 7
        %v1809 = vsub.s32 %v1806, %v1808
        %v1810 = vrot.slane %v1803, %v1809
        %v1811 = vcombine.low %v1796, %v1798
        %v1813 = vunpack.c.l.s4 1983009808
        %v1814 = vunpack.c.0.s8 %v1813
        %v1815 = vlaneseq
        %v1816 = vshrl.u32 %v1815, 7
        %v1817 = vsub.s32 %v1814, %v1816
        %v1818 = vrot.slane %v1811, %v1817
        %v1819 = vcombine.low %v1799, %v1801
        %v1821 = vunpack.c.l.s4 1983009808
        %v1822 = vunpack.c.0.s8 %v1821
        %v1823 = vlaneseq
        %v1824 = vshrl.u32 %v1823, 7
        %v1825 = vsub.s32 %v1822, %v1824
        %v1826 = vrot.slane %v1819, %v1825
        %v1827 = vcombine.low %v1800, %v1802
        %v1829 = vunpack.c.l.s4 1983009808
        %v1830 = vunpack.c.0.s8 %v1829
        %v1831 = vlaneseq
        %v1832 = vshrl.u32 %v1831, 7
        %v1833 = vsub.s32 %v1830, %v1832
        %v1834 = vrot.slane %v1827, %v1833
        %v1835 = vcombine.low %v1810, %v1818
        %v1836 = vcombine.high %v1810, %v1818
        %v1838 = vunpack.c.l.s4 1934713408
        %v1839 = vunpack.c.0.s8 %v1838
        %v1840 = vlaneseq
        %v1841 = vshrl.u32 %v1840, 7
        %v1842 = vsub.s32 %v1839, %v1841
        %v1843 = vrot.slane %v1835, %v1842
        %v1845 = vunpack.c.l.s4 1934713408
        %v1846 = vunpack.c.0.s8 %v1845
        %v1847 = vlaneseq
        %v1848 = vshrl.u32 %v1847, 7
        %v1849 = vsub.s32 %v1846, %v1848
        %v1850 = vrot.slane %v1836, %v1849
        %v1851 = vcombine.low %v1826, %v1834
        %v1852 = vcombine.high %v1826, %v1834
        %v1854 = vunpack.c.l.s4 1934713408
        %v1855 = vunpack.c.0.s8 %v1854
        %v1856 = vlaneseq
        %v1857 = vshrl.u32 %v1856, 7
        %v1858 = vsub.s32 %v1855, %v1857
        %v1859 = vrot.slane %v1851, %v1858
        %v1861 = vunpack.c.l.s4 1934713408
        %v1862 = vunpack.c.0.s8 %v1861
        %v1863 = vlaneseq
        %v1864 = vshrl.u32 %v1863, 7
        %v1865 = vsub.s32 %v1862, %v1864
        %v1866 = vrot.slane %v1852, %v1865
        %v1867 = vcombine.low %v1843, %v1859
        %v1868 = vcombine.high %v1843, %v1859
        %v1869 = vcombine.low %v1850, %v1866
        %v1870 = vcombine.high %v1850, %v1866
        %1872 = vrot.lane.b32.xlu0 %v1868, 8
        %v1873 = vpop.permute.xlu0 %1872
        %1876 = vrot.lane.b32.xlu0 %v1869, 16
        %v1877 = vpop.permute.xlu0 %1876
        %1880 = vrot.lane.b32.xlu0 %v1870, 24
        %v1881 = vpop.permute.xlu0 %1880
        %v1883 = vsel %vm705, %v1867, %v1873
        %v1884 = vsel %vm994, %v1883, %v1877
        %vm1885 = vcmask 195584
        %v1886 = vsel %vm1885, %v1884, %v1881
        %v1887 = vld [vmem:[#allocation10 + $0x40] sm:$0xff]
        %v1888 = vld [vmem:[#allocation10 + $0x48] sm:$0xff]
        %v1889 = vld [vmem:[#allocation10 + $0x50] sm:$0xff]
        %v1890 = vld [vmem:[#allocation10 + $0x58] sm:$0xff]
        %v1891 = vld [vmem:[#allocation10 + $0x130] sm:$0x1]
        %v1892 = vlaneseq
        %v1893 = vshrl.u32 %v1892, 7
        %v1894 = vsub.s32 0, %v1893
        %v1895 = vrot.slane %v1891, %v1894
        %v1897 = vsel %vm386, %v1886, 0
        %1899 = vmatprep.subr.mxu0 0.0
        %1900 = vmatpush1.msra.mxu0 %v1887
        %1901 = vmatprep.subr.mxu0 0.0
        %1902 = vmatpush1.msra.mxu0 %v1888
        %1903 = vmatprep.subr.mxu0 0.0
        %1904 = vmatpush1.msra.mxu0 %v1889
        %1905 = vmatprep.subr.mxu0 0.0
        %1906 = vmatpush1.msra.mxu0 %v1890
        %1907 = vmatprep.subr.mxu0 0.0
        %1908 = vmatpush1.msra.mxu0 0.0
        %1909 = vmatprep.subr.mxu0 0.0
        %1910 = vmatpush1.msra.mxu0 0.0
        %1911 = vmatprep.subr.mxu0 0.0
        %1912 = vmatpush1.msra.mxu0 0.0
        %1913 = vmatprep.subr.mxu0 0.0
        %1914 = vmatpush1.msra.mxu0 0.0
        %1915 = vmatprep.subr.mxu0 0.0
        %1916 = vmatpush1.msra.mxu0 0.0
        %1917 = vmatprep.subr.mxu0 0.0
        %1918 = vmatpush1.msra.mxu0 0.0
        %1919 = vmatprep.subr.mxu0 0.0
        %1920 = vmatpush1.msra.mxu0 0.0
        %1921 = vmatprep.subr.mxu0 0.0
        %1922 = vmatpush1.msra.mxu0 0.0
        %1923 = vmatprep.subr.mxu0 0.0
        %1924 = vmatpush1.msra.mxu0 0.0
        %1925 = vmatprep.subr.mxu0 0.0
        %1926 = vmatpush1.msra.mxu0 0.0
        %1927 = vmatprep.subr.mxu0 0.0
        %1928 = vmatpush1.msra.mxu0 0.0
        %1929 = vmatprep.subr.mxu0 0.0
        %1930 = vmatpush1.msra.mxu0 0.0
        %1931 = vmatprep.subr.mxu0 0.0
        %1932 = vmatpush1.msra.mxu0 0.0
        %1933 = vmatprep.subr.mxu0 0.0
        %1934 = vmatpush1.msra.mxu0 0.0
        %1935 = vmatprep.subr.mxu0 0.0
        %1936 = vmatpush1.msra.mxu0 0.0
        %1937 = vmatprep.subr.mxu0 0.0
        %1938 = vmatpush1.msra.mxu0 0.0
        %1939 = vmatprep.subr.mxu0 0.0
        %1940 = vmatpush1.msra.mxu0 0.0
        %1941 = vmatprep.subr.mxu0 0.0
        %1942 = vmatpush1.msra.mxu0 0.0
        %1943 = vmatprep.subr.mxu0 0.0
        %1944 = vmatpush1.msra.mxu0 0.0
        %1945 = vmatprep.subr.mxu0 0.0
        %1946 = vmatpush1.msra.mxu0 0.0
        %1947 = vmatprep.subr.mxu0 0.0
        %1948 = vmatpush1.msra.mxu0 0.0
        %1949 = vmatprep.subr.mxu0 0.0
        %1950 = vmatpush1.msra.mxu0 0.0
        %1951 = vmatprep.subr.mxu0 0.0
        %1952 = vmatpush1.msra.mxu0 0.0
        %1953 = vmatprep.subr.mxu0 0.0
        %1954 = vmatpush1.msra.mxu0 0.0
        %1955 = vmatprep.subr.mxu0 0.0
        %1956 = vmatpush1.msra.mxu0 0.0
        %1957 = vmatprep.subr.mxu0 0.0
        %1958 = vmatpush1.msra.mxu0 0.0
        %1959 = vmatprep.subr.mxu0 0.0
        %1960 = vmatpush1.msra.mxu0 0.0
        %1961 = vmatprep.subr.mxu0 0.0
        %1962 = vmatpush1.msra.mxu0 0.0
        %1963 = vmatprep.mubr.f32.mxu0 0.0
        %1964 = vmatmul.mubr.f32.gmra.mrb[0].mxu0 %v1897
        %v1965 = vpop.f32.mrb[0].mxu0
        %v1966 = vadd.f32 %v1895, %v1965
        %v1967 = vpop.f32.mrb[0].mxu0
        %1968 = vdwg.mxu0
        %v1969 = vadd.f32 %v368, %v1966
        %v1970 = vld [vmem:[#allocation10 + $0x160] sm:$0x1]
        %v1971 = vld [vmem:[#allocation10 + $0x168] sm:$0x1]
        %v1972 = vsel %vm386, %v1969, 0.0
        %1973 = vadd.xlane.f32.xlu0 %v1972
        %v1974 = vpop.xlane.xlu0 %1973
        %v1975 = vrcp.pop 32.0
        %v1976 = vmul.f32 %v1974, %v1975
        %v1977 = vsub.f32 %v1969, %v1976
        %v1978 = vmul.f32 %v1977, %v1977
        %v1979 = vsel %vm386, %v1978, 0.0
        %1980 = vadd.xlane.f32.xlu0 %v1979
        %v1981 = vpop.xlane.xlu0 %1980
        %v1982 = vmul.f32 %v1981, %v1975
        %v1983 = vadd.f32 %v1982, 1e-05
        %v1984 = vrsqrt.pop %v1983
        %v1985 = vmul.f32 %v1977, %v1984
        %v1986 = vlaneseq
        %v1987 = vshrl.u32 %v1986, 7
        %v1988 = vsub.s32 0, %v1987
        %v1989 = vrot.slane %v1970, %v1988
        %v1990 = vmul.f32 %v1985, %v1989
        %v1991 = vlaneseq
        %v1992 = vshrl.u32 %v1991, 7
        %v1993 = vsub.s32 0, %v1992
        %v1994 = vrot.slane %v1971, %v1993
        %v1995 = vadd.f32 %v1990, %v1994
        %v1996 = vadd.f32 %v1995, %v369
        %v1997 = vld [vmem:[#allocation10 + $0x60] sm:$0xff]
        %v1998 = vld [vmem:[#allocation10 + $0x68] sm:$0xff]
        %v1999 = vld [vmem:[#allocation10 + $0x70] sm:$0xff]
        %v2000 = vld [vmem:[#allocation10 + $0x78] sm:$0xff]
        %v2001 = vld [vmem:[#allocation10 + $0x138] sm:$0x1]
        %v2002 = vlaneseq
        %v2003 = vshrl.u32 %v2002, 7
        %v2004 = vsub.s32 0, %v2003
        %v2005 = vrot.slane %v2001, %v2004
        %v2007 = vsel %vm386, %v1996, 0
        %2009 = vmatprep.subr.mxu0 0.0
        %2010 = vmatpush1.msra.mxu0 %v1997
        %2011 = vmatprep.subr.mxu0 0.0
        %2012 = vmatpush1.msra.mxu0 %v1998
        %2013 = vmatprep.subr.mxu0 0.0
        %2014 = vmatpush1.msra.mxu0 %v1999
        %2015 = vmatprep.subr.mxu0 0.0
        %2016 = vmatpush1.msra.mxu0 %v2000
        %2017 = vmatprep.subr.mxu0 0.0
        %2018 = vmatpush1.msra.mxu0 0.0
        %2019 = vmatprep.subr.mxu0 0.0
        %2020 = vmatpush1.msra.mxu0 0.0
        %2021 = vmatprep.subr.mxu0 0.0
        %2022 = vmatpush1.msra.mxu0 0.0
        %2023 = vmatprep.subr.mxu0 0.0
        %2024 = vmatpush1.msra.mxu0 0.0
        %2025 = vmatprep.subr.mxu0 0.0
        %2026 = vmatpush1.msra.mxu0 0.0
        %2027 = vmatprep.subr.mxu0 0.0
        %2028 = vmatpush1.msra.mxu0 0.0
        %2029 = vmatprep.subr.mxu0 0.0
        %2030 = vmatpush1.msra.mxu0 0.0
        %2031 = vmatprep.subr.mxu0 0.0
        %2032 = vmatpush1.msra.mxu0 0.0
        %2033 = vmatprep.subr.mxu0 0.0
        %2034 = vmatpush1.msra.mxu0 0.0
        %2035 = vmatprep.subr.mxu0 0.0
        %2036 = vmatpush1.msra.mxu0 0.0
        %2037 = vmatprep.subr.mxu0 0.0
        %2038 = vmatpush1.msra.mxu0 0.0
        %2039 = vmatprep.subr.mxu0 0.0
        %2040 = vmatpush1.msra.mxu0 0.0
        %2041 = vmatprep.subr.mxu0 0.0
        %2042 = vmatpush1.msra.mxu0 0.0
        %2043 = vmatprep.subr.mxu0 0.0
        %2044 = vmatpush1.msra.mxu0 0.0
        %2045 = vmatprep.subr.mxu0 0.0
        %2046 = vmatpush1.msra.mxu0 0.0
        %2047 = vmatprep.subr.mxu0 0.0
        %2048 = vmatpush1.msra.mxu0 0.0
        %2049 = vmatprep.subr.mxu0 0.0
        %2050 = vmatpush1.msra.mxu0 0.0
        %2051 = vmatprep.subr.mxu0 0.0
        %2052 = vmatpush1.msra.mxu0 0.0
        %2053 = vmatprep.subr.mxu0 0.0
        %2054 = vmatpush1.msra.mxu0 0.0
        %2055 = vmatprep.subr.mxu0 0.0
        %2056 = vmatpush1.msra.mxu0 0.0
        %2057 = vmatprep.subr.mxu0 0.0
        %2058 = vmatpush1.msra.mxu0 0.0
        %2059 = vmatprep.subr.mxu0 0.0
        %2060 = vmatpush1.msra.mxu0 0.0
        %2061 = vmatprep.subr.mxu0 0.0
        %2062 = vmatpush1.msra.mxu0 0.0
        %2063 = vmatprep.subr.mxu0 0.0
        %2064 = vmatpush1.msra.mxu0 0.0
        %2065 = vmatprep.subr.mxu0 0.0
        %2066 = vmatpush1.msra.mxu0 0.0
        %2067 = vmatprep.subr.mxu0 0.0
        %2068 = vmatpush1.msra.mxu0 0.0
        %2069 = vmatprep.subr.mxu0 0.0
        %2070 = vmatpush1.msra.mxu0 0.0
        %2071 = vmatprep.subr.mxu0 0.0
        %2072 = vmatpush1.msra.mxu0 0.0
        %2073 = vmatprep.mubr.f32.mxu0 0.0
        %2074 = vmatmul.mubr.f32.gmra.mrb[0].mxu0 %v2007
        %v2075 = vpop.f32.mrb[0].mxu0
        %v2076 = vadd.f32 %v2005, %v2075
        %v2077 = vpop.f32.mrb[0].mxu0
        %2078 = vdwg.mxu0
        %v2079 = vld [vmem:[#allocation10 + $0x80] sm:$0xff]
        %v2080 = vld [vmem:[#allocation10 + $0x88] sm:$0xff]
        %v2081 = vld [vmem:[#allocation10 + $0x90] sm:$0xff]
        %v2082 = vld [vmem:[#allocation10 + $0x98] sm:$0xff]
        %v2083 = vld [vmem:[#allocation10 + $0x140] sm:$0x1]
        %v2084 = vlaneseq
        %v2085 = vshrl.u32 %v2084, 7
        %v2086 = vsub.s32 0, %v2085
        %v2087 = vrot.slane %v2083, %v2086
        %v2089 = vsel %vm386, %v1995, 0
        %2091 = vmatprep.subr.mxu0 0.0
        %2092 = vmatpush1.msra.mxu0 %v2079
        %2093 = vmatprep.subr.mxu0 0.0
        %2094 = vmatpush1.msra.mxu0 %v2080
        %2095 = vmatprep.subr.mxu0 0.0
        %2096 = vmatpush1.msra.mxu0 %v2081
        %2097 = vmatprep.subr.mxu0 0.0
        %2098 = vmatpush1.msra.mxu0 %v2082
        %2099 = vmatprep.subr.mxu0 0.0
        %2100 = vmatpush1.msra.mxu0 0.0
        %2101 = vmatprep.subr.mxu0 0.0
        %2102 = vmatpush1.msra.mxu0 0.0
        %2103 = vmatprep.subr.mxu0 0.0
        %2104 = vmatpush1.msra.mxu0 0.0
        %2105 = vmatprep.subr.mxu0 0.0
        %2106 = vmatpush1.msra.mxu0 0.0
        %2107 = vmatprep.subr.mxu0 0.0
        %2108 = vmatpush1.msra.mxu0 0.0
        %2109 = vmatprep.subr.mxu0 0.0
        %2110 = vmatpush1.msra.mxu0 0.0
        %2111 = vmatprep.subr.mxu0 0.0
        %2112 = vmatpush1.msra.mxu0 0.0
        %2113 = vmatprep.subr.mxu0 0.0
        %2114 = vmatpush1.msra.mxu0 0.0
        %2115 = vmatprep.subr.mxu0 0.0
        %2116 = vmatpush1.msra.mxu0 0.0
        %2117 = vmatprep.subr.mxu0 0.0
        %2118 = vmatpush1.msra.mxu0 0.0
        %2119 = vmatprep.subr.mxu0 0.0
        %2120 = vmatpush1.msra.mxu0 0.0
        %2121 = vmatprep.subr.mxu0 0.0
        %2122 = vmatpush1.msra.mxu0 0.0
        %2123 = vmatprep.subr.mxu0 0.0
        %2124 = vmatpush1.msra.mxu0 0.0
        %2125 = vmatprep.subr.mxu0 0.0
        %2126 = vmatpush1.msra.mxu0 0.0
        %2127 = vmatprep.subr.mxu0 0.0
        %2128 = vmatpush1.msra.mxu0 0.0
        %2129 = vmatprep.subr.mxu0 0.0
        %2130 = vmatpush1.msra.mxu0 0.0
        %2131 = vmatprep.subr.mxu0 0.0
        %2132 = vmatpush1.msra.mxu0 0.0
        %2133 = vmatprep.subr.mxu0 0.0
        %2134 = vmatpush1.msra.mxu0 0.0
        %2135 = vmatprep.subr.mxu0 0.0
        %2136 = vmatpush1.msra.mxu0 0.0
        %2137 = vmatprep.subr.mxu0 0.0
        %2138 = vmatpush1.msra.mxu0 0.0
        %2139 = vmatprep.subr.mxu0 0.0
        %2140 = vmatpush1.msra.mxu0 0.0
        %2141 = vmatprep.subr.mxu0 0.0
        %2142 = vmatpush1.msra.mxu0 0.0
        %2143 = vmatprep.subr.mxu0 0.0
        %2144 = vmatpush1.msra.mxu0 0.0
        %2145 = vmatprep.subr.mxu0 0.0
        %2146 = vmatpush1.msra.mxu0 0.0
        %2147 = vmatprep.subr.mxu0 0.0
        %2148 = vmatpush1.msra.mxu0 0.0
        %2149 = vmatprep.subr.mxu0 0.0
        %2150 = vmatpush1.msra.mxu0 0.0
        %2151 = vmatprep.subr.mxu0 0.0
        %2152 = vmatpush1.msra.mxu0 0.0
        %2153 = vmatprep.subr.mxu0 0.0
        %2154 = vmatpush1.msra.mxu0 0.0
        %2155 = vmatprep.mubr.f32.mxu0 0.0
        %2156 = vmatmul.mubr.f32.gmra.mrb[0].mxu0 %v2089
        %v2157 = vpop.f32.mrb[0].mxu0
        %v2158 = vadd.f32 %v2087, %v2157
        %v2159 = vpop.f32.mrb[0].mxu0
        %2160 = vdwg.mxu0
        %2162 = vrot.lane.b32.xlu0 %v2076, 120
        %v2163 = vpop.permute.xlu0 %2162
        %2164 = vrot.lane.b32.xlu0 %v2076, 112
        %v2165 = vpop.permute.xlu0 %2164
        %2166 = vrot.lane.b32.xlu0 %v2076, 104
        %v2167 = vpop.permute.xlu0 %2166
        %2169 = vrot.lane.b32.xlu0 %v2158, 120
        %v2170 = vpop.permute.xlu0 %2169
        %2172 = vrot.lane.b32.xlu0 %v2158, 112
        %v2173 = vpop.permute.xlu0 %2172
        %2175 = vrot.lane.b32.xlu0 %v2158, 104
        %v2176 = vpop.permute.xlu0 %2175
        %2178 = vrot.lane.b32.xlu0 %v2076, 96
        %v2179 = vpop.permute.xlu0 %2178
        %2180 = vrot.lane.b32.xlu0 %v2163, 96
        %v2181 = vpop.permute.xlu0 %2180
        %2182 = vrot.lane.b32.xlu0 %v2165, 96
        %v2183 = vpop.permute.xlu0 %2182
        %2184 = vrot.lane.b32.xlu0 %v2167, 96
        %v2185 = vpop.permute.xlu0 %2184
        %2190 = vxpose.xlu0.b32.start [1/16] %v2179, 128
        %2191 = vxpose.xlu0.b32.cont [2/16] 0.0, 128
        %2192 = vxpose.xlu0.b32.cont [3/16] 0.0, 128
        %2193 = vxpose.xlu0.b32.cont [4/16] 0.0, 128
        %2194 = vxpose.xlu0.b32.cont [5/16] 0.0, 128
        %2195 = vxpose.xlu0.b32.cont [6/16] 0.0, 128
        %2196 = vxpose.xlu0.b32.cont [7/16] 0.0, 128
        %2197 = vxpose.xlu0.b32.cont [8/16] 0.0, 128
        %2198 = vxpose.xlu0.b32.cont [9/16] 0.0, 128
        %2199 = vxpose.xlu0.b32.cont [10/16] 0.0, 128
        %2200 = vxpose.xlu0.b32.cont [11/16] 0.0, 128
        %2201 = vxpose.xlu0.b32.cont [12/16] 0.0, 128
        %2202 = vxpose.xlu0.b32.cont [13/16] 0.0, 128
        %2203 = vxpose.xlu0.b32.cont [14/16] 0.0, 128
        %2204 = vxpose.xlu0.b32.cont [15/16] 0.0, 128
        %2205 = vxpose.xlu0.b32.end [16/16] 0.0, 128
        %v2206 = vpop.trf.xlu0
        %v2207 = vpop.trf.xlu0
        %v2208 = vpop.trf.xlu0
        %v2209 = vpop.trf.xlu0
        %v2210 = vpop.trf.xlu0
        %v2211 = vpop.trf.xlu0
        %v2212 = vpop.trf.xlu0
        %v2213 = vpop.trf.xlu0
        %v2214 = vpop.trf.xlu0
        %v2215 = vpop.trf.xlu0
        %v2216 = vpop.trf.xlu0
        %v2217 = vpop.trf.xlu0
        %v2218 = vpop.trf.xlu0
        %v2219 = vpop.trf.xlu0
        %v2220 = vpop.trf.xlu0
        %v2221 = vpop.trf.xlu0
        %2222 = vxpose.xlu0.b32.start [1/16] %v2181, 128
        %2223 = vxpose.xlu0.b32.cont [2/16] 0.0, 128
        %2224 = vxpose.xlu0.b32.cont [3/16] 0.0, 128
        %2225 = vxpose.xlu0.b32.cont [4/16] 0.0, 128
        %2226 = vxpose.xlu0.b32.cont [5/16] 0.0, 128
        %2227 = vxpose.xlu0.b32.cont [6/16] 0.0, 128
        %2228 = vxpose.xlu0.b32.cont [7/16] 0.0, 128
        %2229 = vxpose.xlu0.b32.cont [8/16] 0.0, 128
        %2230 = vxpose.xlu0.b32.cont [9/16] 0.0, 128
        %2231 = vxpose.xlu0.b32.cont [10/16] 0.0, 128
        %2232 = vxpose.xlu0.b32.cont [11/16] 0.0, 128
        %2233 = vxpose.xlu0.b32.cont [12/16] 0.0, 128
        %2234 = vxpose.xlu0.b32.cont [13/16] 0.0, 128
        %2235 = vxpose.xlu0.b32.cont [14/16] 0.0, 128
        %2236 = vxpose.xlu0.b32.cont [15/16] 0.0, 128
        %2237 = vxpose.xlu0.b32.end [16/16] 0.0, 128
        %v2238 = vpop.trf.xlu0
        %v2239 = vpop.trf.xlu0
        %v2240 = vpop.trf.xlu0
        %v2241 = vpop.trf.xlu0
        %v2242 = vpop.trf.xlu0
        %v2243 = vpop.trf.xlu0
        %v2244 = vpop.trf.xlu0
        %v2245 = vpop.trf.xlu0
        %v2246 = vpop.trf.xlu0
        %v2247 = vpop.trf.xlu0
        %v2248 = vpop.trf.xlu0
        %v2249 = vpop.trf.xlu0
        %v2250 = vpop.trf.xlu0
        %v2251 = vpop.trf.xlu0
        %v2252 = vpop.trf.xlu0
        %v2253 = vpop.trf.xlu0
        %2254 = vxpose.xlu0.b32.start [1/16] %v2183, 128
        %2255 = vxpose.xlu0.b32.cont [2/16] 0.0, 128
        %2256 = vxpose.xlu0.b32.cont [3/16] 0.0, 128
        %2257 = vxpose.xlu0.b32.cont [4/16] 0.0, 128
        %2258 = vxpose.xlu0.b32.cont [5/16] 0.0, 128
        %2259 = vxpose.xlu0.b32.cont [6/16] 0.0, 128
        %2260 = vxpose.xlu0.b32.cont [7/16] 0.0, 128
        %2261 = vxpose.xlu0.b32.cont [8/16] 0.0, 128
        %2262 = vxpose.xlu0.b32.cont [9/16] 0.0, 128
        %2263 = vxpose.xlu0.b32.cont [10/16] 0.0, 128
        %2264 = vxpose.xlu0.b32.cont [11/16] 0.0, 128
        %2265 = vxpose.xlu0.b32.cont [12/16] 0.0, 128
        %2266 = vxpose.xlu0.b32.cont [13/16] 0.0, 128
        %2267 = vxpose.xlu0.b32.cont [14/16] 0.0, 128
        %2268 = vxpose.xlu0.b32.cont [15/16] 0.0, 128
        %2269 = vxpose.xlu0.b32.end [16/16] 0.0, 128
        %v2270 = vpop.trf.xlu0
        %v2271 = vpop.trf.xlu0
        %v2272 = vpop.trf.xlu0
        %v2273 = vpop.trf.xlu0
        %v2274 = vpop.trf.xlu0
        %v2275 = vpop.trf.xlu0
        %v2276 = vpop.trf.xlu0
        %v2277 = vpop.trf.xlu0
        %v2278 = vpop.trf.xlu0
        %v2279 = vpop.trf.xlu0
        %v2280 = vpop.trf.xlu0
        %v2281 = vpop.trf.xlu0
        %v2282 = vpop.trf.xlu0
        %v2283 = vpop.trf.xlu0
        %v2284 = vpop.trf.xlu0
        %v2285 = vpop.trf.xlu0
        %2286 = vxpose.xlu0.b32.start [1/16] %v2185, 128
        %2287 = vxpose.xlu0.b32.cont [2/16] 0.0, 128
        %2288 = vxpose.xlu0.b32.cont [3/16] 0.0, 128
        %2289 = vxpose.xlu0.b32.cont [4/16] 0.0, 128
        %2290 = vxpose.xlu0.b32.cont [5/16] 0.0, 128
        %2291 = vxpose.xlu0.b32.cont [6/16] 0.0, 128
        %2292 = vxpose.xlu0.b32.cont [7/16] 0.0, 128
        %2293 = vxpose.xlu0.b32.cont [8/16] 0.0, 128
        %2294 = vxpose.xlu0.b32.cont [9/16] 0.0, 128
        %2295 = vxpose.xlu0.b32.cont [10/16] 0.0, 128
        %2296 = vxpose.xlu0.b32.cont [11/16] 0.0, 128
        %2297 = vxpose.xlu0.b32.cont [12/16] 0.0, 128
        %2298 = vxpose.xlu0.b32.cont [13/16] 0.0, 128
        %2299 = vxpose.xlu0.b32.cont [14/16] 0.0, 128
        %2300 = vxpose.xlu0.b32.cont [15/16] 0.0, 128
        %2301 = vxpose.xlu0.b32.end [16/16] 0.0, 128
        %v2302 = vpop.trf.xlu0
        %v2303 = vpop.trf.xlu0
        %v2304 = vpop.trf.xlu0
        %v2305 = vpop.trf.xlu0
        %v2306 = vpop.trf.xlu0
        %v2307 = vpop.trf.xlu0
        %v2308 = vpop.trf.xlu0
        %v2309 = vpop.trf.xlu0
        %v2310 = vpop.trf.xlu0
        %v2311 = vpop.trf.xlu0
        %v2312 = vpop.trf.xlu0
        %v2313 = vpop.trf.xlu0
        %v2314 = vpop.trf.xlu0
        %v2315 = vpop.trf.xlu0
        %v2316 = vpop.trf.xlu0
        %v2317 = vpop.trf.xlu0
        %v2318 = vsel %vm705, %v2076, 0
        %2320 = vmatprep.subr.mxu0 0.0
        %2321 = vmatpush1.msra.mxu0 %v2206
        %2322 = vmatprep.subr.mxu0 0.0
        %2323 = vmatpush1.msra.mxu0 0.0
        %2324 = vmatprep.subr.mxu0 0.0
        %2325 = vmatpush1.msra.mxu0 0.0
        %2326 = vmatprep.subr.mxu0 0.0
        %2327 = vmatpush1.msra.mxu0 0.0
        %2328 = vmatprep.subr.mxu0 0.0
        %2329 = vmatpush1.msra.mxu0 0.0
        %2330 = vmatprep.subr.mxu0 0.0
        %2331 = vmatpush1.msra.mxu0 0.0
        %2332 = vmatprep.subr.mxu0 0.0
        %2333 = vmatpush1.msra.mxu0 0.0
        %2334 = vmatprep.subr.mxu0 0.0
        %2335 = vmatpush1.msra.mxu0 0.0
        %2336 = vmatprep.subr.mxu0 0.0
        %2337 = vmatpush1.msra.mxu0 0.0
        %2338 = vmatprep.subr.mxu0 0.0
        %2339 = vmatpush1.msra.mxu0 0.0
        %2340 = vmatprep.subr.mxu0 0.0
        %2341 = vmatpush1.msra.mxu0 0.0
        %2342 = vmatprep.subr.mxu0 0.0
        %2343 = vmatpush1.msra.mxu0 0.0
        %2344 = vmatprep.subr.mxu0 0.0
        %2345 = vmatpush1.msra.mxu0 0.0
        %2346 = vmatprep.subr.mxu0 0.0
        %2347 = vmatpush1.msra.mxu0 0.0
        %2348 = vmatprep.subr.mxu0 0.0
        %2349 = vmatpush1.msra.mxu0 0.0
        %2350 = vmatprep.subr.mxu0 0.0
        %2351 = vmatpush1.msra.mxu0 0.0
        %2352 = vmatprep.subr.mxu0 0.0
        %2353 = vmatpush1.msra.mxu0 0.0
        %2354 = vmatprep.subr.mxu0 0.0
        %2355 = vmatpush1.msra.mxu0 0.0
        %2356 = vmatprep.subr.mxu0 0.0
        %2357 = vmatpush1.msra.mxu0 0.0
        %2358 = vmatprep.subr.mxu0 0.0
        %2359 = vmatpush1.msra.mxu0 0.0
        %2360 = vmatprep.subr.mxu0 0.0
        %2361 = vmatpush1.msra.mxu0 0.0
        %2362 = vmatprep.subr.mxu0 0.0
        %2363 = vmatpush1.msra.mxu0 0.0
        %2364 = vmatprep.subr.mxu0 0.0
        %2365 = vmatpush1.msra.mxu0 0.0
        %2366 = vmatprep.subr.mxu0 0.0
        %2367 = vmatpush1.msra.mxu0 0.0
        %2368 = vmatprep.subr.mxu0 0.0
        %2369 = vmatpush1.msra.mxu0 0.0
        %2370 = vmatprep.subr.mxu0 0.0
        %2371 = vmatpush1.msra.mxu0 0.0
        %2372 = vmatprep.subr.mxu0 0.0
        %2373 = vmatpush1.msra.mxu0 0.0
        %2374 = vmatprep.subr.mxu0 0.0
        %2375 = vmatpush1.msra.mxu0 0.0
        %2376 = vmatprep.subr.mxu0 0.0
        %2377 = vmatpush1.msra.mxu0 0.0
        %2378 = vmatprep.subr.mxu0 0.0
        %2379 = vmatpush1.msra.mxu0 0.0
        %2380 = vmatprep.subr.mxu0 0.0
        %2381 = vmatpush1.msra.mxu0 0.0
        %2382 = vmatprep.subr.mxu0 0.0
        %2383 = vmatpush1.msra.mxu0 0.0
        %2384 = vmatprep.mubr.f32.mxu0 0.0
        %2385 = vmatmul.mubr.f32.gmra.mrb[0].mxu0 %v2318
        %v2386 = vpop.f32.mrb[0].mxu0
        %v2387 = vadd.f32 0.0, %v2386
        %v2388 = vpop.f32.mrb[0].mxu0
        %2389 = vdwg.mxu0
        %v2390 = vsel %vm705, %v2163, 0
        %2392 = vmatprep.subr.mxu0 0.0
        %2393 = vmatpush1.msra.mxu0 %v2238
        %2394 = vmatprep.subr.mxu0 0.0
        %2395 = vmatpush1.msra.mxu0 0.0
        %2396 = vmatprep.subr.mxu0 0.0
        %2397 = vmatpush1.msra.mxu0 0.0
        %2398 = vmatprep.subr.mxu0 0.0
        %2399 = vmatpush1.msra.mxu0 0.0
        %2400 = vmatprep.subr.mxu0 0.0
        %2401 = vmatpush1.msra.mxu0 0.0
        %2402 = vmatprep.subr.mxu0 0.0
        %2403 = vmatpush1.msra.mxu0 0.0
        %2404 = vmatprep.subr.mxu0 0.0
        %2405 = vmatpush1.msra.mxu0 0.0
        %2406 = vmatprep.subr.mxu0 0.0
        %2407 = vmatpush1.msra.mxu0 0.0
        %2408 = vmatprep.subr.mxu0 0.0
        %2409 = vmatpush1.msra.mxu0 0.0
        %2410 = vmatprep.subr.mxu0 0.0
        %2411 = vmatpush1.msra.mxu0 0.0
        %2412 = vmatprep.subr.mxu0 0.0
        %2413 = vmatpush1.msra.mxu0 0.0
        %2414 = vmatprep.subr.mxu0 0.0
        %2415 = vmatpush1.msra.mxu0 0.0
        %2416 = vmatprep.subr.mxu0 0.0
        %2417 = vmatpush1.msra.mxu0 0.0
        %2418 = vmatprep.subr.mxu0 0.0
        %2419 = vmatpush1.msra.mxu0 0.0
        %2420 = vmatprep.subr.mxu0 0.0
        %2421 = vmatpush1.msra.mxu0 0.0
        %2422 = vmatprep.subr.mxu0 0.0
        %2423 = vmatpush1.msra.mxu0 0.0
        %2424 = vmatprep.subr.mxu0 0.0
        %2425 = vmatpush1.msra.mxu0 0.0
        %2426 = vmatprep.subr.mxu0 0.0
        %2427 = vmatpush1.msra.mxu0 0.0
        %2428 = vmatprep.subr.mxu0 0.0
        %2429 = vmatpush1.msra.mxu0 0.0
        %2430 = vmatprep.subr.mxu0 0.0
        %2431 = vmatpush1.msra.mxu0 0.0
        %2432 = vmatprep.subr.mxu0 0.0
        %2433 = vmatpush1.msra.mxu0 0.0
        %2434 = vmatprep.subr.mxu0 0.0
        %2435 = vmatpush1.msra.mxu0 0.0
        %2436 = vmatprep.subr.mxu0 0.0
        %2437 = vmatpush1.msra.mxu0 0.0
        %2438 = vmatprep.subr.mxu0 0.0
        %2439 = vmatpush1.msra.mxu0 0.0
        %2440 = vmatprep.subr.mxu0 0.0
        %2441 = vmatpush1.msra.mxu0 0.0
        %2442 = vmatprep.subr.mxu0 0.0
        %2443 = vmatpush1.msra.mxu0 0.0
        %2444 = vmatprep.subr.mxu0 0.0
        %2445 = vmatpush1.msra.mxu0 0.0
        %2446 = vmatprep.subr.mxu0 0.0
        %2447 = vmatpush1.msra.mxu0 0.0
        %2448 = vmatprep.subr.mxu0 0.0
        %2449 = vmatpush1.msra.mxu0 0.0
        %2450 = vmatprep.subr.mxu0 0.0
        %2451 = vmatpush1.msra.mxu0 0.0
        %2452 = vmatprep.subr.mxu0 0.0
        %2453 = vmatpush1.msra.mxu0 0.0
        %2454 = vmatprep.subr.mxu0 0.0
        %2455 = vmatpush1.msra.mxu0 0.0
        %2456 = vmatprep.mubr.f32.mxu0 0.0
        %2457 = vmatmul.mubr.f32.gmra.mrb[0].mxu0 %v2390
        %v2458 = vpop.f32.mrb[0].mxu0
        %v2459 = vadd.f32 0.0, %v2458
        %v2460 = vpop.f32.mrb[0].mxu0
        %2461 = vdwg.mxu0
        %v2462 = vsel %vm705, %v2165, 0
        %2464 = vmatprep.subr.mxu0 0.0
        %2465 = vmatpush1.msra.mxu0 %v2270
        %2466 = vmatprep.subr.mxu0 0.0
        %2467 = vmatpush1.msra.mxu0 0.0
        %2468 = vmatprep.subr.mxu0 0.0
        %2469 = vmatpush1.msra.mxu0 0.0
        %2470 = vmatprep.subr.mxu0 0.0
        %2471 = vmatpush1.msra.mxu0 0.0
        %2472 = vmatprep.subr.mxu0 0.0
        %2473 = vmatpush1.msra.mxu0 0.0
        %2474 = vmatprep.subr.mxu0 0.0
        %2475 = vmatpush1.msra.mxu0 0.0
        %2476 = vmatprep.subr.mxu0 0.0
        %2477 = vmatpush1.msra.mxu0 0.0
        %2478 = vmatprep.subr.mxu0 0.0
        %2479 = vmatpush1.msra.mxu0 0.0
        %2480 = vmatprep.subr.mxu0 0.0
        %2481 = vmatpush1.msra.mxu0 0.0
        %2482 = vmatprep.subr.mxu0 0.0
        %2483 = vmatpush1.msra.mxu0 0.0
        %2484 = vmatprep.subr.mxu0 0.0
        %2485 = vmatpush1.msra.mxu0 0.0
        %2486 = vmatprep.subr.mxu0 0.0
        %2487 = vmatpush1.msra.mxu0 0.0
        %2488 = vmatprep.subr.mxu0 0.0
        %2489 = vmatpush1.msra.mxu0 0.0
        %2490 = vmatprep.subr.mxu0 0.0
        %2491 = vmatpush1.msra.mxu0 0.0
        %2492 = vmatprep.subr.mxu0 0.0
        %2493 = vmatpush1.msra.mxu0 0.0
        %2494 = vmatprep.subr.mxu0 0.0
        %2495 = vmatpush1.msra.mxu0 0.0
        %2496 = vmatprep.subr.mxu0 0.0
        %2497 = vmatpush1.msra.mxu0 0.0
        %2498 = vmatprep.subr.mxu0 0.0
        %2499 = vmatpush1.msra.mxu0 0.0
        %2500 = vmatprep.subr.mxu0 0.0
        %2501 = vmatpush1.msra.mxu0 0.0
        %2502 = vmatprep.subr.mxu0 0.0
        %2503 = vmatpush1.msra.mxu0 0.0
        %2504 = vmatprep.subr.mxu0 0.0
        %2505 = vmatpush1.msra.mxu0 0.0
        %2506 = vmatprep.subr.mxu0 0.0
        %2507 = vmatpush1.msra.mxu0 0.0
        %2508 = vmatprep.subr.mxu0 0.0
        %2509 = vmatpush1.msra.mxu0 0.0
        %2510 = vmatprep.subr.mxu0 0.0
        %2511 = vmatpush1.msra.mxu0 0.0
        %2512 = vmatprep.subr.mxu0 0.0
        %2513 = vmatpush1.msra.mxu0 0.0
        %2514 = vmatprep.subr.mxu0 0.0
        %2515 = vmatpush1.msra.mxu0 0.0
        %2516 = vmatprep.subr.mxu0 0.0
        %2517 = vmatpush1.msra.mxu0 0.0
        %2518 = vmatprep.subr.mxu0 0.0
        %2519 = vmatpush1.msra.mxu0 0.0
        %2520 = vmatprep.subr.mxu0 0.0
        %2521 = vmatpush1.msra.mxu0 0.0
        %2522 = vmatprep.subr.mxu0 0.0
        %2523 = vmatpush1.msra.mxu0 0.0
        %2524 = vmatprep.subr.mxu0 0.0
        %2525 = vmatpush1.msra.mxu0 0.0
        %2526 = vmatprep.subr.mxu0 0.0
        %2527 = vmatpush1.msra.mxu0 0.0
        %2528 = vmatprep.mubr.f32.mxu0 0.0
        %2529 = vmatmul.mubr.f32.gmra.mrb[0].mxu0 %v2462
        %v2530 = vpop.f32.mrb[0].mxu0
        %v2531 = vadd.f32 0.0, %v2530
        %v2532 = vpop.f32.mrb[0].mxu0
        %2533 = vdwg.mxu0
        %v2534 = vsel %vm705, %v2167, 0
        %2536 = vmatprep.subr.mxu0 0.0
        %2537 = vmatpush1.msra.mxu0 %v2302
        %2538 = vmatprep.subr.mxu0 0.0
        %2539 = vmatpush1.msra.mxu0 0.0
        %2540 = vmatprep.subr.mxu0 0.0
        %2541 = vmatpush1.msra.mxu0 0.0
        %2542 = vmatprep.subr.mxu0 0.0
        %2543 = vmatpush1.msra.mxu0 0.0
        %2544 = vmatprep.subr.mxu0 0.0
        %2545 = vmatpush1.msra.mxu0 0.0
        %2546 = vmatprep.subr.mxu0 0.0
        %2547 = vmatpush1.msra.mxu0 0.0
        %2548 = vmatprep.subr.mxu0 0.0
        %2549 = vmatpush1.msra.mxu0 0.0
        %2550 = vmatprep.subr.mxu0 0.0
        %2551 = vmatpush1.msra.mxu0 0.0
        %2552 = vmatprep.subr.mxu0 0.0
        %2553 = vmatpush1.msra.mxu0 0.0
        %2554 = vmatprep.subr.mxu0 0.0
        %2555 = vmatpush1.msra.mxu0 0.0
        %2556 = vmatprep.subr.mxu0 0.0
        %2557 = vmatpush1.msra.mxu0 0.0
        %2558 = vmatprep.subr.mxu0 0.0
        %2559 = vmatpush1.msra.mxu0 0.0
        %2560 = vmatprep.subr.mxu0 0.0
        %2561 = vmatpush1.msra.mxu0 0.0
        %2562 = vmatprep.subr.mxu0 0.0
        %2563 = vmatpush1.msra.mxu0 0.0
        %2564 = vmatprep.subr.mxu0 0.0
        %2565 = vmatpush1.msra.mxu0 0.0
        %2566 = vmatprep.subr.mxu0 0.0
        %2567 = vmatpush1.msra.mxu0 0.0
        %2568 = vmatprep.subr.mxu0 0.0
        %2569 = vmatpush1.msra.mxu0 0.0
        %2570 = vmatprep.subr.mxu0 0.0
        %2571 = vmatpush1.msra.mxu0 0.0
        %2572 = vmatprep.subr.mxu0 0.0
        %2573 = vmatpush1.msra.mxu0 0.0
        %2574 = vmatprep.subr.mxu0 0.0
        %2575 = vmatpush1.msra.mxu0 0.0
        %2576 = vmatprep.subr.mxu0 0.0
        %2577 = vmatpush1.msra.mxu0 0.0
        %2578 = vmatprep.subr.mxu0 0.0
        %2579 = vmatpush1.msra.mxu0 0.0
        %2580 = vmatprep.subr.mxu0 0.0
        %2581 = vmatpush1.msra.mxu0 0.0
        %2582 = vmatprep.subr.mxu0 0.0
        %2583 = vmatpush1.msra.mxu0 0.0
        %2584 = vmatprep.subr.mxu0 0.0
        %2585 = vmatpush1.msra.mxu0 0.0
        %2586 = vmatprep.subr.mxu0 0.0
        %2587 = vmatpush1.msra.mxu0 0.0
        %2588 = vmatprep.subr.mxu0 0.0
        %2589 = vmatpush1.msra.mxu0 0.0
        %2590 = vmatprep.subr.mxu0 0.0
        %2591 = vmatpush1.msra.mxu0 0.0
        %2592 = vmatprep.subr.mxu0 0.0
        %2593 = vmatpush1.msra.mxu0 0.0
        %2594 = vmatprep.subr.mxu0 0.0
        %2595 = vmatpush1.msra.mxu0 0.0
        %2596 = vmatprep.subr.mxu0 0.0
        %2597 = vmatpush1.msra.mxu0 0.0
        %2598 = vmatprep.subr.mxu0 0.0
        %2599 = vmatpush1.msra.mxu0 0.0
        %2600 = vmatprep.mubr.f32.mxu0 0.0
        %2601 = vmatmul.mubr.f32.gmra.mrb[0].mxu0 %v2534
        %v2602 = vpop.f32.mrb[0].mxu0
        %v2603 = vadd.f32 0.0, %v2602
        %v2604 = vpop.f32.mrb[0].mxu0
        %2605 = vdwg.mxu0
        %v2606 = vsel %vm705, %v2387, -inf
        %2607 = vmax.xlane.f32.xlu0 %v2606
        %v2608 = vpop.xlane.xlu0 %2607
        %v2609 = vsel %vm705, %v2459, -inf
        %2610 = vmax.xlane.f32.xlu0 %v2609
        %v2611 = vpop.xlane.xlu0 %2610
        %v2612 = vsel %vm705, %v2531, -inf
        %2613 = vmax.xlane.f32.xlu0 %v2612
        %v2614 = vpop.xlane.xlu0 %2613
        %v2615 = vsel %vm705, %v2603, -inf
        %2616 = vmax.xlane.f32.xlu0 %v2615
        %v2617 = vpop.xlane.xlu0 %2616
        %v2618 = vsub.f32 %v2387, %v2608
        %v2619 = vsub.f32 %v2459, %v2611
        %v2620 = vsub.f32 %v2531, %v2614
        %v2621 = vsub.f32 %v2603, %v2617
        %v2622 = vmul.f32 %v2618, 1.442695
        %v2623 = vpow.pop %v2622
        %v2624 = vmul.f32 %v2619, 1.442695
        %v2625 = vpow.pop %v2624
        %v2626 = vmul.f32 %v2620, 1.442695
        %v2627 = vpow.pop %v2626
        %v2628 = vmul.f32 %v2621, 1.442695
        %v2629 = vpow.pop %v2628
        %v2630 = vsel %vm705, %v2623, 0.0
        %2631 = vadd.xlane.f32.xlu0 %v2630
        %v2632 = vpop.xlane.xlu0 %2631
        %v2633 = vsel %vm705, %v2625, 0.0
        %2634 = vadd.xlane.f32.xlu0 %v2633
        %v2635 = vpop.xlane.xlu0 %2634
        %v2636 = vsel %vm705, %v2627, 0.0
        %2637 = vadd.xlane.f32.xlu0 %v2636
        %v2638 = vpop.xlane.xlu0 %2637
        %v2639 = vsel %vm705, %v2629, 0.0
        %2640 = vadd.xlane.f32.xlu0 %v2639
        %v2641 = vpop.xlane.xlu0 %2640
        %2642 = vxpose.xlu0.b32.start [1/16] %v2158, 128
        %2643 = vxpose.xlu0.b32.cont [2/16] 0.0, 128
        %2644 = vxpose.xlu0.b32.cont [3/16] 0.0, 128
        %2645 = vxpose.xlu0.b32.cont [4/16] 0.0, 128
        %2646 = vxpose.xlu0.b32.cont [5/16] 0.0, 128
        %2647 = vxpose.xlu0.b32.cont [6/16] 0.0, 128
        %2648 = vxpose.xlu0.b32.cont [7/16] 0.0, 128
        %2649 = vxpose.xlu0.b32.cont [8/16] 0.0, 128
        %2650 = vxpose.xlu0.b32.cont [9/16] 0.0, 128
        %2651 = vxpose.xlu0.b32.cont [10/16] 0.0, 128
        %2652 = vxpose.xlu0.b32.cont [11/16] 0.0, 128
        %2653 = vxpose.xlu0.b32.cont [12/16] 0.0, 128
        %2654 = vxpose.xlu0.b32.cont [13/16] 0.0, 128
        %2655 = vxpose.xlu0.b32.cont [14/16] 0.0, 128
        %2656 = vxpose.xlu0.b32.cont [15/16] 0.0, 128
        %2657 = vxpose.xlu0.b32.end [16/16] 0.0, 128
        %v2658 = vpop.trf.xlu0
        %v2659 = vpop.trf.xlu0
        %v2660 = vpop.trf.xlu0
        %v2661 = vpop.trf.xlu0
        %v2662 = vpop.trf.xlu0
        %v2663 = vpop.trf.xlu0
        %v2664 = vpop.trf.xlu0
        %v2665 = vpop.trf.xlu0
        %v2666 = vpop.trf.xlu0
        %v2667 = vpop.trf.xlu0
        %v2668 = vpop.trf.xlu0
        %v2669 = vpop.trf.xlu0
        %v2670 = vpop.trf.xlu0
        %v2671 = vpop.trf.xlu0
        %v2672 = vpop.trf.xlu0
        %v2673 = vpop.trf.xlu0
        %2674 = vxpose.xlu0.b32.start [1/16] %v2170, 128
        %2675 = vxpose.xlu0.b32.cont [2/16] 0.0, 128
        %2676 = vxpose.xlu0.b32.cont [3/16] 0.0, 128
        %2677 = vxpose.xlu0.b32.cont [4/16] 0.0, 128
        %2678 = vxpose.xlu0.b32.cont [5/16] 0.0, 128
        %2679 = vxpose.xlu0.b32.cont [6/16] 0.0, 128
        %2680 = vxpose.xlu0.b32.cont [7/16] 0.0, 128
        %2681 = vxpose.xlu0.b32.cont [8/16] 0.0, 128
        %2682 = vxpose.xlu0.b32.cont [9/16] 0.0, 128
        %2683 = vxpose.xlu0.b32.cont [10/16] 0.0, 128
        %2684 = vxpose.xlu0.b32.cont [11/16] 0.0, 128
        %2685 = vxpose.xlu0.b32.cont [12/16] 0.0, 128
        %2686 = vxpose.xlu0.b32.cont [13/16] 0.0, 128
        %2687 = vxpose.xlu0.b32.cont [14/16] 0.0, 128
        %2688 = vxpose.xlu0.b32.cont [15/16] 0.0, 128
        %2689 = vxpose.xlu0.b32.end [16/16] 0.0, 128
        %v2690 = vpop.trf.xlu0
        %v2691 = vpop.trf.xlu0
        %v2692 = vpop.trf.xlu0
        %v2693 = vpop.trf.xlu0
        %v2694 = vpop.trf.xlu0
        %v2695 = vpop.trf.xlu0
        %v2696 = vpop.trf.xlu0
        %v2697 = vpop.trf.xlu0
        %v2698 = vpop.trf.xlu0
        %v2699 = vpop.trf.xlu0
        %v2700 = vpop.trf.xlu0
        %v2701 = vpop.trf.xlu0
        %v2702 = vpop.trf.xlu0
        %v2703 = vpop.trf.xlu0
        %v2704 = vpop.trf.xlu0
        %v2705 = vpop.trf.xlu0
        %2706 = vxpose.xlu0.b32.start [1/16] %v2173, 128
        %2707 = vxpose.xlu0.b32.cont [2/16] 0.0, 128
        %2708 = vxpose.xlu0.b32.cont [3/16] 0.0, 128
        %2709 = vxpose.xlu0.b32.cont [4/16] 0.0, 128
        %2710 = vxpose.xlu0.b32.cont [5/16] 0.0, 128
        %2711 = vxpose.xlu0.b32.cont [6/16] 0.0, 128
        %2712 = vxpose.xlu0.b32.cont [7/16] 0.0, 128
        %2713 = vxpose.xlu0.b32.cont [8/16] 0.0, 128
        %2714 = vxpose.xlu0.b32.cont [9/16] 0.0, 128
        %2715 = vxpose.xlu0.b32.cont [10/16] 0.0, 128
        %2716 = vxpose.xlu0.b32.cont [11/16] 0.0, 128
        %2717 = vxpose.xlu0.b32.cont [12/16] 0.0, 128
        %2718 = vxpose.xlu0.b32.cont [13/16] 0.0, 128
        %2719 = vxpose.xlu0.b32.cont [14/16] 0.0, 128
        %2720 = vxpose.xlu0.b32.cont [15/16] 0.0, 128
        %2721 = vxpose.xlu0.b32.end [16/16] 0.0, 128
        %v2722 = vpop.trf.xlu0
        %v2723 = vpop.trf.xlu0
        %v2724 = vpop.trf.xlu0
        %v2725 = vpop.trf.xlu0
        %v2726 = vpop.trf.xlu0
        %v2727 = vpop.trf.xlu0
        %v2728 = vpop.trf.xlu0
        %v2729 = vpop.trf.xlu0
        %v2730 = vpop.trf.xlu0
        %v2731 = vpop.trf.xlu0
        %v2732 = vpop.trf.xlu0
        %v2733 = vpop.trf.xlu0
        %v2734 = vpop.trf.xlu0
        %v2735 = vpop.trf.xlu0
        %v2736 = vpop.trf.xlu0
        %v2737 = vpop.trf.xlu0
        %2738 = vxpose.xlu0.b32.start [1/16] %v2176, 128
        %2739 = vxpose.xlu0.b32.cont [2/16] 0.0, 128
        %2740 = vxpose.xlu0.b32.cont [3/16] 0.0, 128
        %2741 = vxpose.xlu0.b32.cont [4/16] 0.0, 128
        %2742 = vxpose.xlu0.b32.cont [5/16] 0.0, 128
        %2743 = vxpose.xlu0.b32.cont [6/16] 0.0, 128
        %2744 = vxpose.xlu0.b32.cont [7/16] 0.0, 128
        %2745 = vxpose.xlu0.b32.cont [8/16] 0.0, 128
        %2746 = vxpose.xlu0.b32.cont [9/16] 0.0, 128
        %2747 = vxpose.xlu0.b32.cont [10/16] 0.0, 128
        %2748 = vxpose.xlu0.b32.cont [11/16] 0.0, 128
        %2749 = vxpose.xlu0.b32.cont [12/16] 0.0, 128
        %2750 = vxpose.xlu0.b32.cont [13/16] 0.0, 128
        %2751 = vxpose.xlu0.b32.cont [14/16] 0.0, 128
        %2752 = vxpose.xlu0.b32.cont [15/16] 0.0, 128
        %2753 = vxpose.xlu0.b32.end [16/16] 0.0, 128
        %v2754 = vpop.trf.xlu0
        %v2755 = vpop.trf.xlu0
        %v2756 = vpop.trf.xlu0
        %v2757 = vpop.trf.xlu0
        %v2758 = vpop.trf.xlu0
        %v2759 = vpop.trf.xlu0
        %v2760 = vpop.trf.xlu0
        %v2761 = vpop.trf.xlu0
        %v2762 = vpop.trf.xlu0
        %v2763 = vpop.trf.xlu0
        %v2764 = vpop.trf.xlu0
        %v2765 = vpop.trf.xlu0
        %v2766 = vpop.trf.xlu0
        %v2767 = vpop.trf.xlu0
        %v2768 = vpop.trf.xlu0
        %v2769 = vpop.trf.xlu0
        %v2771 = vsel %vm705, %v2658, 0
        %v2774 = vsel %vm705, %v2623, 0
        %2776 = vmatprep.subr.mxu0 0.0
        %2777 = vmatpush1.xpose.msra.mxu0 %v2774
        %2778 = vmatprep.subr.mxu0 0.0
        %2779 = vmatpush1.xpose.msra.mxu0 0.0
        %2780 = vmatprep.subr.mxu0 0.0
        %2781 = vmatpush1.xpose.msra.mxu0 0.0
        %2782 = vmatprep.subr.mxu0 0.0
        %2783 = vmatpush1.xpose.msra.mxu0 0.0
        %2784 = vmatprep.subr.mxu0 0.0
        %2785 = vmatpush1.xpose.msra.mxu0 0.0
        %2786 = vmatprep.subr.mxu0 0.0
        %2787 = vmatpush1.xpose.msra.mxu0 0.0
        %2788 = vmatprep.subr.mxu0 0.0
        %2789 = vmatpush1.xpose.msra.mxu0 0.0
        %2790 = vmatprep.subr.mxu0 0.0
        %2791 = vmatpush1.xpose.msra.mxu0 0.0
        %2792 = vmatprep.subr.mxu0 0.0
        %2793 = vmatpush1.xpose.msra.mxu0 0.0
        %2794 = vmatprep.subr.mxu0 0.0
        %2795 = vmatpush1.xpose.msra.mxu0 0.0
        %2796 = vmatprep.subr.mxu0 0.0
        %2797 = vmatpush1.xpose.msra.mxu0 0.0
        %2798 = vmatprep.subr.mxu0 0.0
        %2799 = vmatpush1.xpose.msra.mxu0 0.0
        %2800 = vmatprep.subr.mxu0 0.0
        %2801 = vmatpush1.xpose.msra.mxu0 0.0
        %2802 = vmatprep.subr.mxu0 0.0
        %2803 = vmatpush1.xpose.msra.mxu0 0.0
        %2804 = vmatprep.subr.mxu0 0.0
        %2805 = vmatpush1.xpose.msra.mxu0 0.0
        %2806 = vmatprep.subr.mxu0 0.0
        %2807 = vmatpush1.xpose.msra.mxu0 0.0
        %2808 = vmatprep.subr.mxu0 0.0
        %2809 = vmatpush1.xpose.msra.mxu0 0.0
        %2810 = vmatprep.subr.mxu0 0.0
        %2811 = vmatpush1.xpose.msra.mxu0 0.0
        %2812 = vmatprep.subr.mxu0 0.0
        %2813 = vmatpush1.xpose.msra.mxu0 0.0
        %2814 = vmatprep.subr.mxu0 0.0
        %2815 = vmatpush1.xpose.msra.mxu0 0.0
        %2816 = vmatprep.subr.mxu0 0.0
        %2817 = vmatpush1.xpose.msra.mxu0 0.0
        %2818 = vmatprep.subr.mxu0 0.0
        %2819 = vmatpush1.xpose.msra.mxu0 0.0
        %2820 = vmatprep.subr.mxu0 0.0
        %2821 = vmatpush1.xpose.msra.mxu0 0.0
        %2822 = vmatprep.subr.mxu0 0.0
        %2823 = vmatpush1.xpose.msra.mxu0 0.0
        %2824 = vmatprep.subr.mxu0 0.0
        %2825 = vmatpush1.xpose.msra.mxu0 0.0
        %2826 = vmatprep.subr.mxu0 0.0
        %2827 = vmatpush1.xpose.msra.mxu0 0.0
        %2828 = vmatprep.subr.mxu0 0.0
        %2829 = vmatpush1.xpose.msra.mxu0 0.0
        %2830 = vmatprep.subr.mxu0 0.0
        %2831 = vmatpush1.xpose.msra.mxu0 0.0
        %2832 = vmatprep.subr.mxu0 0.0
        %2833 = vmatpush1.xpose.msra.mxu0 0.0
        %2834 = vmatprep.subr.mxu0 0.0
        %2835 = vmatpush1.xpose.msra.mxu0 0.0
        %2836 = vmatprep.subr.mxu0 0.0
        %2837 = vmatpush1.xpose.msra.mxu0 0.0
        %2838 = vmatprep.subr.mxu0 0.0
        %2839 = vmatpush1.xpose.msra.mxu0 0.0
        %2840 = vmatprep.mubr.f32.mxu0 0.0
        %2841 = vmatmul.mubr.f32.gmra.mrb[0].mxu0 %v2771
        %v2842 = vpop.f32.mrb[0].mxu0
        %v2843 = vadd.f32 0.0, %v2842
        %v2844 = vpop.f32.mrb[0].mxu0
        %2845 = vdwg.mxu0
        %v2847 = vsel %vm705, %v2690, 0
        %v2850 = vsel %vm705, %v2625, 0
        %2852 = vmatprep.subr.mxu0 0.0
        %2853 = vmatpush1.xpose.msra.mxu0 %v2850
        %2854 = vmatprep.subr.mxu0 0.0
        %2855 = vmatpush1.xpose.msra.mxu0 0.0
        %2856 = vmatprep.subr.mxu0 0.0
        %2857 = vmatpush1.xpose.msra.mxu0 0.0
        %2858 = vmatprep.subr.mxu0 0.0
        %2859 = vmatpush1.xpose.msra.mxu0 0.0
        %2860 = vmatprep.subr.mxu0 0.0
        %2861 = vmatpush1.xpose.msra.mxu0 0.0
        %2862 = vmatprep.subr.mxu0 0.0
        %2863 = vmatpush1.xpose.msra.mxu0 0.0
        %2864 = vmatprep.subr.mxu0 0.0
        %2865 = vmatpush1.xpose.msra.mxu0 0.0
        %2866 = vmatprep.subr.mxu0 0.0
        %2867 = vmatpush1.xpose.msra.mxu0 0.0
        %2868 = vmatprep.subr.mxu0 0.0
        %2869 = vmatpush1.xpose.msra.mxu0 0.0
        %2870 = vmatprep.subr.mxu0 0.0
        %2871 = vmatpush1.xpose.msra.mxu0 0.0
        %2872 = vmatprep.subr.mxu0 0.0
        %2873 = vmatpush1.xpose.msra.mxu0 0.0
        %2874 = vmatprep.subr.mxu0 0.0
        %2875 = vmatpush1.xpose.msra.mxu0 0.0
        %2876 = vmatprep.subr.mxu0 0.0
        %2877 = vmatpush1.xpose.msra.mxu0 0.0
        %2878 = vmatprep.subr.mxu0 0.0
        %2879 = vmatpush1.xpose.msra.mxu0 0.0
        %2880 = vmatprep.subr.mxu0 0.0
        %2881 = vmatpush1.xpose.msra.mxu0 0.0
        %2882 = vmatprep.subr.mxu0 0.0
        %2883 = vmatpush1.xpose.msra.mxu0 0.0
        %2884 = vmatprep.subr.mxu0 0.0
        %2885 = vmatpush1.xpose.msra.mxu0 0.0
        %2886 = vmatprep.subr.mxu0 0.0
        %2887 = vmatpush1.xpose.msra.mxu0 0.0
        %2888 = vmatprep.subr.mxu0 0.0
        %2889 = vmatpush1.xpose.msra.mxu0 0.0
        %2890 = vmatprep.subr.mxu0 0.0
        %2891 = vmatpush1.xpose.msra.mxu0 0.0
        %2892 = vmatprep.subr.mxu0 0.0
        %2893 = vmatpush1.xpose.msra.mxu0 0.0
        %2894 = vmatprep.subr.mxu0 0.0
        %2895 = vmatpush1.xpose.msra.mxu0 0.0
        %2896 = vmatprep.subr.mxu0 0.0
        %2897 = vmatpush1.xpose.msra.mxu0 0.0
        %2898 = vmatprep.subr.mxu0 0.0
        %2899 = vmatpush1.xpose.msra.mxu0 0.0
        %2900 = vmatprep.subr.mxu0 0.0
        %2901 = vmatpush1.xpose.msra.mxu0 0.0
        %2902 = vmatprep.subr.mxu0 0.0
        %2903 = vmatpush1.xpose.msra.mxu0 0.0
        %2904 = vmatprep.subr.mxu0 0.0
        %2905 = vmatpush1.xpose.msra.mxu0 0.0
        %2906 = vmatprep.subr.mxu0 0.0
        %2907 = vmatpush1.xpose.msra.mxu0 0.0
        %2908 = vmatprep.subr.mxu0 0.0
        %2909 = vmatpush1.xpose.msra.mxu0 0.0
        %2910 = vmatprep.subr.mxu0 0.0
        %2911 = vmatpush1.xpose.msra.mxu0 0.0
        %2912 = vmatprep.subr.mxu0 0.0
        %2913 = vmatpush1.xpose.msra.mxu0 0.0
        %2914 = vmatprep.subr.mxu0 0.0
        %2915 = vmatpush1.xpose.msra.mxu0 0.0
        %2916 = vmatprep.mubr.f32.mxu0 0.0
        %2917 = vmatmul.mubr.f32.gmra.mrb[0].mxu0 %v2847
        %v2918 = vpop.f32.mrb[0].mxu0
        %v2919 = vadd.f32 0.0, %v2918
        %v2920 = vpop.f32.mrb[0].mxu0
        %2921 = vdwg.mxu0
        %v2923 = vsel %vm705, %v2722, 0
        %v2926 = vsel %vm705, %v2627, 0
        %2928 = vmatprep.subr.mxu0 0.0
        %2929 = vmatpush1.xpose.msra.mxu0 %v2926
        %2930 = vmatprep.subr.mxu0 0.0
        %2931 = vmatpush1.xpose.msra.mxu0 0.0
        %2932 = vmatprep.subr.mxu0 0.0
        %2933 = vmatpush1.xpose.msra.mxu0 0.0
        %2934 = vmatprep.subr.mxu0 0.0
        %2935 = vmatpush1.xpose.msra.mxu0 0.0
        %2936 = vmatprep.subr.mxu0 0.0
        %2937 = vmatpush1.xpose.msra.mxu0 0.0
        %2938 = vmatprep.subr.mxu0 0.0
        %2939 = vmatpush1.xpose.msra.mxu0 0.0
        %2940 = vmatprep.subr.mxu0 0.0
        %2941 = vmatpush1.xpose.msra.mxu0 0.0
        %2942 = vmatprep.subr.mxu0 0.0
        %2943 = vmatpush1.xpose.msra.mxu0 0.0
        %2944 = vmatprep.subr.mxu0 0.0
        %2945 = vmatpush1.xpose.msra.mxu0 0.0
        %2946 = vmatprep.subr.mxu0 0.0
        %2947 = vmatpush1.xpose.msra.mxu0 0.0
        %2948 = vmatprep.subr.mxu0 0.0
        %2949 = vmatpush1.xpose.msra.mxu0 0.0
        %2950 = vmatprep.subr.mxu0 0.0
        %2951 = vmatpush1.xpose.msra.mxu0 0.0
        %2952 = vmatprep.subr.mxu0 0.0
        %2953 = vmatpush1.xpose.msra.mxu0 0.0
        %2954 = vmatprep.subr.mxu0 0.0
        %2955 = vmatpush1.xpose.msra.mxu0 0.0
        %2956 = vmatprep.subr.mxu0 0.0
        %2957 = vmatpush1.xpose.msra.mxu0 0.0
        %2958 = vmatprep.subr.mxu0 0.0
        %2959 = vmatpush1.xpose.msra.mxu0 0.0
        %2960 = vmatprep.subr.mxu0 0.0
        %2961 = vmatpush1.xpose.msra.mxu0 0.0
        %2962 = vmatprep.subr.mxu0 0.0
        %2963 = vmatpush1.xpose.msra.mxu0 0.0
        %2964 = vmatprep.subr.mxu0 0.0
        %2965 = vmatpush1.xpose.msra.mxu0 0.0
        %2966 = vmatprep.subr.mxu0 0.0
        %2967 = vmatpush1.xpose.msra.mxu0 0.0
        %2968 = vmatprep.subr.mxu0 0.0
        %2969 = vmatpush1.xpose.msra.mxu0 0.0
        %2970 = vmatprep.subr.mxu0 0.0
        %2971 = vmatpush1.xpose.msra.mxu0 0.0
        %2972 = vmatprep.subr.mxu0 0.0
        %2973 = vmatpush1.xpose.msra.mxu0 0.0
        %2974 = vmatprep.subr.mxu0 0.0
        %2975 = vmatpush1.xpose.msra.mxu0 0.0
        %2976 = vmatprep.subr.mxu0 0.0
        %2977 = vmatpush1.xpose.msra.mxu0 0.0
        %2978 = vmatprep.subr.mxu0 0.0
        %2979 = vmatpush1.xpose.msra.mxu0 0.0
        %2980 = vmatprep.subr.mxu0 0.0
        %2981 = vmatpush1.xpose.msra.mxu0 0.0
        %2982 = vmatprep.subr.mxu0 0.0
        %2983 = vmatpush1.xpose.msra.mxu0 0.0
        %2984 = vmatprep.subr.mxu0 0.0
        %2985 = vmatpush1.xpose.msra.mxu0 0.0
        %2986 = vmatprep.subr.mxu0 0.0
        %2987 = vmatpush1.xpose.msra.mxu0 0.0
        %2988 = vmatprep.subr.mxu0 0.0
        %2989 = vmatpush1.xpose.msra.mxu0 0.0
        %2990 = vmatprep.subr.mxu0 0.0
        %2991 = vmatpush1.xpose.msra.mxu0 0.0
        %2992 = vmatprep.mubr.f32.mxu0 0.0
        %2993 = vmatmul.mubr.f32.gmra.mrb[0].mxu0 %v2923
        %v2994 = vpop.f32.mrb[0].mxu0
        %v2995 = vadd.f32 0.0, %v2994
        %v2996 = vpop.f32.mrb[0].mxu0
        %2997 = vdwg.mxu0
        %v2999 = vsel %vm705, %v2754, 0
        %v3002 = vsel %vm705, %v2629, 0
        %3004 = vmatprep.subr.mxu0 0.0
        %3005 = vmatpush1.xpose.msra.mxu0 %v3002
        %3006 = vmatprep.subr.mxu0 0.0
        %3007 = vmatpush1.xpose.msra.mxu0 0.0
        %3008 = vmatprep.subr.mxu0 0.0
        %3009 = vmatpush1.xpose.msra.mxu0 0.0
        %3010 = vmatprep.subr.mxu0 0.0
        %3011 = vmatpush1.xpose.msra.mxu0 0.0
        %3012 = vmatprep.subr.mxu0 0.0
        %3013 = vmatpush1.xpose.msra.mxu0 0.0
        %3014 = vmatprep.subr.mxu0 0.0
        %3015 = vmatpush1.xpose.msra.mxu0 0.0
        %3016 = vmatprep.subr.mxu0 0.0
        %3017 = vmatpush1.xpose.msra.mxu0 0.0
        %3018 = vmatprep.subr.mxu0 0.0
        %3019 = vmatpush1.xpose.msra.mxu0 0.0
        %3020 = vmatprep.subr.mxu0 0.0
        %3021 = vmatpush1.xpose.msra.mxu0 0.0
        %3022 = vmatprep.subr.mxu0 0.0
        %3023 = vmatpush1.xpose.msra.mxu0 0.0
        %3024 = vmatprep.subr.mxu0 0.0
        %3025 = vmatpush1.xpose.msra.mxu0 0.0
        %3026 = vmatprep.subr.mxu0 0.0
        %3027 = vmatpush1.xpose.msra.mxu0 0.0
        %3028 = vmatprep.subr.mxu0 0.0
        %3029 = vmatpush1.xpose.msra.mxu0 0.0
        %3030 = vmatprep.subr.mxu0 0.0
        %3031 = vmatpush1.xpose.msra.mxu0 0.0
        %3032 = vmatprep.subr.mxu0 0.0
        %3033 = vmatpush1.xpose.msra.mxu0 0.0
        %3034 = vmatprep.subr.mxu0 0.0
        %3035 = vmatpush1.xpose.msra.mxu0 0.0
        %3036 = vmatprep.subr.mxu0 0.0
        %3037 = vmatpush1.xpose.msra.mxu0 0.0
        %3038 = vmatprep.subr.mxu0 0.0
        %3039 = vmatpush1.xpose.msra.mxu0 0.0
        %3040 = vmatprep.subr.mxu0 0.0
        %3041 = vmatpush1.xpose.msra.mxu0 0.0
        %3042 = vmatprep.subr.mxu0 0.0
        %3043 = vmatpush1.xpose.msra.mxu0 0.0
        %3044 = vmatprep.subr.mxu0 0.0
        %3045 = vmatpush1.xpose.msra.mxu0 0.0
        %3046 = vmatprep.subr.mxu0 0.0
        %3047 = vmatpush1.xpose.msra.mxu0 0.0
        %3048 = vmatprep.subr.mxu0 0.0
        %3049 = vmatpush1.xpose.msra.mxu0 0.0
        %3050 = vmatprep.subr.mxu0 0.0
        %3051 = vmatpush1.xpose.msra.mxu0 0.0
        %3052 = vmatprep.subr.mxu0 0.0
        %3053 = vmatpush1.xpose.msra.mxu0 0.0
        %3054 = vmatprep.subr.mxu0 0.0
        %3055 = vmatpush1.xpose.msra.mxu0 0.0
        %3056 = vmatprep.subr.mxu0 0.0
        %3057 = vmatpush1.xpose.msra.mxu0 0.0
        %3058 = vmatprep.subr.mxu0 0.0
        %3059 = vmatpush1.xpose.msra.mxu0 0.0
        %3060 = vmatprep.subr.mxu0 0.0
        %3061 = vmatpush1.xpose.msra.mxu0 0.0
        %3062 = vmatprep.subr.mxu0 0.0
        %3063 = vmatpush1.xpose.msra.mxu0 0.0
        %3064 = vmatprep.subr.mxu0 0.0
        %3065 = vmatpush1.xpose.msra.mxu0 0.0
        %3066 = vmatprep.subr.mxu0 0.0
        %3067 = vmatpush1.xpose.msra.mxu0 0.0
        %3068 = vmatprep.mubr.f32.mxu0 0.0
        %3069 = vmatmul.mubr.f32.gmra.mrb[0].mxu0 %v2999
        %v3070 = vpop.f32.mrb[0].mxu0
        %v3071 = vadd.f32 0.0, %v3070
        %v3072 = vpop.f32.mrb[0].mxu0
        %3073 = vdwg.mxu0
        %3074 = vxpose.xlu0.b32.start [1/16] %v2843, 128
        %3075 = vxpose.xlu0.b32.cont [2/16] 0.0, 128
        %3076 = vxpose.xlu0.b32.cont [3/16] 0.0, 128
        %3077 = vxpose.xlu0.b32.cont [4/16] 0.0, 128
        %3078 = vxpose.xlu0.b32.cont [5/16] 0.0, 128
        %3079 = vxpose.xlu0.b32.cont [6/16] 0.0, 128
        %3080 = vxpose.xlu0.b32.cont [7/16] 0.0, 128
        %3081 = vxpose.xlu0.b32.cont [8/16] 0.0, 128
        %3082 = vxpose.xlu0.b32.cont [9/16] 0.0, 128
        %3083 = vxpose.xlu0.b32.cont [10/16] 0.0, 128
        %3084 = vxpose.xlu0.b32.cont [11/16] 0.0, 128
        %3085 = vxpose.xlu0.b32.cont [12/16] 0.0, 128
        %3086 = vxpose.xlu0.b32.cont [13/16] 0.0, 128
        %3087 = vxpose.xlu0.b32.cont [14/16] 0.0, 128
        %3088 = vxpose.xlu0.b32.cont [15/16] 0.0, 128
        %3089 = vxpose.xlu0.b32.end [16/16] 0.0, 128
        %v3090 = vpop.trf.xlu0
        %v3091 = vpop.trf.xlu0
        %v3092 = vpop.trf.xlu0
        %v3093 = vpop.trf.xlu0
        %v3094 = vpop.trf.xlu0
        %v3095 = vpop.trf.xlu0
        %v3096 = vpop.trf.xlu0
        %v3097 = vpop.trf.xlu0
        %v3098 = vpop.trf.xlu0
        %v3099 = vpop.trf.xlu0
        %v3100 = vpop.trf.xlu0
        %v3101 = vpop.trf.xlu0
        %v3102 = vpop.trf.xlu0
        %v3103 = vpop.trf.xlu0
        %v3104 = vpop.trf.xlu0
        %v3105 = vpop.trf.xlu0
        %3106 = vxpose.xlu0.b32.start [1/16] %v2919, 128
        %3107 = vxpose.xlu0.b32.cont [2/16] 0.0, 128
        %3108 = vxpose.xlu0.b32.cont [3/16] 0.0, 128
        %3109 = vxpose.xlu0.b32.cont [4/16] 0.0, 128
        %3110 = vxpose.xlu0.b32.cont [5/16] 0.0, 128
        %3111 = vxpose.xlu0.b32.cont [6/16] 0.0, 128
        %3112 = vxpose.xlu0.b32.cont [7/16] 0.0, 128
        %3113 = vxpose.xlu0.b32.cont [8/16] 0.0, 128
        %3114 = vxpose.xlu0.b32.cont [9/16] 0.0, 128
        %3115 = vxpose.xlu0.b32.cont [10/16] 0.0, 128
        %3116 = vxpose.xlu0.b32.cont [11/16] 0.0, 128
        %3117 = vxpose.xlu0.b32.cont [12/16] 0.0, 128
        %3118 = vxpose.xlu0.b32.cont [13/16] 0.0, 128
        %3119 = vxpose.xlu0.b32.cont [14/16] 0.0, 128
        %3120 = vxpose.xlu0.b32.cont [15/16] 0.0, 128
        %3121 = vxpose.xlu0.b32.end [16/16] 0.0, 128
        %v3122 = vpop.trf.xlu0
        %v3123 = vpop.trf.xlu0
        %v3124 = vpop.trf.xlu0
        %v3125 = vpop.trf.xlu0
        %v3126 = vpop.trf.xlu0
        %v3127 = vpop.trf.xlu0
        %v3128 = vpop.trf.xlu0
        %v3129 = vpop.trf.xlu0
        %v3130 = vpop.trf.xlu0
        %v3131 = vpop.trf.xlu0
        %v3132 = vpop.trf.xlu0
        %v3133 = vpop.trf.xlu0
        %v3134 = vpop.trf.xlu0
        %v3135 = vpop.trf.xlu0
        %v3136 = vpop.trf.xlu0
        %v3137 = vpop.trf.xlu0
        %3138 = vxpose.xlu0.b32.start [1/16] %v2995, 128
        %3139 = vxpose.xlu0.b32.cont [2/16] 0.0, 128
        %3140 = vxpose.xlu0.b32.cont [3/16] 0.0, 128
        %3141 = vxpose.xlu0.b32.cont [4/16] 0.0, 128
        %3142 = vxpose.xlu0.b32.cont [5/16] 0.0, 128
        %3143 = vxpose.xlu0.b32.cont [6/16] 0.0, 128
        %3144 = vxpose.xlu0.b32.cont [7/16] 0.0, 128
        %3145 = vxpose.xlu0.b32.cont [8/16] 0.0, 128
        %3146 = vxpose.xlu0.b32.cont [9/16] 0.0, 128
        %3147 = vxpose.xlu0.b32.cont [10/16] 0.0, 128
        %3148 = vxpose.xlu0.b32.cont [11/16] 0.0, 128
        %3149 = vxpose.xlu0.b32.cont [12/16] 0.0, 128
        %3150 = vxpose.xlu0.b32.cont [13/16] 0.0, 128
        %3151 = vxpose.xlu0.b32.cont [14/16] 0.0, 128
        %3152 = vxpose.xlu0.b32.cont [15/16] 0.0, 128
        %3153 = vxpose.xlu0.b32.end [16/16] 0.0, 128
        %v3154 = vpop.trf.xlu0
        %v3155 = vpop.trf.xlu0
        %v3156 = vpop.trf.xlu0
        %v3157 = vpop.trf.xlu0
        %v3158 = vpop.trf.xlu0
        %v3159 = vpop.trf.xlu0
        %v3160 = vpop.trf.xlu0
        %v3161 = vpop.trf.xlu0
        %v3162 = vpop.trf.xlu0
        %v3163 = vpop.trf.xlu0
        %v3164 = vpop.trf.xlu0
        %v3165 = vpop.trf.xlu0
        %v3166 = vpop.trf.xlu0
        %v3167 = vpop.trf.xlu0
        %v3168 = vpop.trf.xlu0
        %v3169 = vpop.trf.xlu0
        %3170 = vxpose.xlu0.b32.start [1/16] %v3071, 128
        %3171 = vxpose.xlu0.b32.cont [2/16] 0.0, 128
        %3172 = vxpose.xlu0.b32.cont [3/16] 0.0, 128
        %3173 = vxpose.xlu0.b32.cont [4/16] 0.0, 128
        %3174 = vxpose.xlu0.b32.cont [5/16] 0.0, 128
        %3175 = vxpose.xlu0.b32.cont [6/16] 0.0, 128
        %3176 = vxpose.xlu0.b32.cont [7/16] 0.0, 128
        %3177 = vxpose.xlu0.b32.cont [8/16] 0.0, 128
        %3178 = vxpose.xlu0.b32.cont [9/16] 0.0, 128
        %3179 = vxpose.xlu0.b32.cont [10/16] 0.0, 128
        %3180 = vxpose.xlu0.b32.cont [11/16] 0.0, 128
        %3181 = vxpose.xlu0.b32.cont [12/16] 0.0, 128
        %3182 = vxpose.xlu0.b32.cont [13/16] 0.0, 128
        %3183 = vxpose.xlu0.b32.cont [14/16] 0.0, 128
        %3184 = vxpose.xlu0.b32.cont [15/16] 0.0, 128
        %3185 = vxpose.xlu0.b32.end [16/16] 0.0, 128
        %v3186 = vpop.trf.xlu0
        %v3187 = vpop.trf.xlu0
        %v3188 = vpop.trf.xlu0
        %v3189 = vpop.trf.xlu0
        %v3190 = vpop.trf.xlu0
        %v3191 = vpop.trf.xlu0
        %v3192 = vpop.trf.xlu0
        %v3193 = vpop.trf.xlu0
        %v3194 = vpop.trf.xlu0
        %v3195 = vpop.trf.xlu0
        %v3196 = vpop.trf.xlu0
        %v3197 = vpop.trf.xlu0
        %v3198 = vpop.trf.xlu0
        %v3199 = vpop.trf.xlu0
        %v3200 = vpop.trf.xlu0
        %v3201 = vpop.trf.xlu0
        %v3202 = vcombine.low %v3090, %v3154
        %v3203 = vcombine.high %v3090, %v3154
        %v3205 = vunpack.c.l.s4 1983009808
        %v3206 = vunpack.c.0.s8 %v3205
        %v3207 = vlaneseq
        %v3208 = vshrl.u32 %v3207, 7
        %v3209 = vsub.s32 %v3206, %v3208
        %v3210 = vrot.slane %v3202, %v3209
        %v3212 = vunpack.c.l.s4 1983009808
        %v3213 = vunpack.c.0.s8 %v3212
        %v3214 = vlaneseq
        %v3215 = vshrl.u32 %v3214, 7
        %v3216 = vsub.s32 %v3213, %v3215
        %v3217 = vrot.slane %v3203, %v3216
        %v3218 = vcombine.low %v3122, %v3186
        %v3219 = vcombine.high %v3122, %v3186
        %v3221 = vunpack.c.l.s4 1983009808
        %v3222 = vunpack.c.0.s8 %v3221
        %v3223 = vlaneseq
        %v3224 = vshrl.u32 %v3223, 7
        %v3225 = vsub.s32 %v3222, %v3224
        %v3226 = vrot.slane %v3218, %v3225
        %v3228 = vunpack.c.l.s4 1983009808
        %v3229 = vunpack.c.0.s8 %v3228
        %v3230 = vlaneseq
        %v3231 = vshrl.u32 %v3230, 7
        %v3232 = vsub.s32 %v3229, %v3231
        %v3233 = vrot.slane %v3219, %v3232
        %v3234 = vcombine.low %v3210, %v3226
        %v3235 = vcombine.high %v3210, %v3226
        %v3237 = vunpack.c.l.s4 1934713408
        %v3238 = vunpack.c.0.s8 %v3237
        %v3239 = vlaneseq
        %v3240 = vshrl.u32 %v3239, 7
        %v3241 = vsub.s32 %v3238, %v3240
        %v3242 = vrot.slane %v3234, %v3241
        %v3244 = vunpack.c.l.s4 1934713408
        %v3245 = vunpack.c.0.s8 %v3244
        %v3246 = vlaneseq
        %v3247 = vshrl.u32 %v3246, 7
        %v3248 = vsub.s32 %v3245, %v3247
        %v3249 = vrot.slane %v3235, %v3248
        %v3250 = vcombine.low %v3217, %v3233
        %v3251 = vcombine.high %v3217, %v3233
        %v3253 = vunpack.c.l.s4 1934713408
        %v3254 = vunpack.c.0.s8 %v3253
        %v3255 = vlaneseq
        %v3256 = vshrl.u32 %v3255, 7
        %v3257 = vsub.s32 %v3254, %v3256
        %v3258 = vrot.slane %v3250, %v3257
        %v3260 = vunpack.c.l.s4 1934713408
        %v3261 = vunpack.c.0.s8 %v3260
        %v3262 = vlaneseq
        %v3263 = vshrl.u32 %v3262, 7
        %v3264 = vsub.s32 %v3261, %v3263
        %v3265 = vrot.slane %v3251, %v3264
        %v3266 = vcombine.high %v3242, 0.0
        %v3267 = vcombine.high %v3249, 0.0
        %v3268 = vcombine.high %v3258, 0.0
        %v3269 = vcombine.high %v3265, 0.0
        %v3270 = vrcp.pop %v2632
        %v3271 = vrcp.pop %v2635
        %v3272 = vrcp.pop %v2638
        %v3273 = vrcp.pop %v2641
        %v3274 = vcombine.low %v3270, %v3272
        %v3275 = vcombine.high %v3270, %v3272
        %v3277 = vunpack.c.l.s4 1983009808
        %v3278 = vunpack.c.0.s8 %v3277
        %v3279 = vlaneseq
        %v3280 = vshrl.u32 %v3279, 7
        %v3281 = vsub.s32 %v3278, %v3280
        %v3282 = vrot.slane %v3274, %v3281
        %v3284 = vunpack.c.l.s4 1983009808
        %v3285 = vunpack.c.0.s8 %v3284
        %v3286 = vlaneseq
        %v3287 = vshrl.u32 %v3286, 7
        %v3288 = vsub.s32 %v3285, %v3287
        %v3289 = vrot.slane %v3275, %v3288
        %v3290 = vcombine.low %v3271, %v3273
        %v3291 = vcombine.high %v3271, %v3273
        %v3293 = vunpack.c.l.s4 1983009808
        %v3294 = vunpack.c.0.s8 %v3293
        %v3295 = vlaneseq
        %v3296 = vshrl.u32 %v3295, 7
        %v3297 = vsub.s32 %v3294, %v3296
        %v3298 = vrot.slane %v3290, %v3297
        %v3300 = vunpack.c.l.s4 1983009808
        %v3301 = vunpack.c.0.s8 %v3300
        %v3302 = vlaneseq
        %v3303 = vshrl.u32 %v3302, 7
        %v3304 = vsub.s32 %v3301, %v3303
        %v3305 = vrot.slane %v3291, %v3304
        %v3306 = vcombine.low %v3282, %v3298
        %v3307 = vcombine.high %v3282, %v3298
        %v3309 = vunpack.c.l.s4 1934713408
        %v3310 = vunpack.c.0.s8 %v3309
        %v3311 = vlaneseq
        %v3312 = vshrl.u32 %v3311, 7
        %v3313 = vsub.s32 %v3310, %v3312
        %v3314 = vrot.slane %v3306, %v3313
        %v3316 = vunpack.c.l.s4 1934713408
        %v3317 = vunpack.c.0.s8 %v3316
        %v3318 = vlaneseq
        %v3319 = vshrl.u32 %v3318, 7
        %v3320 = vsub.s32 %v3317, %v3319
        %v3321 = vrot.slane %v3307, %v3320
        %v3322 = vcombine.low %v3289, %v3305
        %v3323 = vcombine.high %v3289, %v3305
        %v3325 = vunpack.c.l.s4 1934713408
        %v3326 = vunpack.c.0.s8 %v3325
        %v3327 = vlaneseq
        %v3328 = vshrl.u32 %v3327, 7
        %v3329 = vsub.s32 %v3326, %v3328
        %v3330 = vrot.slane %v3322, %v3329
        %v3332 = vunpack.c.l.s4 1934713408
        %v3333 = vunpack.c.0.s8 %v3332
        %v3334 = vlaneseq
        %v3335 = vshrl.u32 %v3334, 7
        %v3336 = vsub.s32 %v3333, %v3335
        %v3337 = vrot.slane %v3323, %v3336
        %v3338 = vcombine.high %v3314, 0.0
        %v3339 = vcombine.high %v3321, 0.0
        %v3340 = vcombine.high %v3330, 0.0
        %v3341 = vcombine.high %v3337, 0.0
        %3343 = vset.pattern.permute.xlu0 0
        %3344 = vperm.xlu0 %3343, %v3314
        %v3345 = vpop.permute.xlu0 %3344
        %3348 = vset.pattern.permute.xlu0 0
        %3349 = vperm.xlu0 %3348, %v3338
        %v3350 = vpop.permute.xlu0 %3349
        %3353 = vset.pattern.permute.xlu0 0
        %3354 = vperm.xlu0 %3353, %v3321
        %v3355 = vpop.permute.xlu0 %3354
        %3358 = vset.pattern.permute.xlu0 0
        %3359 = vperm.xlu0 %3358, %v3339
        %v3360 = vpop.permute.xlu0 %3359
        %3363 = vset.pattern.permute.xlu0 0
        %3364 = vperm.xlu0 %3363, %v3330
        %v3365 = vpop.permute.xlu0 %3364
        %3368 = vset.pattern.permute.xlu0 0
        %3369 = vperm.xlu0 %3368, %v3340
        %v3370 = vpop.permute.xlu0 %3369
        %3373 = vset.pattern.permute.xlu0 0
        %3374 = vperm.xlu0 %3373, %v3337
        %v3375 = vpop.permute.xlu0 %3374
        %3378 = vset.pattern.permute.xlu0 0
        %3379 = vperm.xlu0 %3378, %v3341
        %v3380 = vpop.permute.xlu0 %3379
        %v3382 = vmul.f32 %v3242, %v3345
        %v3383 = vmul.f32 %v3266, %v3350
        %v3384 = vmul.f32 %v3249, %v3355
        %v3385 = vmul.f32 %v3267, %v3360
        %v3386 = vmul.f32 %v3258, %v3365
        %v3387 = vmul.f32 %v3268, %v3370
        %v3388 = vmul.f32 %v3265, %v3375
        %v3389 = vmul.f32 %v3269, %v3380
        %v3390 = vcombine.low %v3382, %v3384
        %v3392 = vunpack.c.l.s4 1983009808
        %v3393 = vunpack.c.0.s8 %v3392
        %v3394 = vlaneseq
        %v3395 = vshrl.u32 %v3394, 7
        %v3396 = vsub.s32 %v3393, %v3395
        %v3397 = vrot.slane %v3390, %v3396
        %v3398 = vcombine.low %v3383, %v3385
        %v3400 = vunpack.c.l.s4 1983009808
        %v3401 = vunpack.c.0.s8 %v3400
        %v3402 = vlaneseq
        %v3403 = vshrl.u32 %v3402, 7
        %v3404 = vsub.s32 %v3401, %v3403
        %v3405 = vrot.slane %v3398, %v3404
        %v3406 = vcombine.low %v3386, %v3388
        %v3408 = vunpack.c.l.s4 1983009808
        %v3409 = vunpack.c.0.s8 %v3408
        %v3410 = vlaneseq
        %v3411 = vshrl.u32 %v3410, 7
        %v3412 = vsub.s32 %v3409, %v3411
        %v3413 = vrot.slane %v3406, %v3412
        %v3414 = vcombine.low %v3387, %v3389
        %v3416 = vunpack.c.l.s4 1983009808
        %v3417 = vunpack.c.0.s8 %v3416
        %v3418 = vlaneseq
        %v3419 = vshrl.u32 %v3418, 7
        %v3420 = vsub.s32 %v3417, %v3419
        %v3421 = vrot.slane %v3414, %v3420
        %v3422 = vcombine.low %v3397, %v3405
        %v3423 = vcombine.high %v3397, %v3405
        %v3425 = vunpack.c.l.s4 1934713408
        %v3426 = vunpack.c.0.s8 %v3425
        %v3427 = vlaneseq
        %v3428 = vshrl.u32 %v3427, 7
        %v3429 = vsub.s32 %v3426, %v3428
        %v3430 = vrot.slane %v3422, %v3429
        %v3432 = vunpack.c.l.s4 1934713408
        %v3433 = vunpack.c.0.s8 %v3432
        %v3434 = vlaneseq
        %v3435 = vshrl.u32 %v3434, 7
        %v3436 = vsub.s32 %v3433, %v3435
        %v3437 = vrot.slane %v3423, %v3436
        %v3438 = vcombine.low %v3413, %v3421
        %v3439 = vcombine.high %v3413, %v3421
        %v3441 = vunpack.c.l.s4 1934713408
        %v3442 = vunpack.c.0.s8 %v3441
        %v3443 = vlaneseq
        %v3444 = vshrl.u32 %v3443, 7
        %v3445 = vsub.s32 %v3442, %v3444
        %v3446 = vrot.slane %v3438, %v3445
        %v3448 = vunpack.c.l.s4 1934713408
        %v3449 = vunpack.c.0.s8 %v3448
        %v3450 = vlaneseq
        %v3451 = vshrl.u32 %v3450, 7
        %v3452 = vsub.s32 %v3449, %v3451
        %v3453 = vrot.slane %v3439, %v3452
        %v3454 = vcombine.low %v3430, %v3446
        %v3455 = vcombine.high %v3430, %v3446
        %v3456 = vcombine.low %v3437, %v3453
        %v3457 = vcombine.high %v3437, %v3453
        %3459 = vrot.lane.b32.xlu0 %v3455, 8
        %v3460 = vpop.permute.xlu0 %3459
        %3463 = vrot.lane.b32.xlu0 %v3456, 16
        %v3464 = vpop.permute.xlu0 %3463
        %3467 = vrot.lane.b32.xlu0 %v3457, 24
        %v3468 = vpop.permute.xlu0 %3467
        %v3470 = vsel %vm705, %v3454, %v3460
        %v3471 = vsel %vm994, %v3470, %v3464
        %v3472 = vsel %vm1885, %v3471, %v3468
        %v3473 = vld [vmem:[#allocation10 + $0xa0] sm:$0xff]
        %v3474 = vld [vmem:[#allocation10 + $0xa8] sm:$0xff]
        %v3475 = vld [vmem:[#allocation10 + $0xb0] sm:$0xff]
        %v3476 = vld [vmem:[#allocation10 + $0xb8] sm:$0xff]
        %v3477 = vld [vmem:[#allocation10 + $0x148] sm:$0x1]
        %v3478 = vlaneseq
        %v3479 = vshrl.u32 %v3478, 7
        %v3480 = vsub.s32 0, %v3479
        %v3481 = vrot.slane %v3477, %v3480
        %v3483 = vsel %vm386, %v3472, 0
        %3485 = vmatprep.subr.mxu0 0.0
        %3486 = vmatpush1.msra.mxu0 %v3473
        %3487 = vmatprep.subr.mxu0 0.0
        %3488 = vmatpush1.msra.mxu0 %v3474
        %3489 = vmatprep.subr.mxu0 0.0
        %3490 = vmatpush1.msra.mxu0 %v3475
        %3491 = vmatprep.subr.mxu0 0.0
        %3492 = vmatpush1.msra.mxu0 %v3476
        %3493 = vmatprep.subr.mxu0 0.0
        %3494 = vmatpush1.msra.mxu0 0.0
        %3495 = vmatprep.subr.mxu0 0.0
        %3496 = vmatpush1.msra.mxu0 0.0
        %3497 = vmatprep.subr.mxu0 0.0
        %3498 = vmatpush1.msra.mxu0 0.0
        %3499 = vmatprep.subr.mxu0 0.0
        %3500 = vmatpush1.msra.mxu0 0.0
        %3501 = vmatprep.subr.mxu0 0.0
        %3502 = vmatpush1.msra.mxu0 0.0
        %3503 = vmatprep.subr.mxu0 0.0
        %3504 = vmatpush1.msra.mxu0 0.0
        %3505 = vmatprep.subr.mxu0 0.0
        %3506 = vmatpush1.msra.mxu0 0.0
        %3507 = vmatprep.subr.mxu0 0.0
        %3508 = vmatpush1.msra.mxu0 0.0
        %3509 = vmatprep.subr.mxu0 0.0
        %3510 = vmatpush1.msra.mxu0 0.0
        %3511 = vmatprep.subr.mxu0 0.0
        %3512 = vmatpush1.msra.mxu0 0.0
        %3513 = vmatprep.subr.mxu0 0.0
        %3514 = vmatpush1.msra.mxu0 0.0
        %3515 = vmatprep.subr.mxu0 0.0
        %3516 = vmatpush1.msra.mxu0 0.0
        %3517 = vmatprep.subr.mxu0 0.0
        %3518 = vmatpush1.msra.mxu0 0.0
        %3519 = vmatprep.subr.mxu0 0.0
        %3520 = vmatpush1.msra.mxu0 0.0
        %3521 = vmatprep.subr.mxu0 0.0
        %3522 = vmatpush1.msra.mxu0 0.0
        %3523 = vmatprep.subr.mxu0 0.0
        %3524 = vmatpush1.msra.mxu0 0.0
        %3525 = vmatprep.subr.mxu0 0.0
        %3526 = vmatpush1.msra.mxu0 0.0
        %3527 = vmatprep.subr.mxu0 0.0
        %3528 = vmatpush1.msra.mxu0 0.0
        %3529 = vmatprep.subr.mxu0 0.0
        %3530 = vmatpush1.msra.mxu0 0.0
        %3531 = vmatprep.subr.mxu0 0.0
        %3532 = vmatpush1.msra.mxu0 0.0
        %3533 = vmatprep.subr.mxu0 0.0
        %3534 = vmatpush1.msra.mxu0 0.0
        %3535 = vmatprep.subr.mxu0 0.0
        %3536 = vmatpush1.msra.mxu0 0.0
        %3537 = vmatprep.subr.mxu0 0.0
        %3538 = vmatpush1.msra.mxu0 0.0
        %3539 = vmatprep.subr.mxu0 0.0
        %3540 = vmatpush1.msra.mxu0 0.0
        %3541 = vmatprep.subr.mxu0 0.0
        %3542 = vmatpush1.msra.mxu0 0.0
        %3543 = vmatprep.subr.mxu0 0.0
        %3544 = vmatpush1.msra.mxu0 0.0
        %3545 = vmatprep.subr.mxu0 0.0
        %3546 = vmatpush1.msra.mxu0 0.0
        %3547 = vmatprep.subr.mxu0 0.0
        %3548 = vmatpush1.msra.mxu0 0.0
        %3549 = vmatprep.mubr.f32.mxu0 0.0
        %3550 = vmatmul.mubr.f32.gmra.mrb[0].mxu0 %v3483
        %v3551 = vpop.f32.mrb[0].mxu0
        %v3552 = vadd.f32 %v3481, %v3551
        %v3553 = vpop.f32.mrb[0].mxu0
        %3554 = vdwg.mxu0
        %v3555 = vadd.f32 %v1995, %v3552
        %v3556 = vld [vmem:[#allocation10 + $0x170] sm:$0x1]
        %v3557 = vld [vmem:[#allocation10 + $0x178] sm:$0x1]
        %v3558 = vsel %vm386, %v3555, 0.0
        %3559 = vadd.xlane.f32.xlu0 %v3558
        %v3560 = vpop.xlane.xlu0 %3559
        %v3561 = vmul.f32 %v3560, %v1975
        %v3562 = vsub.f32 %v3555, %v3561
        %v3563 = vmul.f32 %v3562, %v3562
        %v3564 = vsel %vm386, %v3563, 0.0
        %3565 = vadd.xlane.f32.xlu0 %v3564
        %v3566 = vpop.xlane.xlu0 %3565
        %v3567 = vmul.f32 %v3566, %v1975
        %v3568 = vadd.f32 %v3567, 1e-05
        %v3569 = vrsqrt.pop %v3568
        %v3570 = vmul.f32 %v3562, %v3569
        %v3571 = vlaneseq
        %v3572 = vshrl.u32 %v3571, 7
        %v3573 = vsub.s32 0, %v3572
        %v3574 = vrot.slane %v3556, %v3573
        %v3575 = vmul.f32 %v3570, %v3574
        %v3576 = vlaneseq
        %v3577 = vshrl.u32 %v3576, 7
        %v3578 = vsub.s32 0, %v3577
        %v3579 = vrot.slane %v3557, %v3578
        %v3580 = vadd.f32 %v3575, %v3579
        %v3581 = vld [vmem:[#allocation10 + $0xc0] sm:$0xff]
        %v3582 = vld [vmem:[#allocation10 + $0xc8] sm:$0xff]
        %v3583 = vld [vmem:[#allocation10 + $0xd0] sm:$0xff]
        %v3584 = vld [vmem:[#allocation10 + $0xd8] sm:$0xff]
        %v3585 = vld [vmem:[#allocation10 + $0x150] sm:$0x1]
        %v3586 = vlaneseq
        %v3587 = vshrl.u32 %v3586, 7
        %v3588 = vsub.s32 0, %v3587
        %v3589 = vrot.slane %v3585, %v3588
        %v3591 = vsel %vm386, %v3580, 0
        %3593 = vmatprep.subr.mxu0 0.0
        %3594 = vmatpush1.msra.mxu0 %v3581
        %3595 = vmatprep.subr.mxu0 0.0
        %3596 = vmatpush1.msra.mxu0 %v3582
        %3597 = vmatprep.subr.mxu0 0.0
        %3598 = vmatpush1.msra.mxu0 %v3583
        %3599 = vmatprep.subr.mxu0 0.0
        %3600 = vmatpush1.msra.mxu0 %v3584
        %3601 = vmatprep.subr.mxu0 0.0
        %3602 = vmatpush1.msra.mxu0 0.0
        %3603 = vmatprep.subr.mxu0 0.0
        %3604 = vmatpush1.msra.mxu0 0.0
        %3605 = vmatprep.subr.mxu0 0.0
        %3606 = vmatpush1.msra.mxu0 0.0
        %3607 = vmatprep.subr.mxu0 0.0
        %3608 = vmatpush1.msra.mxu0 0.0
        %3609 = vmatprep.subr.mxu0 0.0
        %3610 = vmatpush1.msra.mxu0 0.0
        %3611 = vmatprep.subr.mxu0 0.0
        %3612 = vmatpush1.msra.mxu0 0.0
        %3613 = vmatprep.subr.mxu0 0.0
        %3614 = vmatpush1.msra.mxu0 0.0
        %3615 = vmatprep.subr.mxu0 0.0
        %3616 = vmatpush1.msra.mxu0 0.0
        %3617 = vmatprep.subr.mxu0 0.0
        %3618 = vmatpush1.msra.mxu0 0.0
        %3619 = vmatprep.subr.mxu0 0.0
        %3620 = vmatpush1.msra.mxu0 0.0
        %3621 = vmatprep.subr.mxu0 0.0
        %3622 = vmatpush1.msra.mxu0 0.0
        %3623 = vmatprep.subr.mxu0 0.0
        %3624 = vmatpush1.msra.mxu0 0.0
        %3625 = vmatprep.subr.mxu0 0.0
        %3626 = vmatpush1.msra.mxu0 0.0
        %3627 = vmatprep.subr.mxu0 0.0
        %3628 = vmatpush1.msra.mxu0 0.0
        %3629 = vmatprep.subr.mxu0 0.0
        %3630 = vmatpush1.msra.mxu0 0.0
        %3631 = vmatprep.subr.mxu0 0.0
        %3632 = vmatpush1.msra.mxu0 0.0
        %3633 = vmatprep.subr.mxu0 0.0
        %3634 = vmatpush1.msra.mxu0 0.0
        %3635 = vmatprep.subr.mxu0 0.0
        %3636 = vmatpush1.msra.mxu0 0.0
        %3637 = vmatprep.subr.mxu0 0.0
        %3638 = vmatpush1.msra.mxu0 0.0
        %3639 = vmatprep.subr.mxu0 0.0
        %3640 = vmatpush1.msra.mxu0 0.0
        %3641 = vmatprep.subr.mxu0 0.0
        %3642 = vmatpush1.msra.mxu0 0.0
        %3643 = vmatprep.subr.mxu0 0.0
        %3644 = vmatpush1.msra.mxu0 0.0
        %3645 = vmatprep.subr.mxu0 0.0
        %3646 = vmatpush1.msra.mxu0 0.0
        %3647 = vmatprep.subr.mxu0 0.0
        %3648 = vmatpush1.msra.mxu0 0.0
        %3649 = vmatprep.subr.mxu0 0.0
        %3650 = vmatpush1.msra.mxu0 0.0
        %3651 = vmatprep.subr.mxu0 0.0
        %3652 = vmatpush1.msra.mxu0 0.0
        %3653 = vmatprep.subr.mxu0 0.0
        %3654 = vmatpush1.msra.mxu0 0.0
        %3655 = vmatprep.subr.mxu0 0.0
        %3656 = vmatpush1.msra.mxu0 0.0
        %3657 = vmatprep.mubr.f32.mxu0 0.0
        %3658 = vmatmul.mubr.f32.gmra.mrb[0].mxu0 %v3591
        %v3659 = vpop.f32.mrb[0].mxu0
        %v3660 = vadd.f32 %v3589, %v3659
        %v3661 = vpop.f32.mrb[0].mxu0
        %3662 = vdwg.mxu0
        %v3663 = vmax.f32 %v3660, 0.0
        %v3664 = vld [vmem:[#allocation10 + $0xe0] sm:$0xff]
        %v3665 = vld [vmem:[#allocation10 + $0xe8] sm:$0xff]
        %v3666 = vld [vmem:[#allocation10 + $0xf0] sm:$0xff]
        %v3667 = vld [vmem:[#allocation10 + $0xf8] sm:$0xff]
        %v3668 = vld [vmem:[#allocation10 + $0x100] sm:$0xff]
        %v3669 = vld [vmem:[#allocation10 + $0x108] sm:$0xff]
        %v3670 = vld [vmem:[#allocation10 + $0x110] sm:$0xff]
        %v3671 = vld [vmem:[#allocation10 + $0x118] sm:$0xff]
        %v3672 = vld [vmem:[#allocation10 + $0x158] sm:$0x1]
        %v3673 = vlaneseq
        %v3674 = vshrl.u32 %v3673, 7
        %v3675 = vsub.s32 0, %v3674
        %v3676 = vrot.slane %v3672, %v3675
        %vm3677 = vcmask 523264
        %v3679 = vsel %vm3677, %v3663, 0
        %3681 = vmatprep.subr.mxu0 0.0
        %3682 = vmatpush1.msra.mxu0 %v3664
        %3683 = vmatprep.subr.mxu0 0.0
        %3684 = vmatpush1.msra.mxu0 %v3665
        %3685 = vmatprep.subr.mxu0 0.0
        %3686 = vmatpush1.msra.mxu0 %v3666
        %3687 = vmatprep.subr.mxu0 0.0
        %3688 = vmatpush1.msra.mxu0 %v3667
        %3689 = vmatprep.subr.mxu0 0.0
        %3690 = vmatpush1.msra.mxu0 %v3668
        %3691 = vmatprep.subr.mxu0 0.0
        %3692 = vmatpush1.msra.mxu0 %v3669
        %3693 = vmatprep.subr.mxu0 0.0
        %3694 = vmatpush1.msra.mxu0 %v3670
        %3695 = vmatprep.subr.mxu0 0.0
        %3696 = vmatpush1.msra.mxu0 %v3671
        %3697 = vmatprep.subr.mxu0 0.0
        %3698 = vmatpush1.msra.mxu0 0.0
        %3699 = vmatprep.subr.mxu0 0.0
        %3700 = vmatpush1.msra.mxu0 0.0
        %3701 = vmatprep.subr.mxu0 0.0
        %3702 = vmatpush1.msra.mxu0 0.0
        %3703 = vmatprep.subr.mxu0 0.0
        %3704 = vmatpush1.msra.mxu0 0.0
        %3705 = vmatprep.subr.mxu0 0.0
        %3706 = vmatpush1.msra.mxu0 0.0
        %3707 = vmatprep.subr.mxu0 0.0
        %3708 = vmatpush1.msra.mxu0 0.0
        %3709 = vmatprep.subr.mxu0 0.0
        %3710 = vmatpush1.msra.mxu0 0.0
        %3711 = vmatprep.subr.mxu0 0.0
        %3712 = vmatpush1.msra.mxu0 0.0
        %3713 = vmatprep.subr.mxu0 0.0
        %3714 = vmatpush1.msra.mxu0 0.0
        %3715 = vmatprep.subr.mxu0 0.0
        %3716 = vmatpush1.msra.mxu0 0.0
        %3717 = vmatprep.subr.mxu0 0.0
        %3718 = vmatpush1.msra.mxu0 0.0
        %3719 = vmatprep.subr.mxu0 0.0
        %3720 = vmatpush1.msra.mxu0 0.0
        %3721 = vmatprep.subr.mxu0 0.0
        %3722 = vmatpush1.msra.mxu0 0.0
        %3723 = vmatprep.subr.mxu0 0.0
        %3724 = vmatpush1.msra.mxu0 0.0
        %3725 = vmatprep.subr.mxu0 0.0
        %3726 = vmatpush1.msra.mxu0 0.0
        %3727 = vmatprep.subr.mxu0 0.0
        %3728 = vmatpush1.msra.mxu0 0.0
        %3729 = vmatprep.subr.mxu0 0.0
        %3730 = vmatpush1.msra.mxu0 0.0
        %3731 = vmatprep.subr.mxu0 0.0
        %3732 = vmatpush1.msra.mxu0 0.0
        %3733 = vmatprep.subr.mxu0 0.0
        %3734 = vmatpush1.msra.mxu0 0.0
        %3735 = vmatprep.subr.mxu0 0.0
        %3736 = vmatpush1.msra.mxu0 0.0
        %3737 = vmatprep.subr.mxu0 0.0
        %3738 = vmatpush1.msra.mxu0 0.0
        %3739 = vmatprep.subr.mxu0 0.0
        %3740 = vmatpush1.msra.mxu0 0.0
        %3741 = vmatprep.subr.mxu0 0.0
        %3742 = vmatpush1.msra.mxu0 0.0
        %3743 = vmatprep.subr.mxu0 0.0
        %3744 = vmatpush1.msra.mxu0 0.0
        %3745 = vmatprep.mubr.f32.mxu0 0.0
        %3746 = vmatmul.mubr.f32.gmra.mrb[0].mxu0 %v3679
        %v3747 = vpop.f32.mrb[0].mxu0
        %v3748 = vadd.f32 %v3676, %v3747
        %v3749 = vpop.f32.mrb[0].mxu0
        %3750 = vdwg.mxu0
        %v3751 = vadd.f32 %v3580, %v3748
        %v3752 = vld [vmem:[#allocation10 + $0x180] sm:$0x1]
        %v3753 = vld [vmem:[#allocation10 + $0x188] sm:$0x1]
        %v3754 = vsel %vm386, %v3751, 0.0
        %3755 = vadd.xlane.f32.xlu0 %v3754
        %v3756 = vpop.xlane.xlu0 %3755
        %v3757 = vmul.f32 %v3756, %v1975
        %v3758 = vsub.f32 %v3751, %v3757
        %v3759 = vmul.f32 %v3758, %v3758
        %v3760 = vsel %vm386, %v3759, 0.0
        %3761 = vadd.xlane.f32.xlu0 %v3760
        %v3762 = vpop.xlane.xlu0 %3761
        %v3763 = vmul.f32 %v3762, %v1975
        %v3764 = vadd.f32 %v3763, 1e-05
        %v3765 = vrsqrt.pop %v3764
        %v3766 = vmul.f32 %v3758, %v3765
        %v3767 = vlaneseq
        %v3768 = vshrl.u32 %v3767, 7
        %v3769 = vsub.s32 0, %v3768
        %v3770 = vrot.slane %v3752, %v3769
        %v3771 = vmul.f32 %v3766, %v3770
        %v3772 = vlaneseq
        %v3773 = vshrl.u32 %v3772, 7
        %v3774 = vsub.s32 0, %v3773
        %v3775 = vrot.slane %v3753, %v3774
        %v3776 = vadd.f32 %v3771, %v3775
        %3777 = vst.msk [vmem:[%s367] sm:$0xff] %vm386, %v3776
        %s3778 = sand.u32 %s161, 1
        %s3779 = scalar_lea.sflag [#allocation4], %s3778
        %s3780 = sand.u32 %s161, 1
        %s3781 = smul.addr %s3780, 8
        %s3782 = scalar_lea.vmem [#allocation11], %s3781
        // Predicated region
        $region61: #{tpu_custom_call.1} parent=39 // pred_check
          %p3783 = pneg %p171
        $region62: #{tpu_custom_call.1} parent=39 // pred_check_branch
          %3785 = sbr.rel (%p3783) target = $region64
        $region63: #{tpu_custom_call.1} parent=39 // pred_region
          %s3787 = ssub.s32 128, 128
          %3788 = vsyncadd %s3779, %s3787
          %s3789 = smul.addr %s28, 128
          %s3790 = scalar_lea.hbm %s5, %s3789
          %s3792 = sshll.u32 %s3782, 4
          %s3793 = int_to_ptr.vmem [resolvable:$true] %s3792
          %3795 = dma.vmem_to_hbm [thread:$0]  %s3793, 128, %s3790, %s3779
        $region64: #{tpu_custom_call.1} parent=39 // pred_fallthru
          _
      $region40: #{tpu_custom_call.1} parent=5 // pred_fallthru
        _
      %p3796 = scmp.le.s32.totalorder 2, %s23
      // Predicated region
      $region65: #{tpu_custom_call.1} parent=5 // pred_check
        %p3797 = pneg %p3796
      $region66: #{tpu_custom_call.1} parent=5 // pred_check_branch
        %3799 = sbr.rel (%p3797) target = $region68
      $region67: #{tpu_custom_call.1} parent=5 // pred_region
        %s3800 = ssub.s32 %s23, 2
        // Predicated region
        $region69: #{tpu_custom_call.1} parent=67 // pred_check
          %p3801 = pneg %p177
        $region70: #{tpu_custom_call.1} parent=67 // pred_check_branch
          %3803 = sbr.rel (%p3801) target = $region72
        $region71: #{tpu_custom_call.1} parent=67 // pred_region
          %s3804 = sand.u32 %s162, 1
          %s3805 = scalar_lea.sflag [#allocation4], %s3804
          %s3806 = sand.u32 %s162, 1
          %s3807 = smul.addr %s3806, 8
          %s3808 = scalar_lea.vmem [#allocation11], %s3807
          %3809 = dma.done %s3805, 128
        $region72: #{tpu_custom_call.1} parent=67 // pred_fallthru
          _
      $region68: #{tpu_custom_call.1} parent=5 // pred_fallthru
        _
    $region6: #{tpu_custom_call.1} parent=1 // loop_footer
      %s27 = sadd.s32 1, %s23
    $region7: #{tpu_custom_call.1} parent=1 // loop_footer_branch
      %22 = sbr.rel target = $region3
    $region8: #{tpu_custom_call.1} parent=1 // loop_exit
      _
    %3810 = vsyncpa [#allocation3], 1
    %s3811 = scalar_lea.sflag [#allocation3], 1
    %3812 = vsyncpa %s3811, 1
    %3813 = vsyncpa [#allocation6], 1
    %s3814 = scalar_lea.sflag [#allocation6], 1
    %3815 = vsyncpa %s3814, 1
    %3816 = vsyncpa [#allocation9], 1
    %s3817 = scalar_lea.sflag [#allocation9], 1
    %3818 = vsyncpa %s3817, 1
    %3819 = vsyncpa [#allocation4], 1
    %s3820 = scalar_lea.sflag [#allocation4], 1
    %3821 = vsyncpa %s3820, 1

</llo_original>
